<compile_context>
chip_gen: v7x
topology: tpu7x:2x2x1
jax: 0.10.0
libtpu: 0.0.40
codegen_flags: <defaults>
</compile_context>

<pallas_src>
import functools

import jax
import jax.numpy as jnp
from jax.experimental import pallas as pl
from jax.experimental.pallas import tpu as pltpu


KSIZE, STRIDE, PAD = 32, 2, 15
# nn.PReLU() default init; weights here are freshly initialised, so a scalar
# compile-time alpha matches the PyTorch reference.  If trained weights were
# loaded, alpha must come from params (per layer / per channel).
PRELU_ALPHA = 0.25
LANE = 128

ENC_CHANNELS = [(1, 16), (16, 32), (32, 32), (32, 64), (64, 64), (64, 128),
                (128, 128), (128, 256), (256, 256), (256, 512), (512, 1024)]
DEC_CHANNELS = [(1024 * 2, 512), (512 * 2, 256), (256 * 2, 256), (256 * 2, 128),
                (128 * 2, 128), (128 * 2, 64), (64 * 2, 64), (64 * 2, 32),
                (32 * 2, 32), (32 * 2, 16), (16 * 2, 1)]


def _round_up(v, m):
    return (v + m - 1) // m * m


# ----------------------------------------------------------------------------
# VMEM budget / tile selection (generation-gated via pltpu.get_tpu_info).
# ----------------------------------------------------------------------------
@functools.lru_cache(maxsize=None)
def _vmem_capacity_bytes():
    try:
        cap = int(getattr(pltpu.get_tpu_info(), "vmem_capacity_bytes", 0))
        if cap > 0:
            return cap
    except Exception:
        pass
    return 64 * 1024 * 1024          # conservative fallback (v7x-sized VMEM)


def _vmem_step_bytes(tm, tc, tn, J, out_bytes):
    """Double-buffered per-step VMEM working-set estimate."""
    act = 2 * (tm + 16) * tc * 2          # a + e input blocks, bf16, 2 buffers
    wgt = 2 * J * tc * tn * 2             # weight block, bf16, 2 buffers
    bias = 2 * tn * 4
    out = 2 * tm * tn * out_bytes         # output block, 2 buffers
    acc = tm * tn * 4                     # f32 accumulator scratch
    slab = (tm + 16) * tc * 2             # staged input slab scratch
    return act + wgt + bias + out + acc + slab


def _pick_tiles(Cp, Np, tm, J, out_bytes):
    """Largest lane-dense (tc, tn) fitting the chip's VMEM budget."""
    cap = _vmem_capacity_bytes()
    budget = min(int(cap * 0.42), 48 * 1024 * 1024)
    tc = max(t for t in (512, 256, 128) if Cp % t == 0)
    tn = max(t for t in (1024, 512, 256, 128) if Np % t == 0)
    # Under VMEM pressure shrink the reduction (cin) tile first, then cout.
    while (_vmem_step_bytes(tm, tc, tn, J, out_bytes) > budget
           and tc > 128 and Cp % (tc // 2) == 0):
        tc //= 2
    while (_vmem_step_bytes(tm, tc, tn, J, out_bytes) > budget
           and tn > 128 and Np % (tn // 2) == 0):
        tn //= 2
    est = _vmem_step_bytes(tm, tc, tn, J, out_bytes)
    limit = int(min(max(2 * est, 32 * 1024 * 1024), int(cap * 0.71)))
    return tc, tn, limit


def _pick_tm(total_rows):
    """Row-tile size: single tile when small, else minimise padded junk rows."""
    if total_rows <= 256:
        return _round_up(total_rows, 16)
    best_tm, best_mp = 256, pl.cdiv(total_rows, 256) * 256
    for tm in range(240, 127, -16):
        mp = pl.cdiv(total_rows, tm) * tm
        if mp < best_mp:
            best_tm, best_mp = tm, mp
    return best_tm


# ----------------------------------------------------------------------------
# Fused Pallas kernel: stride-1 J-tap convolution + bias + PReLU (+ tanh).
#
#   out[l, n] = act( sum_{j<J} sum_c x[l + j, c] * w[j, c, n] + bias[n] )
#
# Grid = (row_tiles, cout_tiles, cin_tiles) (or cout-first for deep layers);
# the cin axis is the reduction axis (last, "arbitrary").  Each step stages a
# (tm + 16, tc) slab of the raw activation in VMEM (row tile + tap overlap)
# and runs J shifted (tm, tc) x (tc, tn) matmuls on the MXU, tap-paired per
# accumulator read-modify-write, accumulating into f32 scratch.
# ----------------------------------------------------------------------------
def _conv_tap_kernel(a_ref, e_ref, w_ref, b_ref, o_ref, acc_ref, slab_ref, *,
                     J, alpha, apply_tanh):
    ci = pl.program_id(2)                 # reduction axis is always last
    tm = acc_ref.shape[0]

    @pl.when(ci == 0)
    def _():
        acc_ref[...] = jnp.zeros_like(acc_ref)

    # Stage the input slab for this (row-tile, cin-tile): tm rows + 16 overlap.
    slab_ref[:tm, :] = a_ref[...]
    slab_ref[tm:, :] = e_ref[...]

    # Tap-paired shifted-window matmuls (bf16 x bf16 -> f32 on the MXU):
    # two dots per accumulator read-modify-write halves f32 acc VMEM traffic.
    for j in range(0, J - 1, 2):
        acc_ref[...] += (
            jnp.dot(slab_ref[j:j + tm, :], w_ref[j],
                    preferred_element_type=jnp.float32)
            + jnp.dot(slab_ref[j + 1:j + 1 + tm, :], w_ref[j + 1],
                      preferred_element_type=jnp.float32))
    if J % 2:
        acc_ref[...] += jnp.dot(slab_ref[J - 1:J - 1 + tm, :], w_ref[J - 1],
                                preferred_element_type=jnp.float32)

    @pl.when(ci == pl.num_programs(2) - 1)
    def _():
        y = acc_ref[...] + b_ref[...]
        y = jnp.where(y > 0, y, alpha * y)          # PReLU (scalar alpha)
        if apply_tanh:
            y = jnp.tanh(y)
        o_ref[...] = y.astype(o_ref.dtype)


def _conv_tap(x, w, bias, *, n_valid, alpha, apply_tanh, out_dtype):
    """x: (B, Lx, C) -> (B, Lout, n_valid), Lout = Lx - J + 1.

    The batch dimension is folded into the matmul row (M) dimension: batch b's
    rows live at folded row offset b*S (S >= Lx, multiple of 16), so every
    weight block is streamed from HBM exactly once per layer regardless of B,
    and the MXU sees B*Lout rows instead of Lout on the deep layers.
    """
    B, Lx, C = x.shape
    J, Cp, Np = w.shape
    Lout = Lx - J + 1

    S = _round_up(Lx, 16)               # per-batch row stride in the folded slab
    total = B * S                       # folded output rows (incl. junk tails)
    tm = _pick_tm(total)
    m_tiles = pl.cdiv(total, tm)
    Mp = m_tiles * tm
    Rp = Mp + 16                        # input rows incl. tap overlap

    out_bytes = jnp.dtype(out_dtype).itemsize
    tc, tn, vmem_limit = _pick_tiles(Cp, Np, tm, J, out_bytes)
    n_tiles = Np // tn
    c_tiles = Cp // tc
    eb = tm // 16                       # overlap block-index scale

    # Fold batch into rows (stride S) and pad once to the kernel's (Rp, Cp)
    # bf16 layout.  No im2col, no per-batch weight re-streaming.
    xf = jnp.pad(x.astype(jnp.bfloat16), ((0, 0), (0, S - Lx), (0, Cp - C)))
    xf = xf.reshape(B * S, Cp)
    xf = jnp.pad(xf, ((0, Rp - B * S), (0, 0)))

    # Put the larger independent axis first so megacore (v7x 2-TC) shards it;
    # the cin reduction axis stays last ("arbitrary").
    n_first = n_tiles > m_tiles
    if n_first:
        grid = (n_tiles, m_tiles, c_tiles)

        def a_map(ni, mi, ci): return (mi, ci)
        def e_map(ni, mi, ci): return ((mi + 1) * eb, ci)
        def w_map(ni, mi, ci): return (0, ci, ni)
        def b_map(ni, mi, ci): return (0, ni)
        def o_map(ni, mi, ci): return (mi, ni)
    else:
        grid = (m_tiles, n_tiles, c_tiles)

        def a_map(mi, ni, ci): return (mi, ci)
        def e_map(mi, ni, ci): return ((mi + 1) * eb, ci)
        def w_map(mi, ni, ci): return (0, ci, ni)
        def b_map(mi, ni, ci): return (0, ni)
        def o_map(mi, ni, ci): return (mi, ni)

    out = pl.pallas_call(
        functools.partial(_conv_tap_kernel, J=J, alpha=alpha,
                          apply_tanh=apply_tanh),
        out_shape=jax.ShapeDtypeStruct((Mp, Np), out_dtype),
        grid=grid,
        in_specs=[
            pl.BlockSpec((tm, tc), a_map),        # main row tile
            pl.BlockSpec((16, tc), e_map),        # 16-row tap-overlap tile
            pl.BlockSpec((J, tc, tn), w_map),     # all J taps of a weight block
            pl.BlockSpec((1, tn), b_map),         # bias
        ],
        out_specs=pl.BlockSpec((tm, tn), o_map),
        scratch_shapes=[
            pltpu.VMEM((tm, tn), jnp.float32),          # f32 accumulator
            pltpu.VMEM((tm + 16, tc), jnp.bfloat16),    # staged input slab
        ],
        compiler_params=pltpu.CompilerParams(
            dimension_semantics=("parallel", "parallel", "arbitrary"),
            vmem_limit_bytes=vmem_limit),
    )(xf, xf, w, bias)

    # Un-fold: batch b's valid rows are [b*S, b*S + Lout).
    return out[:B * S].reshape(B, S, Np)[:, :Lout, :n_valid]


# ----------------------------------------------------------------------------
# Layer wrappers (layout plumbing only; all hot work is in the Pallas kernel).
# ----------------------------------------------------------------------------
def conv1d_down(x, w_packed, b_packed, cout, *, alpha, out_dtype=jnp.bfloat16):
    """Conv1d(K=32, stride=2, pad=15) + PReLU.  (B, L, Cin) -> (B, L//2, cout)."""
    B, L, _ = x.shape
    xp = jnp.pad(x, ((0, 0), (PAD, PAD), (0, 0)))
    # Pair consecutive samples (free contiguous reshape): the stride-2 / K=32
    # conv becomes a stride-1, 16-tap conv over 2*Cin channels.
    xr = xp.reshape(B, (L + 2 * PAD) // 2, -1)
    return _conv_tap(xr, w_packed, b_packed, n_valid=cout,
                     alpha=alpha, apply_tanh=False, out_dtype=out_dtype)


def conv_transpose1d_up(x, w_packed, b_packed, cout, *, alpha,
                        apply_tanh=False, out_dtype=jnp.bfloat16):
    """ConvTranspose1d(K=32, stride=2, pad=15) + PReLU (+ tanh).

    Polyphase: a 17-tap stride-1 conv over the undilated input computes both
    output phases as 2*cout channels; a free reshape interleaves them.
    (B, Lin, Cin) -> (B, 2*Lin, cout).
    """
    B, Lin, _ = x.shape
    xp = jnp.pad(x, ((0, 0), (8, 8), (0, 0)))
    y2 = _conv_tap(xp, w_packed, b_packed, n_valid=2 * cout,
                   alpha=alpha, apply_tanh=apply_tanh, out_dtype=out_dtype)
    return y2.reshape(B, Lin, 2, cout).reshape(B, 2 * Lin, cout)


# ----------------------------------------------------------------------------
# Weight packing (done once at init): pad to lane multiples, cast to bf16.
# ----------------------------------------------------------------------------
def _pack_enc_weights(w, b):
    """Conv1d weight (Cout, Cin, 32) -> (16, Cp, Np) bf16, bias (1, Np) f32."""
    cout, cin, _ = w.shape
    Cp = _round_up(2 * cin, LANE)
    Np = _round_up(cout, LANE)
    wk = jnp.transpose(w, (2, 1, 0)).reshape(16, 2 * cin, cout)  # paired taps
    wk = jnp.pad(wk, ((0, 0), (0, Cp - 2 * cin), (0, Np - cout)))
    bp = jnp.pad(b[None, :].astype(jnp.float32), ((0, 0), (0, Np - cout)))
    return wk.astype(jnp.bfloat16), bp


def _pack_dec_weights(w, b):
    """ConvTranspose1d weight (Cin, Cout, 32) -> (17, Cp, Np) bf16 + bias.

    Column block [0:Cout]  -> even output positions (t = 2u), tap p uses k = 31 - 2p.
    Column block [Cout:2C] -> odd  output positions (t = 2u+1), tap p uses k = 32 - 2p.
    """
    cin, cout, _ = w.shape
    Cp = _round_up(cin, LANE)
    Np = _round_up(2 * cout, LANE)
    wk = jnp.transpose(w, (2, 0, 1))                  # (32, Cin, Cout)
    w17 = jnp.zeros((17, cin, 2 * cout), jnp.float32)
    w17 = w17.at[:16, :, :cout].set(wk[31::-2])       # k = 31, 29, ..., 1
    w17 = w17.at[1:, :, cout:].set(wk[30::-2])        # k = 30, 28, ..., 0
    w17 = jnp.pad(w17, ((0, 0), (0, Cp - cin), (0, Np - 2 * cout)))
    bp = jnp.pad(jnp.concatenate([b, b])[None, :].astype(jnp.float32),
                 ((0, 0), (0, Np - 2 * cout)))
    return w17.astype(jnp.bfloat16), bp


# ----------------------------------------------------------------------------
# Generator parameters and forward pass
# ----------------------------------------------------------------------------
def init_params(key):
    """Returns (packed, raw): packed feeds the Pallas kernels, raw the f32 ref."""
    packed = {"enc": [], "dec": []}
    raw = {"enc": [], "dec": []}
    for cin, cout in ENC_CHANNELS:
        key, k1, k2 = jax.random.split(key, 3)
        scale = 1.0 / (cin * KSIZE) ** 0.5
        w = jax.random.normal(k1, (cout, cin, KSIZE), jnp.float32) * scale
        b = jax.random.normal(k2, (cout,), jnp.float32) * 0.01
        raw["enc"].append((w, b))
        packed["enc"].append(_pack_enc_weights(w, b))
    for cin, cout in DEC_CHANNELS:
        key, k1, k2 = jax.random.split(key, 3)
        scale = 1.0 / (cin * KSIZE) ** 0.5
        w = jax.random.normal(k1, (cin, cout, KSIZE), jnp.float32) * scale
        b = jax.random.normal(k2, (cout,), jnp.float32) * 0.01
        raw["dec"].append((w, b))
        packed["dec"].append(_pack_dec_weights(w, b))
    return packed, raw


def generator_forward(params, x, z):
    """x: (B, L, 1) channels-last; z: (B, L / 2**11, 1024) latent noise."""
    enc_outs = []
    h = x
    for (wp, bp), (_, cout) in zip(params["enc"], ENC_CHANNELS):
        h = conv1d_down(h, wp, bp, cout, alpha=PRELU_ALPHA)
        enc_outs.append(h)

    # torch.cat(dim=1) on NCL == concat on the channel (last) axis here.
    h = jnp.concatenate([enc_outs[-1], z.astype(h.dtype)], axis=-1)

    n_dec = len(params["dec"])
    for i, ((wp, bp), (_, cout)) in enumerate(zip(params["dec"], DEC_CHANNELS)):
        is_last = i == n_dec - 1
        h = conv_transpose1d_up(h, wp, bp, cout, alpha=PRELU_ALPHA,
                                apply_tanh=is_last,
                                out_dtype=jnp.float32 if is_last
                                else jnp.bfloat16)
        if not is_last:
            h = jnp.concatenate([h, enc_outs[n_dec - 2 - i]], axis=-1)
    return h  # (B, L, 1): PReLU + Tanh applied, as in the PyTorch reference


# ----------------------------------------------------------------------------
# Plain-JAX f32 references + self-tests
# ----------------------------------------------------------------------------
def _prelu(y, alpha):
    return jnp.where(y > 0, y, alpha * y)


def _ref_conv1d(x, w, b):
    B, L, _ = x.shape
    _, _, K = w.shape
    Lout = (L + 2 * PAD - K) // STRIDE + 1
    xp = jnp.pad(x, ((0, 0), (PAD, PAD), (0, 0)))
    idx = STRIDE * jnp.arange(Lout)[:, None] + jnp.arange(K)[None, :]
    patches = xp[:, idx, :]                           # (B, Lout, K, Cin)
    return jnp.einsum("blkc,ock->blo", patches, w) + b


def _ref_convt1d(x, w, b):
    B, L, Cin = x.shape
    _, _, K = w.shape
    Lout = (L - 1) * STRIDE - 2 * PAD + K
    Lup = STRIDE * (L - 1) + 1
    xup = jnp.zeros((B, Lup, Cin), x.dtype).at[:, ::STRIDE, :].set(x)
    pad = K - 1 - PAD
    xp = jnp.pad(xup, ((0, 0), (pad, pad), (0, 0)))
    idx = jnp.arange(Lout)[:, None] + jnp.arange(K)[None, :]
    patches = xp[:, idx, :]                           # (B, Lout, K, Cin)
    return jnp.einsum("blkc,cok->blo", patches, w[:, :, ::-1]) + b


def _ref_generator_forward(raw, x, z):
    """Plain-JAX f32 reference of the full Generator forward."""
    enc_outs = []
    h = x
    for (w, b) in raw["enc"]:
        h = _prelu(_ref_conv1d(h, w, b), PRELU_ALPHA)
        enc_outs.append(h)
    h = jnp.concatenate([enc_outs[-1], z], axis=-1)
    n_dec = len(raw["dec"])
    for i, (w, b) in enumerate(raw["dec"]):
        h = _prelu(_ref_convt1d(h, w, b), PRELU_ALPHA)
        if i == n_dec - 1:
            h = jnp.tanh(h)
        else:
            h = jnp.concatenate([h, enc_outs[n_dec - 2 - i]], axis=-1)
    return h


def _rel_err(a, b):
    a = a.astype(jnp.float32)
    b = b.astype(jnp.float32)
    return float(jnp.linalg.norm(a - b) / (jnp.linalg.norm(b) + 1e-6))


def _self_test(key):
    k1, k2, k3, k4, k5, k6 = jax.random.split(key, 6)
    tol = 5e-2

    # Downsampling conv: B=2 exercises the batch-folded row layout.
    x = jax.random.normal(k1, (2, 64, 4), jnp.float32)
    w = jax.random.normal(k2, (8, 4, KSIZE), jnp.float32) * 0.1
    b = jax.random.normal(k3, (8,), jnp.float32) * 0.1
    wp, bp = _pack_enc_weights(w, b)
    got = conv1d_down(x, wp, bp, 8, alpha=PRELU_ALPHA, out_dtype=jnp.float32)
    ref = _prelu(_ref_conv1d(x, w, b), PRELU_ALPHA)
    err = _rel_err(got, ref)
    assert err < tol, f"conv1d self-test failed: rel_err={err}"

    # Transposed conv: B=2, odd per-batch length exercises folding padding.
    x = jax.random.normal(k4, (2, 9, 8), jnp.float32)
    w = jax.random.normal(k5, (8, 4, KSIZE), jnp.float32) * 0.1
    b = jax.random.normal(k6, (4,), jnp.float32) * 0.1
    wp, bp = _pack_dec_weights(w, b)
    got = conv_transpose1d_up(x, wp, bp, 4, alpha=PRELU_ALPHA,
                              apply_tanh=False, out_dtype=jnp.float32)
    ref = _prelu(_ref_convt1d(x, w, b), PRELU_ALPHA)
    err = _rel_err(got, ref)
    assert err < tol, f"conv_transpose1d self-test failed: rel_err={err}"


if __name__ == "__main__":
    key = jax.random.PRNGKey(0)
    key_p, key_x, key_z, key_t = jax.random.split(key, 4)

    # Small-shape numerical self-test of both kernel paths (incl. batch fold).
    _self_test(key_t)

    # Smallest valid length: 11 stride-2 encoders need L divisible by 2**11.
    B, L = 2, 2048
    packed, raw = init_params(key_p)
    x = jax.random.normal(key_x, (B, L, 1), jnp.float32)
    # z = randn_like(enout_11); enout_11 has shape (B, L / 2**11, 1024).
    z = jax.random.normal(key_z, (B, L // (2 ** 11), 1024), jnp.float32)

    fwd = jax.jit(generator_forward)
    out = jax.block_until_ready(fwd(packed, x, z))

    assert out.shape == (B, L, 1), out.shape
    assert bool(jnp.all(jnp.isfinite(out)))
    assert bool(jnp.all(jnp.abs(out) <= 1.0 + 1e-6))  # tanh output range

    # End-to-end f32 reference at full depth: structural tripwire (wiring,
    # taps, folding); loose tolerance absorbs cascaded bf16 rounding.
    ref_out = _ref_generator_forward(raw, x, z)
    e2e = _rel_err(out, ref_out)
    assert e2e < 0.35, f"end-to-end reference mismatch: rel_err={e2e}"

    print("KERNEL_OK")
</pallas_src>

<mosaic_0001>
module attributes {stable_mosaic.version = 11 : i64} {
  func.func @_conv_tap_kernel(%arg0: i32, %arg1: i32, %arg2: i32, %arg3: memref<96x128xbf16, #tpu.memory_space<vmem>>, %arg4: memref<16x128xbf16, #tpu.memory_space<vmem>>, %arg5: memref<16x128x128xbf16, #tpu.memory_space<vmem>>, %arg6: memref<1x128xf32, #tpu.memory_space<vmem>>, %arg7: memref<96x128xf32, #tpu.memory_space<vmem>>, %arg8: memref<96x128xf32, #tpu.memory_space<vmem>>, %arg9: memref<112x128xbf16, #tpu.memory_space<vmem>>) attributes {dimension_semantics = [#tpu.dimension_semantics<parallel>, #tpu.dimension_semantics<parallel>, #tpu.dimension_semantics<arbitrary>], iteration_bounds = array<i64: 1, 1, 1>, scalar_prefetch = 0 : i64, scratch_operands = 2 : i64, tpu.core_type = #tpu.core_type<tc>, window_params = [{transform_indices = @transform_0, window_bounds = array<i64: 96, 128>}, {transform_indices = @transform_1, window_bounds = array<i64: 16, 128>}, {transform_indices = @transform_2, window_bounds = array<i64: 16, 128, 128>}, {transform_indices = @transform_3, window_bounds = array<i64: 1, 128>}, {transform_indices = @transform_4, window_bounds = array<i64: 96, 128>}]} {
    %c0_i32 = arith.constant 0 : i32
    %0 = arith.cmpi eq, %arg2, %c0_i32 : i32
    %1 = arith.extui %0 : i1 to i32
    %c0_i32_0 = arith.constant 0 : i32
    %2 = arith.cmpi ne, %1, %c0_i32_0 : i32
    scf.if %2 {
      %cst_121 = arith.constant 0.000000e+00 : f32
      %106 = vector.broadcast %cst_121 : f32 to vector<96x128xf32>
      %c0_122 = arith.constant 0 : index
      %c0_123 = arith.constant 0 : index
      %107 = vector.load %arg8[%c0_122, %c0_123] : memref<96x128xf32, #tpu.memory_space<vmem>>, vector<96x128xf32>
      tpu.vector_store %arg8[%c0_122, %c0_123], %106 {strides = array<i32>} : memref<96x128xf32, #tpu.memory_space<vmem>>, vector<96x128xf32>,
    } else {
    }
    %c0 = arith.constant 0 : index
    %c0_1 = arith.constant 0 : index
    %3 = vector.load %arg3[%c0, %c0_1] : memref<96x128xbf16, #tpu.memory_space<vmem>>, vector<96x128xbf16>
    %c0_2 = arith.constant 0 : index
    %c0_3 = arith.constant 0 : index
    %4 = vector.load %arg9[%c0_2, %c0_3] : memref<112x128xbf16, #tpu.memory_space<vmem>>, vector<96x128xbf16>
    tpu.vector_store %arg9[%c0_2, %c0_3], %3 {strides = array<i32>} : memref<112x128xbf16, #tpu.memory_space<vmem>>, vector<96x128xbf16>,
    %c0_4 = arith.constant 0 : index
    %c0_5 = arith.constant 0 : index
    %5 = vector.load %arg4[%c0_4, %c0_5] : memref<16x128xbf16, #tpu.memory_space<vmem>>, vector<16x128xbf16>
    %c96 = arith.constant 96 : index
    %c0_6 = arith.constant 0 : index
    %6 = vector.load %arg9[%c96, %c0_6] : memref<112x128xbf16, #tpu.memory_space<vmem>>, vector<16x128xbf16>
    tpu.vector_store %arg9[%c96, %c0_6], %5 {strides = array<i32>} : memref<112x128xbf16, #tpu.memory_space<vmem>>, vector<16x128xbf16>,
    %c0_7 = arith.constant 0 : index
    %c0_8 = arith.constant 0 : index
    %7 = vector.load %arg8[%c0_7, %c0_8] : memref<96x128xf32, #tpu.memory_space<vmem>>, vector<96x128xf32>
    %c0_9 = arith.constant 0 : index
    %c0_10 = arith.constant 0 : index
    %8 = vector.load %arg9[%c0_9, %c0_10] : memref<112x128xbf16, #tpu.memory_space<vmem>>, vector<96x128xbf16>
    %c0_11 = arith.constant 0 : index
    %c0_12 = arith.constant 0 : index
    %c0_13 = arith.constant 0 : index
    %9 = vector.load %arg5[%c0_11, %c0_12, %c0_13] : memref<16x128x128xbf16, #tpu.memory_space<vmem>>, vector<1x128x128xbf16>
    %10 = vector.shape_cast %9 : vector<1x128x128xbf16> to vector<128x128xbf16>
    %cst = arith.constant dense<0.000000e+00> : vector<96x128xf32>
    %11 = tpu.matmul %8, %10, %cst {dimension_numbers = #tpu.dot_dimension_numbers<[1], [0], [0], [1], [0, 0, 1, 1], [], []>} : vector<96x128xbf16>, vector<128x128xbf16>, vector<96x128xf32> -> vector<96x128xf32>
    %c1 = arith.constant 1 : index
    %c0_14 = arith.constant 0 : index
    %12 = vector.load %arg9[%c1, %c0_14] : memref<112x128xbf16, #tpu.memory_space<vmem>>, vector<96x128xbf16>
    %c1_15 = arith.constant 1 : index
    %c0_16 = arith.constant 0 : index
    %c0_17 = arith.constant 0 : index
    %13 = vector.load %arg5[%c1_15, %c0_16, %c0_17] : memref<16x128x128xbf16, #tpu.memory_space<vmem>>, vector<1x128x128xbf16>
    %14 = vector.shape_cast %13 : vector<1x128x128xbf16> to vector<128x128xbf16>
    %cst_18 = arith.constant dense<0.000000e+00> : vector<96x128xf32>
    %15 = tpu.matmul %12, %14, %cst_18 {dimension_numbers = #tpu.dot_dimension_numbers<[1], [0], [0], [1], [0, 0, 1, 1], [], []>} : vector<96x128xbf16>, vector<128x128xbf16>, vector<96x128xf32> -> vector<96x128xf32>
    %16 = arith.addf %11, %15 : vector<96x128xf32>
    %17 = arith.addf %7, %16 : vector<96x128xf32>
    %c0_19 = arith.constant 0 : index
    %c0_20 = arith.constant 0 : index
    %18 = vector.load %arg8[%c0_19, %c0_20] : memref<96x128xf32, #tpu.memory_space<vmem>>, vector<96x128xf32>
    tpu.vector_store %arg8[%c0_19, %c0_20], %17 {strides = array<i32>} : memref<96x128xf32, #tpu.memory_space<vmem>>, vector<96x128xf32>,
    %c0_21 = arith.constant 0 : index
    %c0_22 = arith.constant 0 : index
    %19 = vector.load %arg8[%c0_21, %c0_22] : memref<96x128xf32, #tpu.memory_space<vmem>>, vector<96x128xf32>
    %c2 = arith.constant 2 : index
    %c0_23 = arith.constant 0 : index
    %20 = vector.load %arg9[%c2, %c0_23] : memref<112x128xbf16, #tpu.memory_space<vmem>>, vector<96x128xbf16>
    %c2_24 = arith.constant 2 : index
    %c0_25 = arith.constant 0 : index
    %c0_26 = arith.constant 0 : index
    %21 = vector.load %arg5[%c2_24, %c0_25, %c0_26] : memref<16x128x128xbf16, #tpu.memory_space<vmem>>, vector<1x128x128xbf16>
    %22 = vector.shape_cast %21 : vector<1x128x128xbf16> to vector<128x128xbf16>
    %cst_27 = arith.constant dense<0.000000e+00> : vector<96x128xf32>
    %23 = tpu.matmul %20, %22, %cst_27 {dimension_numbers = #tpu.dot_dimension_numbers<[1], [0], [0], [1], [0, 0, 1, 1], [], []>} : vector<96x128xbf16>, vector<128x128xbf16>, vector<96x128xf32> -> vector<96x128xf32>
    %c3 = arith.constant 3 : index
    %c0_28 = arith.constant 0 : index
    %24 = vector.load %arg9[%c3, %c0_28] : memref<112x128xbf16, #tpu.memory_space<vmem>>, vector<96x128xbf16>
    %c3_29 = arith.constant 3 : index
    %c0_30 = arith.constant 0 : index
    %c0_31 = arith.constant 0 : index
    %25 = vector.load %arg5[%c3_29, %c0_30, %c0_31] : memref<16x128x128xbf16, #tpu.memory_space<vmem>>, vector<1x128x128xbf16>
    %26 = vector.shape_cast %25 : vector<1x128x128xbf16> to vector<128x128xbf16>
    %cst_32 = arith.constant dense<0.000000e+00> : vector<96x128xf32>
    %27 = tpu.matmul %24, %26, %cst_32 {dimension_numbers = #tpu.dot_dimension_numbers<[1], [0], [0], [1], [0, 0, 1, 1], [], []>} : vector<96x128xbf16>, vector<128x128xbf16>, vector<96x128xf32> -> vector<96x128xf32>
    %28 = arith.addf %23, %27 : vector<96x128xf32>
    %29 = arith.addf %19, %28 : vector<96x128xf32>
    %c0_33 = arith.constant 0 : index
    %c0_34 = arith.constant 0 : index
    %30 = vector.load %arg8[%c0_33, %c0_34] : memref<96x128xf32, #tpu.memory_space<vmem>>, vector<96x128xf32>
    tpu.vector_store %arg8[%c0_33, %c0_34], %29 {strides = array<i32>} : memref<96x128xf32, #tpu.memory_space<vmem>>, vector<96x128xf32>,
    %c0_35 = arith.constant 0 : index
    %c0_36 = arith.constant 0 : index
    %31 = vector.load %arg8[%c0_35, %c0_36] : memref<96x128xf32, #tpu.memory_space<vmem>>, vector<96x128xf32>
    %c4 = arith.constant 4 : index
    %c0_37 = arith.constant 0 : index
    %32 = vector.load %arg9[%c4, %c0_37] : memref<112x128xbf16, #tpu.memory_space<vmem>>, vector<96x128xbf16>
    %c4_38 = arith.constant 4 : index
    %c0_39 = arith.constant 0 : index
    %c0_40 = arith.constant 0 : index
    %33 = vector.load %arg5[%c4_38, %c0_39, %c0_40] : memref<16x128x128xbf16, #tpu.memory_space<vmem>>, vector<1x128x128xbf16>
    %34 = vector.shape_cast %33 : vector<1x128x128xbf16> to vector<128x128xbf16>
    %cst_41 = arith.constant dense<0.000000e+00> : vector<96x128xf32>
    %35 = tpu.matmul %32, %34, %cst_41 {dimension_numbers = #tpu.dot_dimension_numbers<[1], [0], [0], [1], [0, 0, 1, 1], [], []>} : vector<96x128xbf16>, vector<128x128xbf16>, vector<96x128xf32> -> vector<96x128xf32>
    %c5 = arith.constant 5 : index
    %c0_42 = arith.constant 0 : index
    %36 = vector.load %arg9[%c5, %c0_42] : memref<112x128xbf16, #tpu.memory_space<vmem>>, vector<96x128xbf16>
    %c5_43 = arith.constant 5 : index
    %c0_44 = arith.constant 0 : index
    %c0_45 = arith.constant 0 : index
    %37 = vector.load %arg5[%c5_43, %c0_44, %c0_45] : memref<16x128x128xbf16, #tpu.memory_space<vmem>>, vector<1x128x128xbf16>
    %38 = vector.shape_cast %37 : vector<1x128x128xbf16> to vector<128x128xbf16>
    %cst_46 = arith.constant dense<0.000000e+00> : vector<96x128xf32>
    %39 = tpu.matmul %36, %38, %cst_46 {dimension_numbers = #tpu.dot_dimension_numbers<[1], [0], [0], [1], [0, 0, 1, 1], [], []>} : vector<96x128xbf16>, vector<128x128xbf16>, vector<96x128xf32> -> vector<96x128xf32>
    %40 = arith.addf %35, %39 : vector<96x128xf32>
    %41 = arith.addf %31, %40 : vector<96x128xf32>
    %c0_47 = arith.constant 0 : index
    %c0_48 = arith.constant 0 : index
    %42 = vector.load %arg8[%c0_47, %c0_48] : memref<96x128xf32, #tpu.memory_space<vmem>>, vector<96x128xf32>
    tpu.vector_store %arg8[%c0_47, %c0_48], %41 {strides = array<i32>} : memref<96x128xf32, #tpu.memory_space<vmem>>, vector<96x128xf32>,
    %c0_49 = arith.constant 0 : index
    %c0_50 = arith.constant 0 : index
    %43 = vector.load %arg8[%c0_49, %c0_50] : memref<96x128xf32, #tpu.memory_space<vmem>>, vector<96x128xf32>
    %c6 = arith.constant 6 : index
    %c0_51 = arith.constant 0 : index
    %44 = vector.load %arg9[%c6, %c0_51] : memref<112x128xbf16, #tpu.memory_space<vmem>>, vector<96x128xbf16>
    %c6_52 = arith.constant 6 : index
    %c0_53 = arith.constant 0 : index
    %c0_54 = arith.constant 0 : index
    %45 = vector.load %arg5[%c6_52, %c0_53, %c0_54] : memref<16x128x128xbf16, #tpu.memory_space<vmem>>, vector<1x128x128xbf16>
    %46 = vector.shape_cast %45 : vector<1x128x128xbf16> to vector<128x128xbf16>
    %cst_55 = arith.constant dense<0.000000e+00> : vector<96x128xf32>
    %47 = tpu.matmul %44, %46, %cst_55 {dimension_numbers = #tpu.dot_dimension_numbers<[1], [0], [0], [1], [0, 0, 1, 1], [], []>} : vector<96x128xbf16>, vector<128x128xbf16>, vector<96x128xf32> -> vector<96x128xf32>
    %c7 = arith.constant 7 : index
    %c0_56 = arith.constant 0 : index
    %48 = vector.load %arg9[%c7, %c0_56] : memref<112x128xbf16, #tpu.memory_space<vmem>>, vector<96x128xbf16>
    %c7_57 = arith.constant 7 : index
    %c0_58 = arith.constant 0 : index
    %c0_59 = arith.constant 0 : index
    %49 = vector.load %arg5[%c7_57, %c0_58, %c0_59] : memref<16x128x128xbf16, #tpu.memory_space<vmem>>, vector<1x128x128xbf16>
    %50 = vector.shape_cast %49 : vector<1x128x128xbf16> to vector<128x128xbf16>
    %cst_60 = arith.constant dense<0.000000e+00> : vector<96x128xf32>
    %51 = tpu.matmul %48, %50, %cst_60 {dimension_numbers = #tpu.dot_dimension_numbers<[1], [0], [0], [1], [0, 0, 1, 1], [], []>} : vector<96x128xbf16>, vector<128x128xbf16>, vector<96x128xf32> -> vector<96x128xf32>
    %52 = arith.addf %47, %51 : vector<96x128xf32>
    %53 = arith.addf %43, %52 : vector<96x128xf32>
    %c0_61 = arith.constant 0 : index
    %c0_62 = arith.constant 0 : index
    %54 = vector.load %arg8[%c0_61, %c0_62] : memref<96x128xf32, #tpu.memory_space<vmem>>, vector<96x128xf32>
    tpu.vector_store %arg8[%c0_61, %c0_62], %53 {strides = array<i32>} : memref<96x128xf32, #tpu.memory_space<vmem>>, vector<96x128xf32>,
    %c0_63 = arith.constant 0 : index
    %c0_64 = arith.constant 0 : index
    %55 = vector.load %arg8[%c0_63, %c0_64] : memref<96x128xf32, #tpu.memory_space<vmem>>, vector<96x128xf32>
    %c8 = arith.constant 8 : index
    %c0_65 = arith.constant 0 : index
    %56 = vector.load %arg9[%c8, %c0_65] : memref<112x128xbf16, #tpu.memory_space<vmem>>, vector<96x128xbf16>
    %c8_66 = arith.constant 8 : index
    %c0_67 = arith.constant 0 : index
    %c0_68 = arith.constant 0 : index
    %57 = vector.load %arg5[%c8_66, %c0_67, %c0_68] : memref<16x128x128xbf16, #tpu.memory_space<vmem>>, vector<1x128x128xbf16>
    %58 = vector.shape_cast %57 : vector<1x128x128xbf16> to vector<128x128xbf16>
    %cst_69 = arith.constant dense<0.000000e+00> : vector<96x128xf32>
    %59 = tpu.matmul %56, %58, %cst_69 {dimension_numbers = #tpu.dot_dimension_numbers<[1], [0], [0], [1], [0, 0, 1, 1], [], []>} : vector<96x128xbf16>, vector<128x128xbf16>, vector<96x128xf32> -> vector<96x128xf32>
    %c9 = arith.constant 9 : index
    %c0_70 = arith.constant 0 : index
    %60 = vector.load %arg9[%c9, %c0_70] : memref<112x128xbf16, #tpu.memory_space<vmem>>, vector<96x128xbf16>
    %c9_71 = arith.constant 9 : index
    %c0_72 = arith.constant 0 : index
    %c0_73 = arith.constant 0 : index
    %61 = vector.load %arg5[%c9_71, %c0_72, %c0_73] : memref<16x128x128xbf16, #tpu.memory_space<vmem>>, vector<1x128x128xbf16>
    %62 = vector.shape_cast %61 : vector<1x128x128xbf16> to vector<128x128xbf16>
    %cst_74 = arith.constant dense<0.000000e+00> : vector<96x128xf32>
    %63 = tpu.matmul %60, %62, %cst_74 {dimension_numbers = #tpu.dot_dimension_numbers<[1], [0], [0], [1], [0, 0, 1, 1], [], []>} : vector<96x128xbf16>, vector<128x128xbf16>, vector<96x128xf32> -> vector<96x128xf32>
    %64 = arith.addf %59, %63 : vector<96x128xf32>
    %65 = arith.addf %55, %64 : vector<96x128xf32>
    %c0_75 = arith.constant 0 : index
    %c0_76 = arith.constant 0 : index
    %66 = vector.load %arg8[%c0_75, %c0_76] : memref<96x128xf32, #tpu.memory_space<vmem>>, vector<96x128xf32>
    tpu.vector_store %arg8[%c0_75, %c0_76], %65 {strides = array<i32>} : memref<96x128xf32, #tpu.memory_space<vmem>>, vector<96x128xf32>,
    %c0_77 = arith.constant 0 : index
    %c0_78 = arith.constant 0 : index
    %67 = vector.load %arg8[%c0_77, %c0_78] : memref<96x128xf32, #tpu.memory_space<vmem>>, vector<96x128xf32>
    %c10 = arith.constant 10 : index
    %c0_79 = arith.constant 0 : index
    %68 = vector.load %arg9[%c10, %c0_79] : memref<112x128xbf16, #tpu.memory_space<vmem>>, vector<96x128xbf16>
    %c10_80 = arith.constant 10 : index
    %c0_81 = arith.constant 0 : index
    %c0_82 = arith.constant 0 : index
    %69 = vector.load %arg5[%c10_80, %c0_81, %c0_82] : memref<16x128x128xbf16, #tpu.memory_space<vmem>>, vector<1x128x128xbf16>
    %70 = vector.shape_cast %69 : vector<1x128x128xbf16> to vector<128x128xbf16>
    %cst_83 = arith.constant dense<0.000000e+00> : vector<96x128xf32>
    %71 = tpu.matmul %68, %70, %cst_83 {dimension_numbers = #tpu.dot_dimension_numbers<[1], [0], [0], [1], [0, 0, 1, 1], [], []>} : vector<96x128xbf16>, vector<128x128xbf16>, vector<96x128xf32> -> vector<96x128xf32>
    %c11 = arith.constant 11 : index
    %c0_84 = arith.constant 0 : index
    %72 = vector.load %arg9[%c11, %c0_84] : memref<112x128xbf16, #tpu.memory_space<vmem>>, vector<96x128xbf16>
    %c11_85 = arith.constant 11 : index
    %c0_86 = arith.constant 0 : index
    %c0_87 = arith.constant 0 : index
    %73 = vector.load %arg5[%c11_85, %c0_86, %c0_87] : memref<16x128x128xbf16, #tpu.memory_space<vmem>>, vector<1x128x128xbf16>
    %74 = vector.shape_cast %73 : vector<1x128x128xbf16> to vector<128x128xbf16>
    %cst_88 = arith.constant dense<0.000000e+00> : vector<96x128xf32>
    %75 = tpu.matmul %72, %74, %cst_88 {dimension_numbers = #tpu.dot_dimension_numbers<[1], [0], [0], [1], [0, 0, 1, 1], [], []>} : vector<96x128xbf16>, vector<128x128xbf16>, vector<96x128xf32> -> vector<96x128xf32>
    %76 = arith.addf %71, %75 : vector<96x128xf32>
    %77 = arith.addf %67, %76 : vector<96x128xf32>
    %c0_89 = arith.constant 0 : index
    %c0_90 = arith.constant 0 : index
    %78 = vector.load %arg8[%c0_89, %c0_90] : memref<96x128xf32, #tpu.memory_space<vmem>>, vector<96x128xf32>
    tpu.vector_store %arg8[%c0_89, %c0_90], %77 {strides = array<i32>} : memref<96x128xf32, #tpu.memory_space<vmem>>, vector<96x128xf32>,
    %c0_91 = arith.constant 0 : index
    %c0_92 = arith.constant 0 : index
    %79 = vector.load %arg8[%c0_91, %c0_92] : memref<96x128xf32, #tpu.memory_space<vmem>>, vector<96x128xf32>
    %c12 = arith.constant 12 : index
    %c0_93 = arith.constant 0 : index
    %80 = vector.load %arg9[%c12, %c0_93] : memref<112x128xbf16, #tpu.memory_space<vmem>>, vector<96x128xbf16>
    %c12_94 = arith.constant 12 : index
    %c0_95 = arith.constant 0 : index
    %c0_96 = arith.constant 0 : index
    %81 = vector.load %arg5[%c12_94, %c0_95, %c0_96] : memref<16x128x128xbf16, #tpu.memory_space<vmem>>, vector<1x128x128xbf16>
    %82 = vector.shape_cast %81 : vector<1x128x128xbf16> to vector<128x128xbf16>
    %cst_97 = arith.constant dense<0.000000e+00> : vector<96x128xf32>
    %83 = tpu.matmul %80, %82, %cst_97 {dimension_numbers = #tpu.dot_dimension_numbers<[1], [0], [0], [1], [0, 0, 1, 1], [], []>} : vector<96x128xbf16>, vector<128x128xbf16>, vector<96x128xf32> -> vector<96x128xf32>
    %c13 = arith.constant 13 : index
    %c0_98 = arith.constant 0 : index
    %84 = vector.load %arg9[%c13, %c0_98] : memref<112x128xbf16, #tpu.memory_space<vmem>>, vector<96x128xbf16>
    %c13_99 = arith.constant 13 : index
    %c0_100 = arith.constant 0 : index
    %c0_101 = arith.constant 0 : index
    %85 = vector.load %arg5[%c13_99, %c0_100, %c0_101] : memref<16x128x128xbf16, #tpu.memory_space<vmem>>, vector<1x128x128xbf16>
    %86 = vector.shape_cast %85 : vector<1x128x128xbf16> to vector<128x128xbf16>
    %cst_102 = arith.constant dense<0.000000e+00> : vector<96x128xf32>
    %87 = tpu.matmul %84, %86, %cst_102 {dimension_numbers = #tpu.dot_dimension_numbers<[1], [0], [0], [1], [0, 0, 1, 1], [], []>} : vector<96x128xbf16>, vector<128x128xbf16>, vector<96x128xf32> -> vector<96x128xf32>
    %88 = arith.addf %83, %87 : vector<96x128xf32>
    %89 = arith.addf %79, %88 : vector<96x128xf32>
    %c0_103 = arith.constant 0 : index
    %c0_104 = arith.constant 0 : index
    %90 = vector.load %arg8[%c0_103, %c0_104] : memref<96x128xf32, #tpu.memory_space<vmem>>, vector<96x128xf32>
    tpu.vector_store %arg8[%c0_103, %c0_104], %89 {strides = array<i32>} : memref<96x128xf32, #tpu.memory_space<vmem>>, vector<96x128xf32>,
    %c0_105 = arith.constant 0 : index
    %c0_106 = arith.constant 0 : index
    %91 = vector.load %arg8[%c0_105, %c0_106] : memref<96x128xf32, #tpu.memory_space<vmem>>, vector<96x128xf32>
    %c14 = arith.constant 14 : index
    %c0_107 = arith.constant 0 : index
    %92 = vector.load %arg9[%c14, %c0_107] : memref<112x128xbf16, #tpu.memory_space<vmem>>, vector<96x128xbf16>
    %c14_108 = arith.constant 14 : index
    %c0_109 = arith.constant 0 : index
    %c0_110 = arith.constant 0 : index
    %93 = vector.load %arg5[%c14_108, %c0_109, %c0_110] : memref<16x128x128xbf16, #tpu.memory_space<vmem>>, vector<1x128x128xbf16>
    %94 = vector.shape_cast %93 : vector<1x128x128xbf16> to vector<128x128xbf16>
    %cst_111 = arith.constant dense<0.000000e+00> : vector<96x128xf32>
    %95 = tpu.matmul %92, %94, %cst_111 {dimension_numbers = #tpu.dot_dimension_numbers<[1], [0], [0], [1], [0, 0, 1, 1], [], []>} : vector<96x128xbf16>, vector<128x128xbf16>, vector<96x128xf32> -> vector<96x128xf32>
    %c15 = arith.constant 15 : index
    %c0_112 = arith.constant 0 : index
    %96 = vector.load %arg9[%c15, %c0_112] : memref<112x128xbf16, #tpu.memory_space<vmem>>, vector<96x128xbf16>
    %c15_113 = arith.constant 15 : index
    %c0_114 = arith.constant 0 : index
    %c0_115 = arith.constant 0 : index
    %97 = vector.load %arg5[%c15_113, %c0_114, %c0_115] : memref<16x128x128xbf16, #tpu.memory_space<vmem>>, vector<1x128x128xbf16>
    %98 = vector.shape_cast %97 : vector<1x128x128xbf16> to vector<128x128xbf16>
    %cst_116 = arith.constant dense<0.000000e+00> : vector<96x128xf32>
    %99 = tpu.matmul %96, %98, %cst_116 {dimension_numbers = #tpu.dot_dimension_numbers<[1], [0], [0], [1], [0, 0, 1, 1], [], []>} : vector<96x128xbf16>, vector<128x128xbf16>, vector<96x128xf32> -> vector<96x128xf32>
    %100 = arith.addf %95, %99 : vector<96x128xf32>
    %101 = arith.addf %91, %100 : vector<96x128xf32>
    %c0_117 = arith.constant 0 : index
    %c0_118 = arith.constant 0 : index
    %102 = vector.load %arg8[%c0_117, %c0_118] : memref<96x128xf32, #tpu.memory_space<vmem>>, vector<96x128xf32>
    tpu.vector_store %arg8[%c0_117, %c0_118], %101 {strides = array<i32>} : memref<96x128xf32, #tpu.memory_space<vmem>>, vector<96x128xf32>,
    %c0_i32_119 = arith.constant 0 : i32
    %103 = arith.cmpi eq, %arg2, %c0_i32_119 : i32
    %104 = arith.extui %103 : i1 to i32
    %c0_i32_120 = arith.constant 0 : i32
    %105 = arith.cmpi ne, %104, %c0_i32_120 : i32
    scf.if %105 {
      %c0_121 = arith.constant 0 : index
      %c0_122 = arith.constant 0 : index
      %106 = vector.load %arg8[%c0_121, %c0_122] : memref<96x128xf32, #tpu.memory_space<vmem>>, vector<96x128xf32>
      %c0_123 = arith.constant 0 : index
      %c0_124 = arith.constant 0 : index
      %107 = vector.load %arg6[%c0_123, %c0_124] : memref<1x128xf32, #tpu.memory_space<vmem>>, vector<1x128xf32>
      %108 = vector.broadcast %107 : vector<1x128xf32> to vector<96x128xf32>
      %109 = arith.addf %106, %108 : vector<96x128xf32>
      %cst_125 = arith.constant 0.000000e+00 : f32
      %110 = vector.broadcast %cst_125 : f32 to vector<96x128xf32>
      %111 = arith.cmpf ogt, %109, %110 : vector<96x128xf32>
      %cst_126 = arith.constant 2.500000e-01 : f32
      %112 = vector.broadcast %cst_126 : f32 to vector<96x128xf32>
      %113 = arith.mulf %112, %109 : vector<96x128xf32>
      %114 = arith.select %111, %109, %113 : vector<96x128xi1>, vector<96x128xf32>
      %c0_127 = arith.constant 0 : index
      %c0_128 = arith.constant 0 : index
      %115 = vector.load %arg7[%c0_127, %c0_128] : memref<96x128xf32, #tpu.memory_space<vmem>>, vector<96x128xf32>
      tpu.vector_store %arg7[%c0_127, %c0_128], %114 {strides = array<i32>} : memref<96x128xf32, #tpu.memory_space<vmem>>, vector<96x128xf32>,
    } else {
    }
    return
  }
  func.func @transform_0(%arg0: i32, %arg1: i32, %arg2: i32) -> (i32, i32) {
    %c0_i32 = arith.constant 0 : i32
    return %arg0, %arg2 : i32, i32
  }
  func.func @transform_1(%arg0: i32, %arg1: i32, %arg2: i32) -> (i32, i32) {
    %c1_i32 = arith.constant 1 : i32
    %0 = arith.addi %arg0, %c1_i32 : i32
    %c6_i32 = arith.constant 6 : i32
    %1 = arith.muli %0, %c6_i32 : i32
    %c0_i32 = arith.constant 0 : i32
    return %1, %arg2 : i32, i32
  }
  func.func @transform_2(%arg0: i32, %arg1: i32, %arg2: i32) -> (i32, i32, i32) {
    %c0_i32 = arith.constant 0 : i32
    %c0_i32_0 = arith.constant 0 : i32
    return %c0_i32, %arg2, %arg1 : i32, i32, i32
  }
  func.func @transform_3(%arg0: i32, %arg1: i32, %arg2: i32) -> (i32, i32) {
    %c0_i32 = arith.constant 0 : i32
    %c0_i32_0 = arith.constant 0 : i32
    return %c0_i32, %arg1 : i32, i32
  }
  func.func @transform_4(%arg0: i32, %arg1: i32, %arg2: i32) -> (i32, i32) {
    %c0_i32 = arith.constant 0 : i32
    return %arg0, %arg1 : i32, i32
  }
}

</mosaic_0001>

<llo_original>
// kernel: tpu_custom_call.1
$region0: #{tpu_custom_call.1}
  #allocation0 [shape = 'u32[]', space=smem, size = 0x4, offset = 0x4, fixed_abs, tag = 'smem constant byte address 0x4 - core index']
  #allocation1 [shape = 'u32[144,128]{1,0:T(1,128)}', space=vmem, size = 0x12000, scoped, tag = 'internal scratch']
  #allocation2 [shape = 'f32[96,128]{1,0:T(8,128)}', space=vmem, size = 0xc000, scoped, tag = 'scratch operand']
  #allocation3 [shape = 'bf16[112,128]{1,0:T(16,128)(2,1)}', space=vmem, size = 0x7000, scoped, tag = 'scratch operand']
  %s0 = inlined_call_operand.hbm [shape: bf16[112,128], index: 0, kind: input, shape index: {}]
  %s1 = inlined_call_operand.hbm [shape: bf16[112,128], index: 1, kind: input, shape index: {}]
  %s2 = inlined_call_operand.hbm [shape: bf16[16,128,128], index: 2, kind: input, shape index: {}]
  %s3 = inlined_call_operand.vmem [shape: f32[1,128], index: 3, kind: input, shape index: {}]
  %s4 = inlined_call_operand.hbm [shape: f32[96,128], index: 4, kind: output, shape index: {}]
  %s5 = sld [smem:[#allocation0]]
  $region46: #{tpu_custom_call.1} parent=0
    _
  %s7 = ssub.s32 1, %s5
  %s8 = scalar_select 0, %s7, %s5
  $region1: #{tpu_custom_call.1} parent=0
    #allocation4 [shape = 'u8[24576]{0}', space=vmem, size = 0x6000, scoped, tag = 'input window, operand 0, single buffered']
    #allocation5 [shape = 's32[1]{0}', space=sflag, size = 0x4, scoped, tag = 'scoped memory for tpu_custom_call.1']
    #allocation6 [shape = 's32[1]{0}', space=sflag, size = 0x4, scoped, tag = 'scoped memory for tpu_custom_call.1']
    #allocation7 [shape = 'u8[4096]{0}', space=vmem, size = 0x1000, scoped, tag = 'input window, operand 1, single buffered']
    #allocation8 [shape = 's32[1]{0}', space=sflag, size = 0x4, scoped, tag = 'scoped memory for tpu_custom_call.1']
    #allocation9 [shape = 'u8[524288]{0}', space=vmem, size = 0x80000, scoped, tag = 'input window, operand 2, single buffered']
    #allocation10 [shape = 'u8[49152]{0}', space=vmem, size = 0xc000, scoped, tag = 'output window, operand 0, single buffered']
    %9 = vsyncpa [#allocation5], 0
    %10 = vsyncpa [#allocation8], 0
    %11 = vsyncpa [#allocation6], 0
    // Predicated region
    $region2: #{tpu_custom_call.1} parent=1 // pred_check
      _
    $region3: #{tpu_custom_call.1} parent=1 // pred_check_branch
      %13 = sbr.rel (0) target = $region5
    $region4: #{tpu_custom_call.1} parent=1 // pred_region
      %s15 = ssub.s32 768, 768
      %16 = vsyncadd [#allocation5], %s15
      %s17 = sshll.u32 [#allocation4], 4
      %s18 = int_to_ptr.vmem [resolvable:$true] %s17
      %23 = dma.hbm_to_vmem [thread:$0]  %s0, 768, %s18, [#allocation5], 64, 64, 4
    $region5: #{tpu_custom_call.1} parent=1 // pred_fallthru
      _
    // Predicated region
    $region6: #{tpu_custom_call.1} parent=1 // pred_check
      _
    $region7: #{tpu_custom_call.1} parent=1 // pred_check_branch
      %25 = sbr.rel (0) target = $region9
    $region8: #{tpu_custom_call.1} parent=1 // pred_region
      %s26 = sadd.s32 0, 1
      %s27 = smul.u32 %s26, 6
      %s28 = smul.u32 2, %s27
      %s30 = ssub.s32 128, 128
      %31 = vsyncadd [#allocation8], %s30
      %s32 = smul.addr %s28, 64
      %s33 = scalar_lea.hbm %s1, %s32
      %s34 = sshll.u32 [#allocation7], 4
      %s35 = int_to_ptr.vmem [resolvable:$true] %s34
      %40 = dma.hbm_to_vmem [thread:$0]  %s33, 128, %s35, [#allocation8], 64, 64, 4
    $region9: #{tpu_custom_call.1} parent=1 // pred_fallthru
      _
    // Predicated region
    $region10: #{tpu_custom_call.1} parent=1 // pred_check
      _
    $region11: #{tpu_custom_call.1} parent=1 // pred_check_branch
      %42 = sbr.rel (0) target = $region13
    $region12: #{tpu_custom_call.1} parent=1 // pred_region
      %s44 = ssub.s32 16384, 16384
      %45 = vsyncadd [#allocation8], %s44
      %s46 = sshll.u32 [#allocation9], 4
      %s47 = int_to_ptr.vmem [resolvable:$true] %s46
      %52 = dma.hbm_to_vmem [thread:$0]  %s2, 16384, %s47, [#allocation8], 64, 64, 4
    $region13: #{tpu_custom_call.1} parent=1 // pred_fallthru
      _
    // Predicated region
    $region14: #{tpu_custom_call.1} parent=1 // pred_check
      _
    $region15: #{tpu_custom_call.1} parent=1 // pred_check_branch
      %54 = sbr.rel (0) target = $region17
    $region16: #{tpu_custom_call.1} parent=1 // pred_region
      _
    $region17: #{tpu_custom_call.1} parent=1 // pred_fallthru
      _
    // Predicated region
    $region18: #{tpu_custom_call.1} parent=1 // pred_check
      _
    $region19: #{tpu_custom_call.1} parent=1 // pred_check_branch
      %56 = sbr.rel (0) target = $region21
    $region20: #{tpu_custom_call.1} parent=1 // pred_region
      %57 = dma.done [#allocation5], 768
    $region21: #{tpu_custom_call.1} parent=1 // pred_fallthru
      _
    // Predicated region
    $region22: #{tpu_custom_call.1} parent=1 // pred_check
      _
    $region23: #{tpu_custom_call.1} parent=1 // pred_check_branch
      %59 = sbr.rel (0) target = $region25
    $region24: #{tpu_custom_call.1} parent=1 // pred_region
      %60 = dma.done [#allocation8], 128
    $region25: #{tpu_custom_call.1} parent=1 // pred_fallthru
      _
    // Predicated region
    $region26: #{tpu_custom_call.1} parent=1 // pred_check
      _
    $region27: #{tpu_custom_call.1} parent=1 // pred_check_branch
      %62 = sbr.rel (0) target = $region29
    $region28: #{tpu_custom_call.1} parent=1 // pred_region
      %63 = dma.done [#allocation8], 16384
    $region29: #{tpu_custom_call.1} parent=1 // pred_fallthru
      _
    %s64 = sadd.s32 0, 1
    %s65 = smul.u32 %s64, 6
    %s66 = smul.u32 2, %s65
    %p68 = scmp.eq.s32.totalorder 0, 0
    // Predicated region
    $region30: #{tpu_custom_call.1} parent=1 // pred_check
      %p69 = pneg %p68
    $region31: #{tpu_custom_call.1} parent=1 // pred_check_branch
      %71 = sbr.rel (%p69) target = $region33
    $region32: #{tpu_custom_call.1} parent=1 // pred_region
      %72 = vst [vmem:[#allocation2] sm:$0xff] 0.0
      %73 = vst [vmem:[#allocation2 + $0x8] sm:$0xff] 0.0
      %74 = vst [vmem:[#allocation2 + $0x10] sm:$0xff] 0.0
      %75 = vst [vmem:[#allocation2 + $0x18] sm:$0xff] 0.0
      %76 = vst [vmem:[#allocation2 + $0x20] sm:$0xff] 0.0
      %77 = vst [vmem:[#allocation2 + $0x28] sm:$0xff] 0.0
      %78 = vst [vmem:[#allocation2 + $0x30] sm:$0xff] 0.0
      %79 = vst [vmem:[#allocation2 + $0x38] sm:$0xff] 0.0
      %80 = vst [vmem:[#allocation2 + $0x40] sm:$0xff] 0.0
      %81 = vst [vmem:[#allocation2 + $0x48] sm:$0xff] 0.0
      %82 = vst [vmem:[#allocation2 + $0x50] sm:$0xff] 0.0
      %83 = vst [vmem:[#allocation2 + $0x58] sm:$0xff] 0.0
    $region33: #{tpu_custom_call.1} parent=1 // pred_fallthru
      _
    %v84 = vld [vmem:[#allocation4] sm:$0xf]
    %v85 = vld [vmem:[#allocation4 + $0x4] sm:$0xf]
    %v86 = vld [vmem:[#allocation4 + $0x8] sm:$0xf]
    %v87 = vld [vmem:[#allocation4 + $0xc] sm:$0xf]
    %v88 = vld [vmem:[#allocation4 + $0x10] sm:$0xf]
    %v89 = vld [vmem:[#allocation4 + $0x14] sm:$0xf]
    %v90 = vld [vmem:[#allocation4 + $0x18] sm:$0xf]
    %v91 = vld [vmem:[#allocation4 + $0x1c] sm:$0xf]
    %v92 = vld [vmem:[#allocation4 + $0x20] sm:$0xf]
    %v93 = vld [vmem:[#allocation4 + $0x24] sm:$0xf]
    %v94 = vld [vmem:[#allocation4 + $0x28] sm:$0xf]
    %v95 = vld [vmem:[#allocation4 + $0x2c] sm:$0xf]
    %v108 = vunpack.c.l.b16 %v84
    %v109 = vunpack.c.l.b16 %v85
    %v110 = vunpack.c.l.b16 %v86
    %v111 = vunpack.c.l.b16 %v87
    %v112 = vunpack.c.l.b16 %v88
    %v113 = vunpack.c.l.b16 %v89
    %v114 = vunpack.c.l.b16 %v90
    %v115 = vunpack.c.l.b16 %v91
    %v116 = vunpack.c.l.b16 %v92
    %v117 = vunpack.c.l.b16 %v93
    %v118 = vunpack.c.l.b16 %v94
    %v119 = vunpack.c.l.b16 %v95
    %v120 = vpack.c.b16 %v109, %v108
    %v121 = vpack.c.b16 %v111, %v110
    %v122 = vpack.c.b16 %v113, %v112
    %v123 = vpack.c.b16 %v115, %v114
    %v124 = vpack.c.b16 %v117, %v116
    %v125 = vpack.c.b16 %v119, %v118
    %132 = vst [vmem:[#allocation3] sm:$0xff] %v120
    %133 = vst [vmem:[#allocation3 + $0x8] sm:$0xff] %v121
    %134 = vst [vmem:[#allocation3 + $0x10] sm:$0xff] %v122
    %135 = vst [vmem:[#allocation3 + $0x18] sm:$0xff] %v123
    %136 = vst [vmem:[#allocation3 + $0x20] sm:$0xff] %v124
    %137 = vst [vmem:[#allocation3 + $0x28] sm:$0xff] %v125
    %v138 = vld [vmem:[#allocation7] sm:$0xf]
    %v139 = vld [vmem:[#allocation7 + $0x4] sm:$0xf]
    %v142 = vunpack.c.l.b16 %v138
    %v143 = vunpack.c.l.b16 %v139
    %v144 = vpack.c.b16 %v143, %v142
    %146 = vst [vmem:[#allocation3 + $0x30] sm:$0xff] %v144
    %v147 = vld [vmem:[#allocation2] sm:$0xff]
    %v148 = vld [vmem:[#allocation2 + $0x8] sm:$0xff]
    %v149 = vld [vmem:[#allocation2 + $0x10] sm:$0xff]
    %v150 = vld [vmem:[#allocation2 + $0x18] sm:$0xff]
    %v151 = vld [vmem:[#allocation2 + $0x20] sm:$0xff]
    %v152 = vld [vmem:[#allocation2 + $0x28] sm:$0xff]
    %v153 = vld [vmem:[#allocation2 + $0x30] sm:$0xff]
    %v154 = vld [vmem:[#allocation2 + $0x38] sm:$0xff]
    %v155 = vld [vmem:[#allocation2 + $0x40] sm:$0xff]
    %v156 = vld [vmem:[#allocation2 + $0x48] sm:$0xff]
    %v157 = vld [vmem:[#allocation2 + $0x50] sm:$0xff]
    %v158 = vld [vmem:[#allocation2 + $0x58] sm:$0xff]
    %v159 = vld [vmem:[#allocation3] sm:$0xff]
    %v160 = vld [vmem:[#allocation3 + $0x8] sm:$0xff]
    %v161 = vld [vmem:[#allocation3 + $0x10] sm:$0xff]
    %v162 = vld [vmem:[#allocation3 + $0x18] sm:$0xff]
    %v163 = vld [vmem:[#allocation3 + $0x20] sm:$0xff]
    %v164 = vld [vmem:[#allocation3 + $0x28] sm:$0xff]
    %v165 = vld [vmem:[#allocation9] sm:$0xf]
    %v166 = vld [vmem:[#allocation9 + $0x4] sm:$0xf]
    %v167 = vld [vmem:[#allocation9 + $0x8] sm:$0xf]
    %v168 = vld [vmem:[#allocation9 + $0xc] sm:$0xf]
    %v169 = vld [vmem:[#allocation9 + $0x10] sm:$0xf]
    %v170 = vld [vmem:[#allocation9 + $0x14] sm:$0xf]
    %v171 = vld [vmem:[#allocation9 + $0x18] sm:$0xf]
    %v172 = vld [vmem:[#allocation9 + $0x1c] sm:$0xf]
    %v173 = vld [vmem:[#allocation9 + $0x20] sm:$0xf]
    %v174 = vld [vmem:[#allocation9 + $0x24] sm:$0xf]
    %v175 = vld [vmem:[#allocation9 + $0x28] sm:$0xf]
    %v176 = vld [vmem:[#allocation9 + $0x2c] sm:$0xf]
    %v177 = vld [vmem:[#allocation9 + $0x30] sm:$0xf]
    %v178 = vld [vmem:[#allocation9 + $0x34] sm:$0xf]
    %v179 = vld [vmem:[#allocation9 + $0x38] sm:$0xf]
    %v180 = vld [vmem:[#allocation9 + $0x3c] sm:$0xf]
    %v181 = vld [vmem:[#allocation3] sm:$0xff]
    %v182 = vld [vmem:[#allocation3 + $0x8] sm:$0xff]
    %v183 = vld [vmem:[#allocation3 + $0x10] sm:$0xff]
    %v184 = vld [vmem:[#allocation3 + $0x18] sm:$0xff]
    %v185 = vld [vmem:[#allocation3 + $0x20] sm:$0xff]
    %v186 = vld [vmem:[#allocation3 + $0x28] sm:$0xff]
    %v187 = vld [vmem:[#allocation3 + $0x30] sm:$0x1]
    %s188 = scalar_lea.vmem [#allocation9], 64
    %v189 = vld [vmem:[%s188] sm:$0xf]
    %v190 = vld [vmem:[%s188 + $0x4] sm:$0xf]
    %v191 = vld [vmem:[%s188 + $0x8] sm:$0xf]
    %v192 = vld [vmem:[%s188 + $0xc] sm:$0xf]
    %v193 = vld [vmem:[%s188 + $0x10] sm:$0xf]
    %v194 = vld [vmem:[%s188 + $0x14] sm:$0xf]
    %v195 = vld [vmem:[%s188 + $0x18] sm:$0xf]
    %v196 = vld [vmem:[%s188 + $0x1c] sm:$0xf]
    %v197 = vld [vmem:[%s188 + $0x20] sm:$0xf]
    %v198 = vld [vmem:[%s188 + $0x24] sm:$0xf]
    %v199 = vld [vmem:[%s188 + $0x28] sm:$0xf]
    %v200 = vld [vmem:[%s188 + $0x2c] sm:$0xf]
    %v201 = vld [vmem:[%s188 + $0x30] sm:$0xf]
    %v202 = vld [vmem:[%s188 + $0x34] sm:$0xf]
    %v203 = vld [vmem:[%s188 + $0x38] sm:$0xf]
    %v204 = vld [vmem:[%s188 + $0x3c] sm:$0xf]
    %vm205 = vsmask.f32 7424
    %v207 = vshrl.u32 %v181, 16
    %v209 = vshll.u32 %v181, 16
    %v211 = vrot.slane %v209, 1
    %v212 = vor.u32 %v207, %v211
    %v214 = vshll.u32 %v182, 16
    %v216 = vrot.slane %v214, 1
    %v217 = vsel %vm205, %v212, %v216
    %v218 = vshrl.u32 %v182, 16
    %v220 = vor.u32 %v218, %v216
    %v222 = vshll.u32 %v183, 16
    %v224 = vrot.slane %v222, 1
    %v225 = vsel %vm205, %v220, %v224
    %v226 = vshrl.u32 %v183, 16
    %v228 = vor.u32 %v226, %v224
    %v230 = vshll.u32 %v184, 16
    %v232 = vrot.slane %v230, 1
    %v233 = vsel %vm205, %v228, %v232
    %v234 = vshrl.u32 %v184, 16
    %v236 = vor.u32 %v234, %v232
    %v238 = vshll.u32 %v185, 16
    %v240 = vrot.slane %v238, 1
    %v241 = vsel %vm205, %v236, %v240
    %v242 = vshrl.u32 %v185, 16
    %v244 = vor.u32 %v242, %v240
    %v246 = vshll.u32 %v186, 16
    %v248 = vrot.slane %v246, 1
    %v249 = vsel %vm205, %v244, %v248
    %v250 = vshrl.u32 %v186, 16
    %v252 = vor.u32 %v250, %v248
    %v254 = vshll.u32 %v187, 16
    %v256 = vrot.slane %v254, 1
    %v257 = vsel %vm205, %v252, %v256
    %v280 = vunpack.c.l.b16 %v189
    %v281 = vunpack.c.l.b16 %v190
    %v282 = vunpack.c.l.b16 %v191
    %v283 = vunpack.c.l.b16 %v192
    %v284 = vunpack.c.l.b16 %v193
    %v285 = vunpack.c.l.b16 %v194
    %v286 = vunpack.c.l.b16 %v195
    %v287 = vunpack.c.l.b16 %v196
    %v288 = vunpack.c.l.b16 %v197
    %v289 = vunpack.c.l.b16 %v198
    %v290 = vunpack.c.l.b16 %v199
    %v291 = vunpack.c.l.b16 %v200
    %v292 = vunpack.c.l.b16 %v201
    %v293 = vunpack.c.l.b16 %v202
    %v294 = vunpack.c.l.b16 %v203
    %v295 = vunpack.c.l.b16 %v204
    %v296 = vpack.c.b16 %v281, %v280
    %v297 = vpack.c.b16 %v283, %v282
    %v298 = vpack.c.b16 %v285, %v284
    %v299 = vpack.c.b16 %v287, %v286
    %v300 = vpack.c.b16 %v289, %v288
    %v301 = vpack.c.b16 %v291, %v290
    %v302 = vpack.c.b16 %v293, %v292
    %v303 = vpack.c.b16 %v295, %v294
    %312 = vmatprep.subr.bf16.mxu0 0
    %313 = vmatpush1.bf16.msra.mxu0 %v296
    %314 = vmatprep.subr.bf16.mxu0 0
    %315 = vmatpush1.bf16.msra.mxu0 %v297
    %316 = vmatprep.subr.bf16.mxu0 0
    %317 = vmatpush1.bf16.msra.mxu0 %v298
    %318 = vmatprep.subr.bf16.mxu0 0
    %319 = vmatpush1.bf16.msra.mxu0 %v299
    %320 = vmatprep.subr.bf16.mxu0 0
    %321 = vmatpush1.bf16.msra.mxu0 %v300
    %322 = vmatprep.subr.bf16.mxu0 0
    %323 = vmatpush1.bf16.msra.mxu0 %v301
    %324 = vmatprep.subr.bf16.mxu0 0
    %325 = vmatpush1.bf16.msra.mxu0 %v302
    %326 = vmatprep.subr.bf16.mxu0 0
    %327 = vmatpush1.bf16.msra.mxu0 %v303
    %328 = vmatprep.subr.bf16.mxu0 0
    %329 = vmatpush1.bf16.msra.mxu0 0
    %330 = vmatprep.subr.bf16.mxu0 0
    %331 = vmatpush1.bf16.msra.mxu0 0
    %332 = vmatprep.subr.bf16.mxu0 0
    %333 = vmatpush1.bf16.msra.mxu0 0
    %334 = vmatprep.subr.bf16.mxu0 0
    %335 = vmatpush1.bf16.msra.mxu0 0
    %336 = vmatprep.subr.bf16.mxu0 0
    %337 = vmatpush1.bf16.msra.mxu0 0
    %338 = vmatprep.subr.bf16.mxu0 0
    %339 = vmatpush1.bf16.msra.mxu0 0
    %340 = vmatprep.subr.bf16.mxu0 0
    %341 = vmatpush1.bf16.msra.mxu0 0
    %342 = vmatprep.subr.bf16.mxu0 0
    %343 = vmatpush1.bf16.msra.mxu0 0
    %344 = vmatprep.mubr.bf16.mxu0 0
    %345 = vmatmul.mubr.bf16.gmra.mrb[0].mxu0 %v217
    %v346 = vpop.f32.mrb[0].mxu0
    %v347 = vadd.f32 0.0, %v346
    %v348 = vpop.f32.mrb[0].mxu0
    %v349 = vpop.f32.mrb[0].mxu0
    %v350 = vadd.f32 0.0, %v349
    %v351 = vpop.f32.mrb[0].mxu0
    %352 = vmatprep.mubr.bf16.mxu0 0
    %353 = vmatmul.mubr.bf16.gmra.mrb[0].mxu0 %v225
    %v354 = vpop.f32.mrb[0].mxu0
    %v355 = vadd.f32 0.0, %v354
    %v356 = vpop.f32.mrb[0].mxu0
    %v357 = vpop.f32.mrb[0].mxu0
    %v358 = vadd.f32 0.0, %v357
    %v359 = vpop.f32.mrb[0].mxu0
    %360 = vmatprep.mubr.bf16.mxu0 0
    %361 = vmatmul.mubr.bf16.gmra.mrb[0].mxu0 %v233
    %v362 = vpop.f32.mrb[0].mxu0
    %v363 = vadd.f32 0.0, %v362
    %v364 = vpop.f32.mrb[0].mxu0
    %v365 = vpop.f32.mrb[0].mxu0
    %v366 = vadd.f32 0.0, %v365
    %v367 = vpop.f32.mrb[0].mxu0
    %368 = vmatprep.mubr.bf16.mxu0 0
    %369 = vmatmul.mubr.bf16.gmra.mrb[0].mxu0 %v241
    %v370 = vpop.f32.mrb[0].mxu0
    %v371 = vadd.f32 0.0, %v370
    %v372 = vpop.f32.mrb[0].mxu0
    %v373 = vpop.f32.mrb[0].mxu0
    %v374 = vadd.f32 0.0, %v373
    %v375 = vpop.f32.mrb[0].mxu0
    %376 = vmatprep.mubr.bf16.mxu0 0
    %377 = vmatmul.mubr.bf16.gmra.mrb[0].mxu0 %v249
    %v378 = vpop.f32.mrb[0].mxu0
    %v379 = vadd.f32 0.0, %v378
    %v380 = vpop.f32.mrb[0].mxu0
    %v381 = vpop.f32.mrb[0].mxu0
    %v382 = vadd.f32 0.0, %v381
    %v383 = vpop.f32.mrb[0].mxu0
    %384 = vmatprep.mubr.bf16.mxu0 0
    %385 = vmatmul.mubr.bf16.gmra.mrb[0].mxu0 %v257
    %v386 = vpop.f32.mrb[0].mxu0
    %v387 = vadd.f32 0.0, %v386
    %v388 = vpop.f32.mrb[0].mxu0
    %v389 = vpop.f32.mrb[0].mxu0
    %v390 = vadd.f32 0.0, %v389
    %v391 = vpop.f32.mrb[0].mxu0
    %392 = vdwg.mxu0
    %v409 = vunpack.c.l.b16 %v165
    %v410 = vunpack.c.l.b16 %v166
    %v411 = vunpack.c.l.b16 %v167
    %v412 = vunpack.c.l.b16 %v168
    %v413 = vunpack.c.l.b16 %v169
    %v414 = vunpack.c.l.b16 %v170
    %v415 = vunpack.c.l.b16 %v171
    %v416 = vunpack.c.l.b16 %v172
    %v417 = vunpack.c.l.b16 %v173
    %v418 = vunpack.c.l.b16 %v174
    %v419 = vunpack.c.l.b16 %v175
    %v420 = vunpack.c.l.b16 %v176
    %v421 = vunpack.c.l.b16 %v177
    %v422 = vunpack.c.l.b16 %v178
    %v423 = vunpack.c.l.b16 %v179
    %v424 = vunpack.c.l.b16 %v180
    %v425 = vpack.c.b16 %v410, %v409
    %v426 = vpack.c.b16 %v412, %v411
    %v427 = vpack.c.b16 %v414, %v413
    %v428 = vpack.c.b16 %v416, %v415
    %v429 = vpack.c.b16 %v418, %v417
    %v430 = vpack.c.b16 %v420, %v419
    %v431 = vpack.c.b16 %v422, %v421
    %v432 = vpack.c.b16 %v424, %v423
    %441 = vmatprep.subr.bf16.mxu0 0
    %442 = vmatpush1.bf16.msra.mxu0 %v425
    %443 = vmatprep.subr.bf16.mxu0 0
    %444 = vmatpush1.bf16.msra.mxu0 %v426
    %445 = vmatprep.subr.bf16.mxu0 0
    %446 = vmatpush1.bf16.msra.mxu0 %v427
    %447 = vmatprep.subr.bf16.mxu0 0
    %448 = vmatpush1.bf16.msra.mxu0 %v428
    %449 = vmatprep.subr.bf16.mxu0 0
    %450 = vmatpush1.bf16.msra.mxu0 %v429
    %451 = vmatprep.subr.bf16.mxu0 0
    %452 = vmatpush1.bf16.msra.mxu0 %v430
    %453 = vmatprep.subr.bf16.mxu0 0
    %454 = vmatpush1.bf16.msra.mxu0 %v431
    %455 = vmatprep.subr.bf16.mxu0 0
    %456 = vmatpush1.bf16.msra.mxu0 %v432
    %457 = vmatprep.subr.bf16.mxu0 0
    %458 = vmatpush1.bf16.msra.mxu0 0
    %459 = vmatprep.subr.bf16.mxu0 0
    %460 = vmatpush1.bf16.msra.mxu0 0
    %461 = vmatprep.subr.bf16.mxu0 0
    %462 = vmatpush1.bf16.msra.mxu0 0
    %463 = vmatprep.subr.bf16.mxu0 0
    %464 = vmatpush1.bf16.msra.mxu0 0
    %465 = vmatprep.subr.bf16.mxu0 0
    %466 = vmatpush1.bf16.msra.mxu0 0
    %467 = vmatprep.subr.bf16.mxu0 0
    %468 = vmatpush1.bf16.msra.mxu0 0
    %469 = vmatprep.subr.bf16.mxu0 0
    %470 = vmatpush1.bf16.msra.mxu0 0
    %471 = vmatprep.subr.bf16.mxu0 0
    %472 = vmatpush1.bf16.msra.mxu0 0
    %473 = vmatprep.mubr.bf16.mxu0 0
    %474 = vmatmul.mubr.bf16.gmra.mrb[0].mxu0 %v159
    %v475 = vpop.f32.mrb[0].mxu0
    %v476 = vadd.f32 %v347, %v475
    %v477 = vpop.f32.mrb[0].mxu0
    %v478 = vpop.f32.mrb[0].mxu0
    %v479 = vadd.f32 %v350, %v478
    %v480 = vpop.f32.mrb[0].mxu0
    %481 = vmatprep.mubr.bf16.mxu0 0
    %482 = vmatmul.mubr.bf16.gmra.mrb[0].mxu0 %v160
    %v483 = vpop.f32.mrb[0].mxu0
    %v484 = vadd.f32 %v355, %v483
    %v485 = vpop.f32.mrb[0].mxu0
    %v486 = vpop.f32.mrb[0].mxu0
    %v487 = vadd.f32 %v358, %v486
    %v488 = vpop.f32.mrb[0].mxu0
    %489 = vmatprep.mubr.bf16.mxu0 0
    %490 = vmatmul.mubr.bf16.gmra.mrb[0].mxu0 %v161
    %v491 = vpop.f32.mrb[0].mxu0
    %v492 = vadd.f32 %v363, %v491
    %v493 = vpop.f32.mrb[0].mxu0
    %v494 = vpop.f32.mrb[0].mxu0
    %v495 = vadd.f32 %v366, %v494
    %v496 = vpop.f32.mrb[0].mxu0
    %497 = vmatprep.mubr.bf16.mxu0 0
    %498 = vmatmul.mubr.bf16.gmra.mrb[0].mxu0 %v162
    %v499 = vpop.f32.mrb[0].mxu0
    %v500 = vadd.f32 %v371, %v499
    %v501 = vpop.f32.mrb[0].mxu0
    %v502 = vpop.f32.mrb[0].mxu0
    %v503 = vadd.f32 %v374, %v502
    %v504 = vpop.f32.mrb[0].mxu0
    %505 = vmatprep.mubr.bf16.mxu0 0
    %506 = vmatmul.mubr.bf16.gmra.mrb[0].mxu0 %v163
    %v507 = vpop.f32.mrb[0].mxu0
    %v508 = vadd.f32 %v379, %v507
    %v509 = vpop.f32.mrb[0].mxu0
    %v510 = vpop.f32.mrb[0].mxu0
    %v511 = vadd.f32 %v382, %v510
    %v512 = vpop.f32.mrb[0].mxu0
    %513 = vmatprep.mubr.bf16.mxu0 0
    %514 = vmatmul.mubr.bf16.gmra.mrb[0].mxu0 %v164
    %v515 = vpop.f32.mrb[0].mxu0
    %v516 = vadd.f32 %v387, %v515
    %v517 = vpop.f32.mrb[0].mxu0
    %v518 = vpop.f32.mrb[0].mxu0
    %v519 = vadd.f32 %v390, %v518
    %v520 = vpop.f32.mrb[0].mxu0
    %521 = vdwg.mxu0
    %v522 = vadd.f32 %v147, %v476
    %v523 = vadd.f32 %v148, %v479
    %v524 = vadd.f32 %v149, %v484
    %v525 = vadd.f32 %v150, %v487
    %v526 = vadd.f32 %v151, %v492
    %v527 = vadd.f32 %v152, %v495
    %v528 = vadd.f32 %v153, %v500
    %v529 = vadd.f32 %v154, %v503
    %v530 = vadd.f32 %v155, %v508
    %v531 = vadd.f32 %v156, %v511
    %v532 = vadd.f32 %v157, %v516
    %v533 = vadd.f32 %v158, %v519
    %534 = vst [vmem:[#allocation2] sm:$0xff] %v522
    %535 = vst [vmem:[#allocation2 + $0x8] sm:$0xff] %v523
    %536 = vst [vmem:[#allocation2 + $0x10] sm:$0xff] %v524
    %537 = vst [vmem:[#allocation2 + $0x18] sm:$0xff] %v525
    %538 = vst [vmem:[#allocation2 + $0x20] sm:$0xff] %v526
    %539 = vst [vmem:[#allocation2 + $0x28] sm:$0xff] %v527
    %540 = vst [vmem:[#allocation2 + $0x30] sm:$0xff] %v528
    %541 = vst [vmem:[#allocation2 + $0x38] sm:$0xff] %v529
    %542 = vst [vmem:[#allocation2 + $0x40] sm:$0xff] %v530
    %543 = vst [vmem:[#allocation2 + $0x48] sm:$0xff] %v531
    %544 = vst [vmem:[#allocation2 + $0x50] sm:$0xff] %v532
    %545 = vst [vmem:[#allocation2 + $0x58] sm:$0xff] %v533
    %v546 = vld [vmem:[#allocation2] sm:$0xff]
    %v547 = vld [vmem:[#allocation2 + $0x8] sm:$0xff]
    %v548 = vld [vmem:[#allocation2 + $0x10] sm:$0xff]
    %v549 = vld [vmem:[#allocation2 + $0x18] sm:$0xff]
    %v550 = vld [vmem:[#allocation2 + $0x20] sm:$0xff]
    %v551 = vld [vmem:[#allocation2 + $0x28] sm:$0xff]
    %v552 = vld [vmem:[#allocation2 + $0x30] sm:$0xff]
    %v553 = vld [vmem:[#allocation2 + $0x38] sm:$0xff]
    %v554 = vld [vmem:[#allocation2 + $0x40] sm:$0xff]
    %v555 = vld [vmem:[#allocation2 + $0x48] sm:$0xff]
    %v556 = vld [vmem:[#allocation2 + $0x50] sm:$0xff]
    %v557 = vld [vmem:[#allocation2 + $0x58] sm:$0xff]
    %v558 = vld [vmem:[#allocation3] sm:$0xfe]
    %v559 = vld [vmem:[#allocation3 + $0x8] sm:$0xff]
    %v560 = vld [vmem:[#allocation3 + $0x10] sm:$0xff]
    %v561 = vld [vmem:[#allocation3 + $0x18] sm:$0xff]
    %v562 = vld [vmem:[#allocation3 + $0x20] sm:$0xff]
    %v563 = vld [vmem:[#allocation3 + $0x28] sm:$0xff]
    %v564 = vld [vmem:[#allocation3 + $0x30] sm:$0x1]
    %s565 = scalar_lea.vmem [#allocation9], 128
    %v566 = vld [vmem:[%s565] sm:$0xf]
    %v567 = vld [vmem:[%s565 + $0x4] sm:$0xf]
    %v568 = vld [vmem:[%s565 + $0x8] sm:$0xf]
    %v569 = vld [vmem:[%s565 + $0xc] sm:$0xf]
    %v570 = vld [vmem:[%s565 + $0x10] sm:$0xf]
    %v571 = vld [vmem:[%s565 + $0x14] sm:$0xf]
    %v572 = vld [vmem:[%s565 + $0x18] sm:$0xf]
    %v573 = vld [vmem:[%s565 + $0x1c] sm:$0xf]
    %v574 = vld [vmem:[%s565 + $0x20] sm:$0xf]
    %v575 = vld [vmem:[%s565 + $0x24] sm:$0xf]
    %v576 = vld [vmem:[%s565 + $0x28] sm:$0xf]
    %v577 = vld [vmem:[%s565 + $0x2c] sm:$0xf]
    %v578 = vld [vmem:[%s565 + $0x30] sm:$0xf]
    %v579 = vld [vmem:[%s565 + $0x34] sm:$0xf]
    %v580 = vld [vmem:[%s565 + $0x38] sm:$0xf]
    %v581 = vld [vmem:[%s565 + $0x3c] sm:$0xf]
    %v582 = vld [vmem:[#allocation3 + $0x30] sm:$0x3]
    %s583 = scalar_lea.vmem [#allocation9], 192
    %v584 = vld [vmem:[%s583] sm:$0xf]
    %v585 = vld [vmem:[%s583 + $0x4] sm:$0xf]
    %v586 = vld [vmem:[%s583 + $0x8] sm:$0xf]
    %v587 = vld [vmem:[%s583 + $0xc] sm:$0xf]
    %v588 = vld [vmem:[%s583 + $0x10] sm:$0xf]
    %v589 = vld [vmem:[%s583 + $0x14] sm:$0xf]
    %v590 = vld [vmem:[%s583 + $0x18] sm:$0xf]
    %v591 = vld [vmem:[%s583 + $0x1c] sm:$0xf]
    %v592 = vld [vmem:[%s583 + $0x20] sm:$0xf]
    %v593 = vld [vmem:[%s583 + $0x24] sm:$0xf]
    %v594 = vld [vmem:[%s583 + $0x28] sm:$0xf]
    %v595 = vld [vmem:[%s583 + $0x2c] sm:$0xf]
    %v596 = vld [vmem:[%s583 + $0x30] sm:$0xf]
    %v597 = vld [vmem:[%s583 + $0x34] sm:$0xf]
    %v598 = vld [vmem:[%s583 + $0x38] sm:$0xf]
    %v599 = vld [vmem:[%s583 + $0x3c] sm:$0xf]
    %vm600 = vsmask.f32 6400
    %v602 = vshrl.u32 %v558, 16
    %v604 = vrot.slane %v602, 1
    %v605 = vshll.u32 %v558, 16
    %v607 = vrot.slane %v605, 2
    %v608 = vor.u32 %v604, %v607
    %v610 = vshrl.u32 %v559, 16
    %v612 = vrot.slane %v610, 1
    %v613 = vshll.u32 %v559, 16
    %v615 = vrot.slane %v613, 2
    %v616 = vor.u32 %v612, %v615
    %v617 = vsel %vm600, %v608, %v616
    %v619 = vshrl.u32 %v560, 16
    %v621 = vrot.slane %v619, 1
    %v622 = vshll.u32 %v560, 16
    %v624 = vrot.slane %v622, 2
    %v625 = vor.u32 %v621, %v624
    %v626 = vsel %vm600, %v616, %v625
    %v628 = vshrl.u32 %v561, 16
    %v630 = vrot.slane %v628, 1
    %v631 = vshll.u32 %v561, 16
    %v633 = vrot.slane %v631, 2
    %v634 = vor.u32 %v630, %v633
    %v635 = vsel %vm600, %v625, %v634
    %v637 = vshrl.u32 %v562, 16
    %v639 = vrot.slane %v637, 1
    %v640 = vshll.u32 %v562, 16
    %v642 = vrot.slane %v640, 2
    %v643 = vor.u32 %v639, %v642
    %v644 = vsel %vm600, %v634, %v643
    %v646 = vshrl.u32 %v563, 16
    %v648 = vrot.slane %v646, 1
    %v649 = vshll.u32 %v563, 16
    %v651 = vrot.slane %v649, 2
    %v652 = vor.u32 %v648, %v651
    %v653 = vsel %vm600, %v643, %v652
    %v655 = vshrl.u32 %v582, 16
    %v657 = vrot.slane %v655, 1
    %v658 = vshll.u32 %v582, 16
    %v660 = vrot.slane %v658, 2
    %v661 = vor.u32 %v657, %v660
    %v662 = vsel %vm600, %v652, %v661
    %v685 = vunpack.c.l.b16 %v584
    %v686 = vunpack.c.l.b16 %v585
    %v687 = vunpack.c.l.b16 %v586
    %v688 = vunpack.c.l.b16 %v587
    %v689 = vunpack.c.l.b16 %v588
    %v690 = vunpack.c.l.b16 %v589
    %v691 = vunpack.c.l.b16 %v590
    %v692 = vunpack.c.l.b16 %v591
    %v693 = vunpack.c.l.b16 %v592
    %v694 = vunpack.c.l.b16 %v593
    %v695 = vunpack.c.l.b16 %v594
    %v696 = vunpack.c.l.b16 %v595
    %v697 = vunpack.c.l.b16 %v596
    %v698 = vunpack.c.l.b16 %v597
    %v699 = vunpack.c.l.b16 %v598
    %v700 = vunpack.c.l.b16 %v599
    %v701 = vpack.c.b16 %v686, %v685
    %v702 = vpack.c.b16 %v688, %v687
    %v703 = vpack.c.b16 %v690, %v689
    %v704 = vpack.c.b16 %v692, %v691
    %v705 = vpack.c.b16 %v694, %v693
    %v706 = vpack.c.b16 %v696, %v695
    %v707 = vpack.c.b16 %v698, %v697
    %v708 = vpack.c.b16 %v700, %v699
    %717 = vmatprep.subr.bf16.mxu0 0
    %718 = vmatpush1.bf16.msra.mxu0 %v701
    %719 = vmatprep.subr.bf16.mxu0 0
    %720 = vmatpush1.bf16.msra.mxu0 %v702
    %721 = vmatprep.subr.bf16.mxu0 0
    %722 = vmatpush1.bf16.msra.mxu0 %v703
    %723 = vmatprep.subr.bf16.mxu0 0
    %724 = vmatpush1.bf16.msra.mxu0 %v704
    %725 = vmatprep.subr.bf16.mxu0 0
    %726 = vmatpush1.bf16.msra.mxu0 %v705
    %727 = vmatprep.subr.bf16.mxu0 0
    %728 = vmatpush1.bf16.msra.mxu0 %v706
    %729 = vmatprep.subr.bf16.mxu0 0
    %730 = vmatpush1.bf16.msra.mxu0 %v707
    %731 = vmatprep.subr.bf16.mxu0 0
    %732 = vmatpush1.bf16.msra.mxu0 %v708
    %733 = vmatprep.subr.bf16.mxu0 0
    %734 = vmatpush1.bf16.msra.mxu0 0
    %735 = vmatprep.subr.bf16.mxu0 0
    %736 = vmatpush1.bf16.msra.mxu0 0
    %737 = vmatprep.subr.bf16.mxu0 0
    %738 = vmatpush1.bf16.msra.mxu0 0
    %739 = vmatprep.subr.bf16.mxu0 0
    %740 = vmatpush1.bf16.msra.mxu0 0
    %741 = vmatprep.subr.bf16.mxu0 0
    %742 = vmatpush1.bf16.msra.mxu0 0
    %743 = vmatprep.subr.bf16.mxu0 0
    %744 = vmatpush1.bf16.msra.mxu0 0
    %745 = vmatprep.subr.bf16.mxu0 0
    %746 = vmatpush1.bf16.msra.mxu0 0
    %747 = vmatprep.subr.bf16.mxu0 0
    %748 = vmatpush1.bf16.msra.mxu0 0
    %749 = vmatprep.mubr.bf16.mxu0 0
    %750 = vmatmul.mubr.bf16.gmra.mrb[0].mxu0 %v617
    %v751 = vpop.f32.mrb[0].mxu0
    %v752 = vadd.f32 0.0, %v751
    %v753 = vpop.f32.mrb[0].mxu0
    %v754 = vpop.f32.mrb[0].mxu0
    %v755 = vadd.f32 0.0, %v754
    %v756 = vpop.f32.mrb[0].mxu0
    %757 = vmatprep.mubr.bf16.mxu0 0
    %758 = vmatmul.mubr.bf16.gmra.mrb[0].mxu0 %v626
    %v759 = vpop.f32.mrb[0].mxu0
    %v760 = vadd.f32 0.0, %v759
    %v761 = vpop.f32.mrb[0].mxu0
    %v762 = vpop.f32.mrb[0].mxu0
    %v763 = vadd.f32 0.0, %v762
    %v764 = vpop.f32.mrb[0].mxu0
    %765 = vmatprep.mubr.bf16.mxu0 0
    %766 = vmatmul.mubr.bf16.gmra.mrb[0].mxu0 %v635
    %v767 = vpop.f32.mrb[0].mxu0
    %v768 = vadd.f32 0.0, %v767
    %v769 = vpop.f32.mrb[0].mxu0
    %v770 = vpop.f32.mrb[0].mxu0
    %v771 = vadd.f32 0.0, %v770
    %v772 = vpop.f32.mrb[0].mxu0
    %773 = vmatprep.mubr.bf16.mxu0 0
    %774 = vmatmul.mubr.bf16.gmra.mrb[0].mxu0 %v644
    %v775 = vpop.f32.mrb[0].mxu0
    %v776 = vadd.f32 0.0, %v775
    %v777 = vpop.f32.mrb[0].mxu0
    %v778 = vpop.f32.mrb[0].mxu0
    %v779 = vadd.f32 0.0, %v778
    %v780 = vpop.f32.mrb[0].mxu0
    %781 = vmatprep.mubr.bf16.mxu0 0
    %782 = vmatmul.mubr.bf16.gmra.mrb[0].mxu0 %v653
    %v783 = vpop.f32.mrb[0].mxu0
    %v784 = vadd.f32 0.0, %v783
    %v785 = vpop.f32.mrb[0].mxu0
    %v786 = vpop.f32.mrb[0].mxu0
    %v787 = vadd.f32 0.0, %v786
    %v788 = vpop.f32.mrb[0].mxu0
    %789 = vmatprep.mubr.bf16.mxu0 0
    %790 = vmatmul.mubr.bf16.gmra.mrb[0].mxu0 %v662
    %v791 = vpop.f32.mrb[0].mxu0
    %v792 = vadd.f32 0.0, %v791
    %v793 = vpop.f32.mrb[0].mxu0
    %v794 = vpop.f32.mrb[0].mxu0
    %v795 = vadd.f32 0.0, %v794
    %v796 = vpop.f32.mrb[0].mxu0
    %797 = vdwg.mxu0
    %vm805 = vcmask 1046528
    %v806 = vrot.slane %v558, 1
    %v807 = vrot.slane %v559, 1
    %v808 = vsel %vm805, %v806, %v807
    %v809 = vrot.slane %v560, 1
    %v810 = vsel %vm805, %v807, %v809
    %v811 = vrot.slane %v561, 1
    %v812 = vsel %vm805, %v809, %v811
    %v813 = vrot.slane %v562, 1
    %v814 = vsel %vm805, %v811, %v813
    %v815 = vrot.slane %v563, 1
    %v816 = vsel %vm805, %v813, %v815
    %v817 = vrot.slane %v564, 1
    %v818 = vsel %vm805, %v815, %v817
    %v841 = vunpack.c.l.b16 %v566
    %v842 = vunpack.c.l.b16 %v567
    %v843 = vunpack.c.l.b16 %v568
    %v844 = vunpack.c.l.b16 %v569
    %v845 = vunpack.c.l.b16 %v570
    %v846 = vunpack.c.l.b16 %v571
    %v847 = vunpack.c.l.b16 %v572
    %v848 = vunpack.c.l.b16 %v573
    %v849 = vunpack.c.l.b16 %v574
    %v850 = vunpack.c.l.b16 %v575
    %v851 = vunpack.c.l.b16 %v576
    %v852 = vunpack.c.l.b16 %v577
    %v853 = vunpack.c.l.b16 %v578
    %v854 = vunpack.c.l.b16 %v579
    %v855 = vunpack.c.l.b16 %v580
    %v856 = vunpack.c.l.b16 %v581
    %v857 = vpack.c.b16 %v842, %v841
    %v858 = vpack.c.b16 %v844, %v843
    %v859 = vpack.c.b16 %v846, %v845
    %v860 = vpack.c.b16 %v848, %v847
    %v861 = vpack.c.b16 %v850, %v849
    %v862 = vpack.c.b16 %v852, %v851
    %v863 = vpack.c.b16 %v854, %v853
    %v864 = vpack.c.b16 %v856, %v855
    %873 = vmatprep.subr.bf16.mxu0 0
    %874 = vmatpush1.bf16.msra.mxu0 %v857
    %875 = vmatprep.subr.bf16.mxu0 0
    %876 = vmatpush1.bf16.msra.mxu0 %v858
    %877 = vmatprep.subr.bf16.mxu0 0
    %878 = vmatpush1.bf16.msra.mxu0 %v859
    %879 = vmatprep.subr.bf16.mxu0 0
    %880 = vmatpush1.bf16.msra.mxu0 %v860
    %881 = vmatprep.subr.bf16.mxu0 0
    %882 = vmatpush1.bf16.msra.mxu0 %v861
    %883 = vmatprep.subr.bf16.mxu0 0
    %884 = vmatpush1.bf16.msra.mxu0 %v862
    %885 = vmatprep.subr.bf16.mxu0 0
    %886 = vmatpush1.bf16.msra.mxu0 %v863
    %887 = vmatprep.subr.bf16.mxu0 0
    %888 = vmatpush1.bf16.msra.mxu0 %v864
    %889 = vmatprep.subr.bf16.mxu0 0
    %890 = vmatpush1.bf16.msra.mxu0 0
    %891 = vmatprep.subr.bf16.mxu0 0
    %892 = vmatpush1.bf16.msra.mxu0 0
    %893 = vmatprep.subr.bf16.mxu0 0
    %894 = vmatpush1.bf16.msra.mxu0 0
    %895 = vmatprep.subr.bf16.mxu0 0
    %896 = vmatpush1.bf16.msra.mxu0 0
    %897 = vmatprep.subr.bf16.mxu0 0
    %898 = vmatpush1.bf16.msra.mxu0 0
    %899 = vmatprep.subr.bf16.mxu0 0
    %900 = vmatpush1.bf16.msra.mxu0 0
    %901 = vmatprep.subr.bf16.mxu0 0
    %902 = vmatpush1.bf16.msra.mxu0 0
    %903 = vmatprep.subr.bf16.mxu0 0
    %904 = vmatpush1.bf16.msra.mxu0 0
    %905 = vmatprep.mubr.bf16.mxu0 0
    %906 = vmatmul.mubr.bf16.gmra.mrb[0].mxu0 %v808
    %v907 = vpop.f32.mrb[0].mxu0
    %v908 = vadd.f32 %v752, %v907
    %v909 = vpop.f32.mrb[0].mxu0
    %v910 = vpop.f32.mrb[0].mxu0
    %v911 = vadd.f32 %v755, %v910
    %v912 = vpop.f32.mrb[0].mxu0
    %913 = vmatprep.mubr.bf16.mxu0 0
    %914 = vmatmul.mubr.bf16.gmra.mrb[0].mxu0 %v810
    %v915 = vpop.f32.mrb[0].mxu0
    %v916 = vadd.f32 %v760, %v915
    %v917 = vpop.f32.mrb[0].mxu0
    %v918 = vpop.f32.mrb[0].mxu0
    %v919 = vadd.f32 %v763, %v918
    %v920 = vpop.f32.mrb[0].mxu0
    %921 = vmatprep.mubr.bf16.mxu0 0
    %922 = vmatmul.mubr.bf16.gmra.mrb[0].mxu0 %v812
    %v923 = vpop.f32.mrb[0].mxu0
    %v924 = vadd.f32 %v768, %v923
    %v925 = vpop.f32.mrb[0].mxu0
    %v926 = vpop.f32.mrb[0].mxu0
    %v927 = vadd.f32 %v771, %v926
    %v928 = vpop.f32.mrb[0].mxu0
    %929 = vmatprep.mubr.bf16.mxu0 0
    %930 = vmatmul.mubr.bf16.gmra.mrb[0].mxu0 %v814
    %v931 = vpop.f32.mrb[0].mxu0
    %v932 = vadd.f32 %v776, %v931
    %v933 = vpop.f32.mrb[0].mxu0
    %v934 = vpop.f32.mrb[0].mxu0
    %v935 = vadd.f32 %v779, %v934
    %v936 = vpop.f32.mrb[0].mxu0
    %937 = vmatprep.mubr.bf16.mxu0 0
    %938 = vmatmul.mubr.bf16.gmra.mrb[0].mxu0 %v816
    %v939 = vpop.f32.mrb[0].mxu0
    %v940 = vadd.f32 %v784, %v939
    %v941 = vpop.f32.mrb[0].mxu0
    %v942 = vpop.f32.mrb[0].mxu0
    %v943 = vadd.f32 %v787, %v942
    %v944 = vpop.f32.mrb[0].mxu0
    %945 = vmatprep.mubr.bf16.mxu0 0
    %946 = vmatmul.mubr.bf16.gmra.mrb[0].mxu0 %v818
    %v947 = vpop.f32.mrb[0].mxu0
    %v948 = vadd.f32 %v792, %v947
    %v949 = vpop.f32.mrb[0].mxu0
    %v950 = vpop.f32.mrb[0].mxu0
    %v951 = vadd.f32 %v795, %v950
    %v952 = vpop.f32.mrb[0].mxu0
    %953 = vdwg.mxu0
    %v954 = vadd.f32 %v546, %v908
    %v955 = vadd.f32 %v547, %v911
    %v956 = vadd.f32 %v548, %v916
    %v957 = vadd.f32 %v549, %v919
    %v958 = vadd.f32 %v550, %v924
    %v959 = vadd.f32 %v551, %v927
    %v960 = vadd.f32 %v552, %v932
    %v961 = vadd.f32 %v553, %v935
    %v962 = vadd.f32 %v554, %v940
    %v963 = vadd.f32 %v555, %v943
    %v964 = vadd.f32 %v556, %v948
    %v965 = vadd.f32 %v557, %v951
    %966 = vst [vmem:[#allocation2] sm:$0xff] %v954
    %967 = vst [vmem:[#allocation2 + $0x8] sm:$0xff] %v955
    %968 = vst [vmem:[#allocation2 + $0x10] sm:$0xff] %v956
    %969 = vst [vmem:[#allocation2 + $0x18] sm:$0xff] %v957
    %970 = vst [vmem:[#allocation2 + $0x20] sm:$0xff] %v958
    %971 = vst [vmem:[#allocation2 + $0x28] sm:$0xff] %v959
    %972 = vst [vmem:[#allocation2 + $0x30] sm:$0xff] %v960
    %973 = vst [vmem:[#allocation2 + $0x38] sm:$0xff] %v961
    %974 = vst [vmem:[#allocation2 + $0x40] sm:$0xff] %v962
    %975 = vst [vmem:[#allocation2 + $0x48] sm:$0xff] %v963
    %976 = vst [vmem:[#allocation2 + $0x50] sm:$0xff] %v964
    %977 = vst [vmem:[#allocation2 + $0x58] sm:$0xff] %v965
    %v978 = vld [vmem:[#allocation2] sm:$0xff]
    %v979 = vld [vmem:[#allocation2 + $0x8] sm:$0xff]
    %v980 = vld [vmem:[#allocation2 + $0x10] sm:$0xff]
    %v981 = vld [vmem:[#allocation2 + $0x18] sm:$0xff]
    %v982 = vld [vmem:[#allocation2 + $0x20] sm:$0xff]
    %v983 = vld [vmem:[#allocation2 + $0x28] sm:$0xff]
    %v984 = vld [vmem:[#allocation2 + $0x30] sm:$0xff]
    %v985 = vld [vmem:[#allocation2 + $0x38] sm:$0xff]
    %v986 = vld [vmem:[#allocation2 + $0x40] sm:$0xff]
    %v987 = vld [vmem:[#allocation2 + $0x48] sm:$0xff]
    %v988 = vld [vmem:[#allocation2 + $0x50] sm:$0xff]
    %v989 = vld [vmem:[#allocation2 + $0x58] sm:$0xff]
    %v990 = vld [vmem:[#allocation3] sm:$0xfc]
    %v991 = vld [vmem:[#allocation3 + $0x8] sm:$0xff]
    %v992 = vld [vmem:[#allocation3 + $0x10] sm:$0xff]
    %v993 = vld [vmem:[#allocation3 + $0x18] sm:$0xff]
    %v994 = vld [vmem:[#allocation3 + $0x20] sm:$0xff]
    %v995 = vld [vmem:[#allocation3 + $0x28] sm:$0xff]
    %v996 = vld [vmem:[#allocation3 + $0x30] sm:$0x3]
    %s997 = scalar_lea.vmem [#allocation9], 256
    %v998 = vld [vmem:[%s997] sm:$0xf]
    %v999 = vld [vmem:[%s997 + $0x4] sm:$0xf]
    %v1000 = vld [vmem:[%s997 + $0x8] sm:$0xf]
    %v1001 = vld [vmem:[%s997 + $0xc] sm:$0xf]
    %v1002 = vld [vmem:[%s997 + $0x10] sm:$0xf]
    %v1003 = vld [vmem:[%s997 + $0x14] sm:$0xf]
    %v1004 = vld [vmem:[%s997 + $0x18] sm:$0xf]
    %v1005 = vld [vmem:[%s997 + $0x1c] sm:$0xf]
    %v1006 = vld [vmem:[%s997 + $0x20] sm:$0xf]
    %v1007 = vld [vmem:[%s997 + $0x24] sm:$0xf]
    %v1008 = vld [vmem:[%s997 + $0x28] sm:$0xf]
    %v1009 = vld [vmem:[%s997 + $0x2c] sm:$0xf]
    %v1010 = vld [vmem:[%s997 + $0x30] sm:$0xf]
    %v1011 = vld [vmem:[%s997 + $0x34] sm:$0xf]
    %v1012 = vld [vmem:[%s997 + $0x38] sm:$0xf]
    %v1013 = vld [vmem:[%s997 + $0x3c] sm:$0xf]
    %v1014 = vld [vmem:[#allocation3 + $0x30] sm:$0x7]
    %s1015 = scalar_lea.vmem [#allocation9], 320
    %v1016 = vld [vmem:[%s1015] sm:$0xf]
    %v1017 = vld [vmem:[%s1015 + $0x4] sm:$0xf]
    %v1018 = vld [vmem:[%s1015 + $0x8] sm:$0xf]
    %v1019 = vld [vmem:[%s1015 + $0xc] sm:$0xf]
    %v1020 = vld [vmem:[%s1015 + $0x10] sm:$0xf]
    %v1021 = vld [vmem:[%s1015 + $0x14] sm:$0xf]
    %v1022 = vld [vmem:[%s1015 + $0x18] sm:$0xf]
    %v1023 = vld [vmem:[%s1015 + $0x1c] sm:$0xf]
    %v1024 = vld [vmem:[%s1015 + $0x20] sm:$0xf]
    %v1025 = vld [vmem:[%s1015 + $0x24] sm:$0xf]
    %v1026 = vld [vmem:[%s1015 + $0x28] sm:$0xf]
    %v1027 = vld [vmem:[%s1015 + $0x2c] sm:$0xf]
    %v1028 = vld [vmem:[%s1015 + $0x30] sm:$0xf]
    %v1029 = vld [vmem:[%s1015 + $0x34] sm:$0xf]
    %v1030 = vld [vmem:[%s1015 + $0x38] sm:$0xf]
    %v1031 = vld [vmem:[%s1015 + $0x3c] sm:$0xf]
    %vm1032 = vsmask.f32 5376
    %v1034 = vshrl.u32 %v990, 16
    %v1036 = vrot.slane %v1034, 2
    %v1037 = vshll.u32 %v990, 16
    %v1039 = vrot.slane %v1037, 3
    %v1040 = vor.u32 %v1036, %v1039
    %v1042 = vshrl.u32 %v991, 16
    %v1044 = vrot.slane %v1042, 2
    %v1045 = vshll.u32 %v991, 16
    %v1047 = vrot.slane %v1045, 3
    %v1048 = vor.u32 %v1044, %v1047
    %v1049 = vsel %vm1032, %v1040, %v1048
    %v1051 = vshrl.u32 %v992, 16
    %v1053 = vrot.slane %v1051, 2
    %v1054 = vshll.u32 %v992, 16
    %v1056 = vrot.slane %v1054, 3
    %v1057 = vor.u32 %v1053, %v1056
    %v1058 = vsel %vm1032, %v1048, %v1057
    %v1060 = vshrl.u32 %v993, 16
    %v1062 = vrot.slane %v1060, 2
    %v1063 = vshll.u32 %v993, 16
    %v1065 = vrot.slane %v1063, 3
    %v1066 = vor.u32 %v1062, %v1065
    %v1067 = vsel %vm1032, %v1057, %v1066
    %v1069 = vshrl.u32 %v994, 16
    %v1071 = vrot.slane %v1069, 2
    %v1072 = vshll.u32 %v994, 16
    %v1074 = vrot.slane %v1072, 3
    %v1075 = vor.u32 %v1071, %v1074
    %v1076 = vsel %vm1032, %v1066, %v1075
    %v1078 = vshrl.u32 %v995, 16
    %v1080 = vrot.slane %v1078, 2
    %v1081 = vshll.u32 %v995, 16
    %v1083 = vrot.slane %v1081, 3
    %v1084 = vor.u32 %v1080, %v1083
    %v1085 = vsel %vm1032, %v1075, %v1084
    %v1087 = vshrl.u32 %v1014, 16
    %v1089 = vrot.slane %v1087, 2
    %v1090 = vshll.u32 %v1014, 16
    %v1092 = vrot.slane %v1090, 3
    %v1093 = vor.u32 %v1089, %v1092
    %v1094 = vsel %vm1032, %v1084, %v1093
    %v1117 = vunpack.c.l.b16 %v1016
    %v1118 = vunpack.c.l.b16 %v1017
    %v1119 = vunpack.c.l.b16 %v1018
    %v1120 = vunpack.c.l.b16 %v1019
    %v1121 = vunpack.c.l.b16 %v1020
    %v1122 = vunpack.c.l.b16 %v1021
    %v1123 = vunpack.c.l.b16 %v1022
    %v1124 = vunpack.c.l.b16 %v1023
    %v1125 = vunpack.c.l.b16 %v1024
    %v1126 = vunpack.c.l.b16 %v1025
    %v1127 = vunpack.c.l.b16 %v1026
    %v1128 = vunpack.c.l.b16 %v1027
    %v1129 = vunpack.c.l.b16 %v1028
    %v1130 = vunpack.c.l.b16 %v1029
    %v1131 = vunpack.c.l.b16 %v1030
    %v1132 = vunpack.c.l.b16 %v1031
    %v1133 = vpack.c.b16 %v1118, %v1117
    %v1134 = vpack.c.b16 %v1120, %v1119
    %v1135 = vpack.c.b16 %v1122, %v1121
    %v1136 = vpack.c.b16 %v1124, %v1123
    %v1137 = vpack.c.b16 %v1126, %v1125
    %v1138 = vpack.c.b16 %v1128, %v1127
    %v1139 = vpack.c.b16 %v1130, %v1129
    %v1140 = vpack.c.b16 %v1132, %v1131
    %1149 = vmatprep.subr.bf16.mxu0 0
    %1150 = vmatpush1.bf16.msra.mxu0 %v1133
    %1151 = vmatprep.subr.bf16.mxu0 0
    %1152 = vmatpush1.bf16.msra.mxu0 %v1134
    %1153 = vmatprep.subr.bf16.mxu0 0
    %1154 = vmatpush1.bf16.msra.mxu0 %v1135
    %1155 = vmatprep.subr.bf16.mxu0 0
    %1156 = vmatpush1.bf16.msra.mxu0 %v1136
    %1157 = vmatprep.subr.bf16.mxu0 0
    %1158 = vmatpush1.bf16.msra.mxu0 %v1137
    %1159 = vmatprep.subr.bf16.mxu0 0
    %1160 = vmatpush1.bf16.msra.mxu0 %v1138
    %1161 = vmatprep.subr.bf16.mxu0 0
    %1162 = vmatpush1.bf16.msra.mxu0 %v1139
    %1163 = vmatprep.subr.bf16.mxu0 0
    %1164 = vmatpush1.bf16.msra.mxu0 %v1140
    %1165 = vmatprep.subr.bf16.mxu0 0
    %1166 = vmatpush1.bf16.msra.mxu0 0
    %1167 = vmatprep.subr.bf16.mxu0 0
    %1168 = vmatpush1.bf16.msra.mxu0 0
    %1169 = vmatprep.subr.bf16.mxu0 0
    %1170 = vmatpush1.bf16.msra.mxu0 0
    %1171 = vmatprep.subr.bf16.mxu0 0
    %1172 = vmatpush1.bf16.msra.mxu0 0
    %1173 = vmatprep.subr.bf16.mxu0 0
    %1174 = vmatpush1.bf16.msra.mxu0 0
    %1175 = vmatprep.subr.bf16.mxu0 0
    %1176 = vmatpush1.bf16.msra.mxu0 0
    %1177 = vmatprep.subr.bf16.mxu0 0
    %1178 = vmatpush1.bf16.msra.mxu0 0
    %1179 = vmatprep.subr.bf16.mxu0 0
    %1180 = vmatpush1.bf16.msra.mxu0 0
    %1181 = vmatprep.mubr.bf16.mxu0 0
    %1182 = vmatmul.mubr.bf16.gmra.mrb[0].mxu0 %v1049
    %v1183 = vpop.f32.mrb[0].mxu0
    %v1184 = vadd.f32 0.0, %v1183
    %v1185 = vpop.f32.mrb[0].mxu0
    %v1186 = vpop.f32.mrb[0].mxu0
    %v1187 = vadd.f32 0.0, %v1186
    %v1188 = vpop.f32.mrb[0].mxu0
    %1189 = vmatprep.mubr.bf16.mxu0 0
    %1190 = vmatmul.mubr.bf16.gmra.mrb[0].mxu0 %v1058
    %v1191 = vpop.f32.mrb[0].mxu0
    %v1192 = vadd.f32 0.0, %v1191
    %v1193 = vpop.f32.mrb[0].mxu0
    %v1194 = vpop.f32.mrb[0].mxu0
    %v1195 = vadd.f32 0.0, %v1194
    %v1196 = vpop.f32.mrb[0].mxu0
    %1197 = vmatprep.mubr.bf16.mxu0 0
    %1198 = vmatmul.mubr.bf16.gmra.mrb[0].mxu0 %v1067
    %v1199 = vpop.f32.mrb[0].mxu0
    %v1200 = vadd.f32 0.0, %v1199
    %v1201 = vpop.f32.mrb[0].mxu0
    %v1202 = vpop.f32.mrb[0].mxu0
    %v1203 = vadd.f32 0.0, %v1202
    %v1204 = vpop.f32.mrb[0].mxu0
    %1205 = vmatprep.mubr.bf16.mxu0 0
    %1206 = vmatmul.mubr.bf16.gmra.mrb[0].mxu0 %v1076
    %v1207 = vpop.f32.mrb[0].mxu0
    %v1208 = vadd.f32 0.0, %v1207
    %v1209 = vpop.f32.mrb[0].mxu0
    %v1210 = vpop.f32.mrb[0].mxu0
    %v1211 = vadd.f32 0.0, %v1210
    %v1212 = vpop.f32.mrb[0].mxu0
    %1213 = vmatprep.mubr.bf16.mxu0 0
    %1214 = vmatmul.mubr.bf16.gmra.mrb[0].mxu0 %v1085
    %v1215 = vpop.f32.mrb[0].mxu0
    %v1216 = vadd.f32 0.0, %v1215
    %v1217 = vpop.f32.mrb[0].mxu0
    %v1218 = vpop.f32.mrb[0].mxu0
    %v1219 = vadd.f32 0.0, %v1218
    %v1220 = vpop.f32.mrb[0].mxu0
    %1221 = vmatprep.mubr.bf16.mxu0 0
    %1222 = vmatmul.mubr.bf16.gmra.mrb[0].mxu0 %v1094
    %v1223 = vpop.f32.mrb[0].mxu0
    %v1224 = vadd.f32 0.0, %v1223
    %v1225 = vpop.f32.mrb[0].mxu0
    %v1226 = vpop.f32.mrb[0].mxu0
    %v1227 = vadd.f32 0.0, %v1226
    %v1228 = vpop.f32.mrb[0].mxu0
    %1229 = vdwg.mxu0
    %vm1237 = vcmask 1045504
    %v1238 = vrot.slane %v990, 2
    %v1239 = vrot.slane %v991, 2
    %v1240 = vsel %vm1237, %v1238, %v1239
    %v1241 = vrot.slane %v992, 2
    %v1242 = vsel %vm1237, %v1239, %v1241
    %v1243 = vrot.slane %v993, 2
    %v1244 = vsel %vm1237, %v1241, %v1243
    %v1245 = vrot.slane %v994, 2
    %v1246 = vsel %vm1237, %v1243, %v1245
    %v1247 = vrot.slane %v995, 2
    %v1248 = vsel %vm1237, %v1245, %v1247
    %v1249 = vrot.slane %v996, 2
    %v1250 = vsel %vm1237, %v1247, %v1249
    %v1273 = vunpack.c.l.b16 %v998
    %v1274 = vunpack.c.l.b16 %v999
    %v1275 = vunpack.c.l.b16 %v1000
    %v1276 = vunpack.c.l.b16 %v1001
    %v1277 = vunpack.c.l.b16 %v1002
    %v1278 = vunpack.c.l.b16 %v1003
    %v1279 = vunpack.c.l.b16 %v1004
    %v1280 = vunpack.c.l.b16 %v1005
    %v1281 = vunpack.c.l.b16 %v1006
    %v1282 = vunpack.c.l.b16 %v1007
    %v1283 = vunpack.c.l.b16 %v1008
    %v1284 = vunpack.c.l.b16 %v1009
    %v1285 = vunpack.c.l.b16 %v1010
    %v1286 = vunpack.c.l.b16 %v1011
    %v1287 = vunpack.c.l.b16 %v1012
    %v1288 = vunpack.c.l.b16 %v1013
    %v1289 = vpack.c.b16 %v1274, %v1273
    %v1290 = vpack.c.b16 %v1276, %v1275
    %v1291 = vpack.c.b16 %v1278, %v1277
    %v1292 = vpack.c.b16 %v1280, %v1279
    %v1293 = vpack.c.b16 %v1282, %v1281
    %v1294 = vpack.c.b16 %v1284, %v1283
    %v1295 = vpack.c.b16 %v1286, %v1285
    %v1296 = vpack.c.b16 %v1288, %v1287
    %1305 = vmatprep.subr.bf16.mxu0 0
    %1306 = vmatpush1.bf16.msra.mxu0 %v1289
    %1307 = vmatprep.subr.bf16.mxu0 0
    %1308 = vmatpush1.bf16.msra.mxu0 %v1290
    %1309 = vmatprep.subr.bf16.mxu0 0
    %1310 = vmatpush1.bf16.msra.mxu0 %v1291
    %1311 = vmatprep.subr.bf16.mxu0 0
    %1312 = vmatpush1.bf16.msra.mxu0 %v1292
    %1313 = vmatprep.subr.bf16.mxu0 0
    %1314 = vmatpush1.bf16.msra.mxu0 %v1293
    %1315 = vmatprep.subr.bf16.mxu0 0
    %1316 = vmatpush1.bf16.msra.mxu0 %v1294
    %1317 = vmatprep.subr.bf16.mxu0 0
    %1318 = vmatpush1.bf16.msra.mxu0 %v1295
    %1319 = vmatprep.subr.bf16.mxu0 0
    %1320 = vmatpush1.bf16.msra.mxu0 %v1296
    %1321 = vmatprep.subr.bf16.mxu0 0
    %1322 = vmatpush1.bf16.msra.mxu0 0
    %1323 = vmatprep.subr.bf16.mxu0 0
    %1324 = vmatpush1.bf16.msra.mxu0 0
    %1325 = vmatprep.subr.bf16.mxu0 0
    %1326 = vmatpush1.bf16.msra.mxu0 0
    %1327 = vmatprep.subr.bf16.mxu0 0
    %1328 = vmatpush1.bf16.msra.mxu0 0
    %1329 = vmatprep.subr.bf16.mxu0 0
    %1330 = vmatpush1.bf16.msra.mxu0 0
    %1331 = vmatprep.subr.bf16.mxu0 0
    %1332 = vmatpush1.bf16.msra.mxu0 0
    %1333 = vmatprep.subr.bf16.mxu0 0
    %1334 = vmatpush1.bf16.msra.mxu0 0
    %1335 = vmatprep.subr.bf16.mxu0 0
    %1336 = vmatpush1.bf16.msra.mxu0 0
    %1337 = vmatprep.mubr.bf16.mxu0 0
    %1338 = vmatmul.mubr.bf16.gmra.mrb[0].mxu0 %v1240
    %v1339 = vpop.f32.mrb[0].mxu0
    %v1340 = vadd.f32 %v1184, %v1339
    %v1341 = vpop.f32.mrb[0].mxu0
    %v1342 = vpop.f32.mrb[0].mxu0
    %v1343 = vadd.f32 %v1187, %v1342
    %v1344 = vpop.f32.mrb[0].mxu0
    %1345 = vmatprep.mubr.bf16.mxu0 0
    %1346 = vmatmul.mubr.bf16.gmra.mrb[0].mxu0 %v1242
    %v1347 = vpop.f32.mrb[0].mxu0
    %v1348 = vadd.f32 %v1192, %v1347
    %v1349 = vpop.f32.mrb[0].mxu0
    %v1350 = vpop.f32.mrb[0].mxu0
    %v1351 = vadd.f32 %v1195, %v1350
    %v1352 = vpop.f32.mrb[0].mxu0
    %1353 = vmatprep.mubr.bf16.mxu0 0
    %1354 = vmatmul.mubr.bf16.gmra.mrb[0].mxu0 %v1244
    %v1355 = vpop.f32.mrb[0].mxu0
    %v1356 = vadd.f32 %v1200, %v1355
    %v1357 = vpop.f32.mrb[0].mxu0
    %v1358 = vpop.f32.mrb[0].mxu0
    %v1359 = vadd.f32 %v1203, %v1358
    %v1360 = vpop.f32.mrb[0].mxu0
    %1361 = vmatprep.mubr.bf16.mxu0 0
    %1362 = vmatmul.mubr.bf16.gmra.mrb[0].mxu0 %v1246
    %v1363 = vpop.f32.mrb[0].mxu0
    %v1364 = vadd.f32 %v1208, %v1363
    %v1365 = vpop.f32.mrb[0].mxu0
    %v1366 = vpop.f32.mrb[0].mxu0
    %v1367 = vadd.f32 %v1211, %v1366
    %v1368 = vpop.f32.mrb[0].mxu0
    %1369 = vmatprep.mubr.bf16.mxu0 0
    %1370 = vmatmul.mubr.bf16.gmra.mrb[0].mxu0 %v1248
    %v1371 = vpop.f32.mrb[0].mxu0
    %v1372 = vadd.f32 %v1216, %v1371
    %v1373 = vpop.f32.mrb[0].mxu0
    %v1374 = vpop.f32.mrb[0].mxu0
    %v1375 = vadd.f32 %v1219, %v1374
    %v1376 = vpop.f32.mrb[0].mxu0
    %1377 = vmatprep.mubr.bf16.mxu0 0
    %1378 = vmatmul.mubr.bf16.gmra.mrb[0].mxu0 %v1250
    %v1379 = vpop.f32.mrb[0].mxu0
    %v1380 = vadd.f32 %v1224, %v1379
    %v1381 = vpop.f32.mrb[0].mxu0
    %v1382 = vpop.f32.mrb[0].mxu0
    %v1383 = vadd.f32 %v1227, %v1382
    %v1384 = vpop.f32.mrb[0].mxu0
    %1385 = vdwg.mxu0
    %v1386 = vadd.f32 %v978, %v1340
    %v1387 = vadd.f32 %v979, %v1343
    %v1388 = vadd.f32 %v980, %v1348
    %v1389 = vadd.f32 %v981, %v1351
    %v1390 = vadd.f32 %v982, %v1356
    %v1391 = vadd.f32 %v983, %v1359
    %v1392 = vadd.f32 %v984, %v1364
    %v1393 = vadd.f32 %v985, %v1367
    %v1394 = vadd.f32 %v986, %v1372
    %v1395 = vadd.f32 %v987, %v1375
    %v1396 = vadd.f32 %v988, %v1380
    %v1397 = vadd.f32 %v989, %v1383
    %1398 = vst [vmem:[#allocation2] sm:$0xff] %v1386
    %1399 = vst [vmem:[#allocation2 + $0x8] sm:$0xff] %v1387
    %1400 = vst [vmem:[#allocation2 + $0x10] sm:$0xff] %v1388
    %1401 = vst [vmem:[#allocation2 + $0x18] sm:$0xff] %v1389
    %1402 = vst [vmem:[#allocation2 + $0x20] sm:$0xff] %v1390
    %1403 = vst [vmem:[#allocation2 + $0x28] sm:$0xff] %v1391
    %1404 = vst [vmem:[#allocation2 + $0x30] sm:$0xff] %v1392
    %1405 = vst [vmem:[#allocation2 + $0x38] sm:$0xff] %v1393
    %1406 = vst [vmem:[#allocation2 + $0x40] sm:$0xff] %v1394
    %1407 = vst [vmem:[#allocation2 + $0x48] sm:$0xff] %v1395
    %1408 = vst [vmem:[#allocation2 + $0x50] sm:$0xff] %v1396
    %1409 = vst [vmem:[#allocation2 + $0x58] sm:$0xff] %v1397
    %v1410 = vld [vmem:[#allocation2] sm:$0xff]
    %v1411 = vld [vmem:[#allocation2 + $0x8] sm:$0xff]
    %v1412 = vld [vmem:[#allocation2 + $0x10] sm:$0xff]
    %v1413 = vld [vmem:[#allocation2 + $0x18] sm:$0xff]
    %v1414 = vld [vmem:[#allocation2 + $0x20] sm:$0xff]
    %v1415 = vld [vmem:[#allocation2 + $0x28] sm:$0xff]
    %v1416 = vld [vmem:[#allocation2 + $0x30] sm:$0xff]
    %v1417 = vld [vmem:[#allocation2 + $0x38] sm:$0xff]
    %v1418 = vld [vmem:[#allocation2 + $0x40] sm:$0xff]
    %v1419 = vld [vmem:[#allocation2 + $0x48] sm:$0xff]
    %v1420 = vld [vmem:[#allocation2 + $0x50] sm:$0xff]
    %v1421 = vld [vmem:[#allocation2 + $0x58] sm:$0xff]
    %v1422 = vld [vmem:[#allocation3] sm:$0xf8]
    %v1423 = vld [vmem:[#allocation3 + $0x8] sm:$0xff]
    %v1424 = vld [vmem:[#allocation3 + $0x10] sm:$0xff]
    %v1425 = vld [vmem:[#allocation3 + $0x18] sm:$0xff]
    %v1426 = vld [vmem:[#allocation3 + $0x20] sm:$0xff]
    %v1427 = vld [vmem:[#allocation3 + $0x28] sm:$0xff]
    %v1428 = vld [vmem:[#allocation3 + $0x30] sm:$0x7]
    %s1429 = scalar_lea.vmem [#allocation9], 384
    %v1430 = vld [vmem:[%s1429] sm:$0xf]
    %v1431 = vld [vmem:[%s1429 + $0x4] sm:$0xf]
    %v1432 = vld [vmem:[%s1429 + $0x8] sm:$0xf]
    %v1433 = vld [vmem:[%s1429 + $0xc] sm:$0xf]
    %v1434 = vld [vmem:[%s1429 + $0x10] sm:$0xf]
    %v1435 = vld [vmem:[%s1429 + $0x14] sm:$0xf]
    %v1436 = vld [vmem:[%s1429 + $0x18] sm:$0xf]
    %v1437 = vld [vmem:[%s1429 + $0x1c] sm:$0xf]
    %v1438 = vld [vmem:[%s1429 + $0x20] sm:$0xf]
    %v1439 = vld [vmem:[%s1429 + $0x24] sm:$0xf]
    %v1440 = vld [vmem:[%s1429 + $0x28] sm:$0xf]
    %v1441 = vld [vmem:[%s1429 + $0x2c] sm:$0xf]
    %v1442 = vld [vmem:[%s1429 + $0x30] sm:$0xf]
    %v1443 = vld [vmem:[%s1429 + $0x34] sm:$0xf]
    %v1444 = vld [vmem:[%s1429 + $0x38] sm:$0xf]
    %v1445 = vld [vmem:[%s1429 + $0x3c] sm:$0xf]
    %v1446 = vld [vmem:[#allocation3 + $0x30] sm:$0xf]
    %s1447 = scalar_lea.vmem [#allocation9], 448
    %v1448 = vld [vmem:[%s1447] sm:$0xf]
    %v1449 = vld [vmem:[%s1447 + $0x4] sm:$0xf]
    %v1450 = vld [vmem:[%s1447 + $0x8] sm:$0xf]
    %v1451 = vld [vmem:[%s1447 + $0xc] sm:$0xf]
    %v1452 = vld [vmem:[%s1447 + $0x10] sm:$0xf]
    %v1453 = vld [vmem:[%s1447 + $0x14] sm:$0xf]
    %v1454 = vld [vmem:[%s1447 + $0x18] sm:$0xf]
    %v1455 = vld [vmem:[%s1447 + $0x1c] sm:$0xf]
    %v1456 = vld [vmem:[%s1447 + $0x20] sm:$0xf]
    %v1457 = vld [vmem:[%s1447 + $0x24] sm:$0xf]
    %v1458 = vld [vmem:[%s1447 + $0x28] sm:$0xf]
    %v1459 = vld [vmem:[%s1447 + $0x2c] sm:$0xf]
    %v1460 = vld [vmem:[%s1447 + $0x30] sm:$0xf]
    %v1461 = vld [vmem:[%s1447 + $0x34] sm:$0xf]
    %v1462 = vld [vmem:[%s1447 + $0x38] sm:$0xf]
    %v1463 = vld [vmem:[%s1447 + $0x3c] sm:$0xf]
    %vm1464 = vsmask.f32 4352
    %v1466 = vshrl.u32 %v1422, 16
    %v1468 = vrot.slane %v1466, 3
    %v1469 = vshll.u32 %v1422, 16
    %v1471 = vrot.slane %v1469, 4
    %v1472 = vor.u32 %v1468, %v1471
    %v1474 = vshrl.u32 %v1423, 16
    %v1476 = vrot.slane %v1474, 3
    %v1477 = vshll.u32 %v1423, 16
    %v1479 = vrot.slane %v1477, 4
    %v1480 = vor.u32 %v1476, %v1479
    %v1481 = vsel %vm1464, %v1472, %v1480
    %v1483 = vshrl.u32 %v1424, 16
    %v1485 = vrot.slane %v1483, 3
    %v1486 = vshll.u32 %v1424, 16
    %v1488 = vrot.slane %v1486, 4
    %v1489 = vor.u32 %v1485, %v1488
    %v1490 = vsel %vm1464, %v1480, %v1489
    %v1492 = vshrl.u32 %v1425, 16
    %v1494 = vrot.slane %v1492, 3
    %v1495 = vshll.u32 %v1425, 16
    %v1497 = vrot.slane %v1495, 4
    %v1498 = vor.u32 %v1494, %v1497
    %v1499 = vsel %vm1464, %v1489, %v1498
    %v1501 = vshrl.u32 %v1426, 16
    %v1503 = vrot.slane %v1501, 3
    %v1504 = vshll.u32 %v1426, 16
    %v1506 = vrot.slane %v1504, 4
    %v1507 = vor.u32 %v1503, %v1506
    %v1508 = vsel %vm1464, %v1498, %v1507
    %v1510 = vshrl.u32 %v1427, 16
    %v1512 = vrot.slane %v1510, 3
    %v1513 = vshll.u32 %v1427, 16
    %v1515 = vrot.slane %v1513, 4
    %v1516 = vor.u32 %v1512, %v1515
    %v1517 = vsel %vm1464, %v1507, %v1516
    %v1519 = vshrl.u32 %v1446, 16
    %v1521 = vrot.slane %v1519, 3
    %v1522 = vshll.u32 %v1446, 16
    %v1524 = vrot.slane %v1522, 4
    %v1525 = vor.u32 %v1521, %v1524
    %v1526 = vsel %vm1464, %v1516, %v1525
    %v1549 = vunpack.c.l.b16 %v1448
    %v1550 = vunpack.c.l.b16 %v1449
    %v1551 = vunpack.c.l.b16 %v1450
    %v1552 = vunpack.c.l.b16 %v1451
    %v1553 = vunpack.c.l.b16 %v1452
    %v1554 = vunpack.c.l.b16 %v1453
    %v1555 = vunpack.c.l.b16 %v1454
    %v1556 = vunpack.c.l.b16 %v1455
    %v1557 = vunpack.c.l.b16 %v1456
    %v1558 = vunpack.c.l.b16 %v1457
    %v1559 = vunpack.c.l.b16 %v1458
    %v1560 = vunpack.c.l.b16 %v1459
    %v1561 = vunpack.c.l.b16 %v1460
    %v1562 = vunpack.c.l.b16 %v1461
    %v1563 = vunpack.c.l.b16 %v1462
    %v1564 = vunpack.c.l.b16 %v1463
    %v1565 = vpack.c.b16 %v1550, %v1549
    %v1566 = vpack.c.b16 %v1552, %v1551
    %v1567 = vpack.c.b16 %v1554, %v1553
    %v1568 = vpack.c.b16 %v1556, %v1555
    %v1569 = vpack.c.b16 %v1558, %v1557
    %v1570 = vpack.c.b16 %v1560, %v1559
    %v1571 = vpack.c.b16 %v1562, %v1561
    %v1572 = vpack.c.b16 %v1564, %v1563
    %1581 = vmatprep.subr.bf16.mxu0 0
    %1582 = vmatpush1.bf16.msra.mxu0 %v1565
    %1583 = vmatprep.subr.bf16.mxu0 0
    %1584 = vmatpush1.bf16.msra.mxu0 %v1566
    %1585 = vmatprep.subr.bf16.mxu0 0
    %1586 = vmatpush1.bf16.msra.mxu0 %v1567
    %1587 = vmatprep.subr.bf16.mxu0 0
    %1588 = vmatpush1.bf16.msra.mxu0 %v1568
    %1589 = vmatprep.subr.bf16.mxu0 0
    %1590 = vmatpush1.bf16.msra.mxu0 %v1569
    %1591 = vmatprep.subr.bf16.mxu0 0
    %1592 = vmatpush1.bf16.msra.mxu0 %v1570
    %1593 = vmatprep.subr.bf16.mxu0 0
    %1594 = vmatpush1.bf16.msra.mxu0 %v1571
    %1595 = vmatprep.subr.bf16.mxu0 0
    %1596 = vmatpush1.bf16.msra.mxu0 %v1572
    %1597 = vmatprep.subr.bf16.mxu0 0
    %1598 = vmatpush1.bf16.msra.mxu0 0
    %1599 = vmatprep.subr.bf16.mxu0 0
    %1600 = vmatpush1.bf16.msra.mxu0 0
    %1601 = vmatprep.subr.bf16.mxu0 0
    %1602 = vmatpush1.bf16.msra.mxu0 0
    %1603 = vmatprep.subr.bf16.mxu0 0
    %1604 = vmatpush1.bf16.msra.mxu0 0
    %1605 = vmatprep.subr.bf16.mxu0 0
    %1606 = vmatpush1.bf16.msra.mxu0 0
    %1607 = vmatprep.subr.bf16.mxu0 0
    %1608 = vmatpush1.bf16.msra.mxu0 0
    %1609 = vmatprep.subr.bf16.mxu0 0
    %1610 = vmatpush1.bf16.msra.mxu0 0
    %1611 = vmatprep.subr.bf16.mxu0 0
    %1612 = vmatpush1.bf16.msra.mxu0 0
    %1613 = vmatprep.mubr.bf16.mxu0 0
    %1614 = vmatmul.mubr.bf16.gmra.mrb[0].mxu0 %v1481
    %v1615 = vpop.f32.mrb[0].mxu0
    %v1616 = vadd.f32 0.0, %v1615
    %v1617 = vpop.f32.mrb[0].mxu0
    %v1618 = vpop.f32.mrb[0].mxu0
    %v1619 = vadd.f32 0.0, %v1618
    %v1620 = vpop.f32.mrb[0].mxu0
    %1621 = vmatprep.mubr.bf16.mxu0 0
    %1622 = vmatmul.mubr.bf16.gmra.mrb[0].mxu0 %v1490
    %v1623 = vpop.f32.mrb[0].mxu0
    %v1624 = vadd.f32 0.0, %v1623
    %v1625 = vpop.f32.mrb[0].mxu0
    %v1626 = vpop.f32.mrb[0].mxu0
    %v1627 = vadd.f32 0.0, %v1626
    %v1628 = vpop.f32.mrb[0].mxu0
    %1629 = vmatprep.mubr.bf16.mxu0 0
    %1630 = vmatmul.mubr.bf16.gmra.mrb[0].mxu0 %v1499
    %v1631 = vpop.f32.mrb[0].mxu0
    %v1632 = vadd.f32 0.0, %v1631
    %v1633 = vpop.f32.mrb[0].mxu0
    %v1634 = vpop.f32.mrb[0].mxu0
    %v1635 = vadd.f32 0.0, %v1634
    %v1636 = vpop.f32.mrb[0].mxu0
    %1637 = vmatprep.mubr.bf16.mxu0 0
    %1638 = vmatmul.mubr.bf16.gmra.mrb[0].mxu0 %v1508
    %v1639 = vpop.f32.mrb[0].mxu0
    %v1640 = vadd.f32 0.0, %v1639
    %v1641 = vpop.f32.mrb[0].mxu0
    %v1642 = vpop.f32.mrb[0].mxu0
    %v1643 = vadd.f32 0.0, %v1642
    %v1644 = vpop.f32.mrb[0].mxu0
    %1645 = vmatprep.mubr.bf16.mxu0 0
    %1646 = vmatmul.mubr.bf16.gmra.mrb[0].mxu0 %v1517
    %v1647 = vpop.f32.mrb[0].mxu0
    %v1648 = vadd.f32 0.0, %v1647
    %v1649 = vpop.f32.mrb[0].mxu0
    %v1650 = vpop.f32.mrb[0].mxu0
    %v1651 = vadd.f32 0.0, %v1650
    %v1652 = vpop.f32.mrb[0].mxu0
    %1653 = vmatprep.mubr.bf16.mxu0 0
    %1654 = vmatmul.mubr.bf16.gmra.mrb[0].mxu0 %v1526
    %v1655 = vpop.f32.mrb[0].mxu0
    %v1656 = vadd.f32 0.0, %v1655
    %v1657 = vpop.f32.mrb[0].mxu0
    %v1658 = vpop.f32.mrb[0].mxu0
    %v1659 = vadd.f32 0.0, %v1658
    %v1660 = vpop.f32.mrb[0].mxu0
    %1661 = vdwg.mxu0
    %vm1669 = vcmask 1044480
    %v1670 = vrot.slane %v1422, 3
    %v1671 = vrot.slane %v1423, 3
    %v1672 = vsel %vm1669, %v1670, %v1671
    %v1673 = vrot.slane %v1424, 3
    %v1674 = vsel %vm1669, %v1671, %v1673
    %v1675 = vrot.slane %v1425, 3
    %v1676 = vsel %vm1669, %v1673, %v1675
    %v1677 = vrot.slane %v1426, 3
    %v1678 = vsel %vm1669, %v1675, %v1677
    %v1679 = vrot.slane %v1427, 3
    %v1680 = vsel %vm1669, %v1677, %v1679
    %v1681 = vrot.slane %v1428, 3
    %v1682 = vsel %vm1669, %v1679, %v1681
    %v1705 = vunpack.c.l.b16 %v1430
    %v1706 = vunpack.c.l.b16 %v1431
    %v1707 = vunpack.c.l.b16 %v1432
    %v1708 = vunpack.c.l.b16 %v1433
    %v1709 = vunpack.c.l.b16 %v1434
    %v1710 = vunpack.c.l.b16 %v1435
    %v1711 = vunpack.c.l.b16 %v1436
    %v1712 = vunpack.c.l.b16 %v1437
    %v1713 = vunpack.c.l.b16 %v1438
    %v1714 = vunpack.c.l.b16 %v1439
    %v1715 = vunpack.c.l.b16 %v1440
    %v1716 = vunpack.c.l.b16 %v1441
    %v1717 = vunpack.c.l.b16 %v1442
    %v1718 = vunpack.c.l.b16 %v1443
    %v1719 = vunpack.c.l.b16 %v1444
    %v1720 = vunpack.c.l.b16 %v1445
    %v1721 = vpack.c.b16 %v1706, %v1705
    %v1722 = vpack.c.b16 %v1708, %v1707
    %v1723 = vpack.c.b16 %v1710, %v1709
    %v1724 = vpack.c.b16 %v1712, %v1711
    %v1725 = vpack.c.b16 %v1714, %v1713
    %v1726 = vpack.c.b16 %v1716, %v1715
    %v1727 = vpack.c.b16 %v1718, %v1717
    %v1728 = vpack.c.b16 %v1720, %v1719
    %1737 = vmatprep.subr.bf16.mxu0 0
    %1738 = vmatpush1.bf16.msra.mxu0 %v1721
    %1739 = vmatprep.subr.bf16.mxu0 0
    %1740 = vmatpush1.bf16.msra.mxu0 %v1722
    %1741 = vmatprep.subr.bf16.mxu0 0
    %1742 = vmatpush1.bf16.msra.mxu0 %v1723
    %1743 = vmatprep.subr.bf16.mxu0 0
    %1744 = vmatpush1.bf16.msra.mxu0 %v1724
    %1745 = vmatprep.subr.bf16.mxu0 0
    %1746 = vmatpush1.bf16.msra.mxu0 %v1725
    %1747 = vmatprep.subr.bf16.mxu0 0
    %1748 = vmatpush1.bf16.msra.mxu0 %v1726
    %1749 = vmatprep.subr.bf16.mxu0 0
    %1750 = vmatpush1.bf16.msra.mxu0 %v1727
    %1751 = vmatprep.subr.bf16.mxu0 0
    %1752 = vmatpush1.bf16.msra.mxu0 %v1728
    %1753 = vmatprep.subr.bf16.mxu0 0
    %1754 = vmatpush1.bf16.msra.mxu0 0
    %1755 = vmatprep.subr.bf16.mxu0 0
    %1756 = vmatpush1.bf16.msra.mxu0 0
    %1757 = vmatprep.subr.bf16.mxu0 0
    %1758 = vmatpush1.bf16.msra.mxu0 0
    %1759 = vmatprep.subr.bf16.mxu0 0
    %1760 = vmatpush1.bf16.msra.mxu0 0
    %1761 = vmatprep.subr.bf16.mxu0 0
    %1762 = vmatpush1.bf16.msra.mxu0 0
    %1763 = vmatprep.subr.bf16.mxu0 0
    %1764 = vmatpush1.bf16.msra.mxu0 0
    %1765 = vmatprep.subr.bf16.mxu0 0
    %1766 = vmatpush1.bf16.msra.mxu0 0
    %1767 = vmatprep.subr.bf16.mxu0 0
    %1768 = vmatpush1.bf16.msra.mxu0 0
    %1769 = vmatprep.mubr.bf16.mxu0 0
    %1770 = vmatmul.mubr.bf16.gmra.mrb[0].mxu0 %v1672
    %v1771 = vpop.f32.mrb[0].mxu0
    %v1772 = vadd.f32 %v1616, %v1771
    %v1773 = vpop.f32.mrb[0].mxu0
    %v1774 = vpop.f32.mrb[0].mxu0
    %v1775 = vadd.f32 %v1619, %v1774
    %v1776 = vpop.f32.mrb[0].mxu0
    %1777 = vmatprep.mubr.bf16.mxu0 0
    %1778 = vmatmul.mubr.bf16.gmra.mrb[0].mxu0 %v1674
    %v1779 = vpop.f32.mrb[0].mxu0
    %v1780 = vadd.f32 %v1624, %v1779
    %v1781 = vpop.f32.mrb[0].mxu0
    %v1782 = vpop.f32.mrb[0].mxu0
    %v1783 = vadd.f32 %v1627, %v1782
    %v1784 = vpop.f32.mrb[0].mxu0
    %1785 = vmatprep.mubr.bf16.mxu0 0
    %1786 = vmatmul.mubr.bf16.gmra.mrb[0].mxu0 %v1676
    %v1787 = vpop.f32.mrb[0].mxu0
    %v1788 = vadd.f32 %v1632, %v1787
    %v1789 = vpop.f32.mrb[0].mxu0
    %v1790 = vpop.f32.mrb[0].mxu0
    %v1791 = vadd.f32 %v1635, %v1790
    %v1792 = vpop.f32.mrb[0].mxu0
    %1793 = vmatprep.mubr.bf16.mxu0 0
    %1794 = vmatmul.mubr.bf16.gmra.mrb[0].mxu0 %v1678
    %v1795 = vpop.f32.mrb[0].mxu0
    %v1796 = vadd.f32 %v1640, %v1795
    %v1797 = vpop.f32.mrb[0].mxu0
    %v1798 = vpop.f32.mrb[0].mxu0
    %v1799 = vadd.f32 %v1643, %v1798
    %v1800 = vpop.f32.mrb[0].mxu0
    %1801 = vmatprep.mubr.bf16.mxu0 0
    %1802 = vmatmul.mubr.bf16.gmra.mrb[0].mxu0 %v1680
    %v1803 = vpop.f32.mrb[0].mxu0
    %v1804 = vadd.f32 %v1648, %v1803
    %v1805 = vpop.f32.mrb[0].mxu0
    %v1806 = vpop.f32.mrb[0].mxu0
    %v1807 = vadd.f32 %v1651, %v1806
    %v1808 = vpop.f32.mrb[0].mxu0
    %1809 = vmatprep.mubr.bf16.mxu0 0
    %1810 = vmatmul.mubr.bf16.gmra.mrb[0].mxu0 %v1682
    %v1811 = vpop.f32.mrb[0].mxu0
    %v1812 = vadd.f32 %v1656, %v1811
    %v1813 = vpop.f32.mrb[0].mxu0
    %v1814 = vpop.f32.mrb[0].mxu0
    %v1815 = vadd.f32 %v1659, %v1814
    %v1816 = vpop.f32.mrb[0].mxu0
    %1817 = vdwg.mxu0
    %v1818 = vadd.f32 %v1410, %v1772
    %v1819 = vadd.f32 %v1411, %v1775
    %v1820 = vadd.f32 %v1412, %v1780
    %v1821 = vadd.f32 %v1413, %v1783
    %v1822 = vadd.f32 %v1414, %v1788
    %v1823 = vadd.f32 %v1415, %v1791
    %v1824 = vadd.f32 %v1416, %v1796
    %v1825 = vadd.f32 %v1417, %v1799
    %v1826 = vadd.f32 %v1418, %v1804
    %v1827 = vadd.f32 %v1419, %v1807
    %v1828 = vadd.f32 %v1420, %v1812
    %v1829 = vadd.f32 %v1421, %v1815
    %1830 = vst [vmem:[#allocation2] sm:$0xff] %v1818
    %1831 = vst [vmem:[#allocation2 + $0x8] sm:$0xff] %v1819
    %1832 = vst [vmem:[#allocation2 + $0x10] sm:$0xff] %v1820
    %1833 = vst [vmem:[#allocation2 + $0x18] sm:$0xff] %v1821
    %1834 = vst [vmem:[#allocation2 + $0x20] sm:$0xff] %v1822
    %1835 = vst [vmem:[#allocation2 + $0x28] sm:$0xff] %v1823
    %1836 = vst [vmem:[#allocation2 + $0x30] sm:$0xff] %v1824
    %1837 = vst [vmem:[#allocation2 + $0x38] sm:$0xff] %v1825
    %1838 = vst [vmem:[#allocation2 + $0x40] sm:$0xff] %v1826
    %1839 = vst [vmem:[#allocation2 + $0x48] sm:$0xff] %v1827
    %1840 = vst [vmem:[#allocation2 + $0x50] sm:$0xff] %v1828
    %1841 = vst [vmem:[#allocation2 + $0x58] sm:$0xff] %v1829
    %v1842 = vld [vmem:[#allocation2] sm:$0xff]
    %v1843 = vld [vmem:[#allocation2 + $0x8] sm:$0xff]
    %v1844 = vld [vmem:[#allocation2 + $0x10] sm:$0xff]
    %v1845 = vld [vmem:[#allocation2 + $0x18] sm:$0xff]
    %v1846 = vld [vmem:[#allocation2 + $0x20] sm:$0xff]
    %v1847 = vld [vmem:[#allocation2 + $0x28] sm:$0xff]
    %v1848 = vld [vmem:[#allocation2 + $0x30] sm:$0xff]
    %v1849 = vld [vmem:[#allocation2 + $0x38] sm:$0xff]
    %v1850 = vld [vmem:[#allocation2 + $0x40] sm:$0xff]
    %v1851 = vld [vmem:[#allocation2 + $0x48] sm:$0xff]
    %v1852 = vld [vmem:[#allocation2 + $0x50] sm:$0xff]
    %v1853 = vld [vmem:[#allocation2 + $0x58] sm:$0xff]
    %v1854 = vld [vmem:[#allocation3] sm:$0xf0]
    %v1855 = vld [vmem:[#allocation3 + $0x8] sm:$0xff]
    %v1856 = vld [vmem:[#allocation3 + $0x10] sm:$0xff]
    %v1857 = vld [vmem:[#allocation3 + $0x18] sm:$0xff]
    %v1858 = vld [vmem:[#allocation3 + $0x20] sm:$0xff]
    %v1859 = vld [vmem:[#allocation3 + $0x28] sm:$0xff]
    %v1860 = vld [vmem:[#allocation3 + $0x30] sm:$0xf]
    %s1861 = scalar_lea.vmem [#allocation9], 512
    %v1862 = vld [vmem:[%s1861] sm:$0xf]
    %v1863 = vld [vmem:[%s1861 + $0x4] sm:$0xf]
    %v1864 = vld [vmem:[%s1861 + $0x8] sm:$0xf]
    %v1865 = vld [vmem:[%s1861 + $0xc] sm:$0xf]
    %v1866 = vld [vmem:[%s1861 + $0x10] sm:$0xf]
    %v1867 = vld [vmem:[%s1861 + $0x14] sm:$0xf]
    %v1868 = vld [vmem:[%s1861 + $0x18] sm:$0xf]
    %v1869 = vld [vmem:[%s1861 + $0x1c] sm:$0xf]
    %v1870 = vld [vmem:[%s1861 + $0x20] sm:$0xf]
    %v1871 = vld [vmem:[%s1861 + $0x24] sm:$0xf]
    %v1872 = vld [vmem:[%s1861 + $0x28] sm:$0xf]
    %v1873 = vld [vmem:[%s1861 + $0x2c] sm:$0xf]
    %v1874 = vld [vmem:[%s1861 + $0x30] sm:$0xf]
    %v1875 = vld [vmem:[%s1861 + $0x34] sm:$0xf]
    %v1876 = vld [vmem:[%s1861 + $0x38] sm:$0xf]
    %v1877 = vld [vmem:[%s1861 + $0x3c] sm:$0xf]
    %v1878 = vld [vmem:[#allocation3 + $0x30] sm:$0x1f]
    %s1879 = scalar_lea.vmem [#allocation9], 576
    %v1880 = vld [vmem:[%s1879] sm:$0xf]
    %v1881 = vld [vmem:[%s1879 + $0x4] sm:$0xf]
    %v1882 = vld [vmem:[%s1879 + $0x8] sm:$0xf]
    %v1883 = vld [vmem:[%s1879 + $0xc] sm:$0xf]
    %v1884 = vld [vmem:[%s1879 + $0x10] sm:$0xf]
    %v1885 = vld [vmem:[%s1879 + $0x14] sm:$0xf]
    %v1886 = vld [vmem:[%s1879 + $0x18] sm:$0xf]
    %v1887 = vld [vmem:[%s1879 + $0x1c] sm:$0xf]
    %v1888 = vld [vmem:[%s1879 + $0x20] sm:$0xf]
    %v1889 = vld [vmem:[%s1879 + $0x24] sm:$0xf]
    %v1890 = vld [vmem:[%s1879 + $0x28] sm:$0xf]
    %v1891 = vld [vmem:[%s1879 + $0x2c] sm:$0xf]
    %v1892 = vld [vmem:[%s1879 + $0x30] sm:$0xf]
    %v1893 = vld [vmem:[%s1879 + $0x34] sm:$0xf]
    %v1894 = vld [vmem:[%s1879 + $0x38] sm:$0xf]
    %v1895 = vld [vmem:[%s1879 + $0x3c] sm:$0xf]
    %vm1896 = vsmask.f32 3328
    %v1898 = vshrl.u32 %v1854, 16
    %v1900 = vrot.slane %v1898, 4
    %v1901 = vshll.u32 %v1854, 16
    %v1903 = vrot.slane %v1901, 5
    %v1904 = vor.u32 %v1900, %v1903
    %v1906 = vshrl.u32 %v1855, 16
    %v1908 = vrot.slane %v1906, 4
    %v1909 = vshll.u32 %v1855, 16
    %v1911 = vrot.slane %v1909, 5
    %v1912 = vor.u32 %v1908, %v1911
    %v1913 = vsel %vm1896, %v1904, %v1912
    %v1915 = vshrl.u32 %v1856, 16
    %v1917 = vrot.slane %v1915, 4
    %v1918 = vshll.u32 %v1856, 16
    %v1920 = vrot.slane %v1918, 5
    %v1921 = vor.u32 %v1917, %v1920
    %v1922 = vsel %vm1896, %v1912, %v1921
    %v1924 = vshrl.u32 %v1857, 16
    %v1926 = vrot.slane %v1924, 4
    %v1927 = vshll.u32 %v1857, 16
    %v1929 = vrot.slane %v1927, 5
    %v1930 = vor.u32 %v1926, %v1929
    %v1931 = vsel %vm1896, %v1921, %v1930
    %v1933 = vshrl.u32 %v1858, 16
    %v1935 = vrot.slane %v1933, 4
    %v1936 = vshll.u32 %v1858, 16
    %v1938 = vrot.slane %v1936, 5
    %v1939 = vor.u32 %v1935, %v1938
    %v1940 = vsel %vm1896, %v1930, %v1939
    %v1942 = vshrl.u32 %v1859, 16
    %v1944 = vrot.slane %v1942, 4
    %v1945 = vshll.u32 %v1859, 16
    %v1947 = vrot.slane %v1945, 5
    %v1948 = vor.u32 %v1944, %v1947
    %v1949 = vsel %vm1896, %v1939, %v1948
    %v1951 = vshrl.u32 %v1878, 16
    %v1953 = vrot.slane %v1951, 4
    %v1954 = vshll.u32 %v1878, 16
    %v1956 = vrot.slane %v1954, 5
    %v1957 = vor.u32 %v1953, %v1956
    %v1958 = vsel %vm1896, %v1948, %v1957
    %v1981 = vunpack.c.l.b16 %v1880
    %v1982 = vunpack.c.l.b16 %v1881
    %v1983 = vunpack.c.l.b16 %v1882
    %v1984 = vunpack.c.l.b16 %v1883
    %v1985 = vunpack.c.l.b16 %v1884
    %v1986 = vunpack.c.l.b16 %v1885
    %v1987 = vunpack.c.l.b16 %v1886
    %v1988 = vunpack.c.l.b16 %v1887
    %v1989 = vunpack.c.l.b16 %v1888
    %v1990 = vunpack.c.l.b16 %v1889
    %v1991 = vunpack.c.l.b16 %v1890
    %v1992 = vunpack.c.l.b16 %v1891
    %v1993 = vunpack.c.l.b16 %v1892
    %v1994 = vunpack.c.l.b16 %v1893
    %v1995 = vunpack.c.l.b16 %v1894
    %v1996 = vunpack.c.l.b16 %v1895
    %v1997 = vpack.c.b16 %v1982, %v1981
    %v1998 = vpack.c.b16 %v1984, %v1983
    %v1999 = vpack.c.b16 %v1986, %v1985
    %v2000 = vpack.c.b16 %v1988, %v1987
    %v2001 = vpack.c.b16 %v1990, %v1989
    %v2002 = vpack.c.b16 %v1992, %v1991
    %v2003 = vpack.c.b16 %v1994, %v1993
    %v2004 = vpack.c.b16 %v1996, %v1995
    %2013 = vmatprep.subr.bf16.mxu0 0
    %2014 = vmatpush1.bf16.msra.mxu0 %v1997
    %2015 = vmatprep.subr.bf16.mxu0 0
    %2016 = vmatpush1.bf16.msra.mxu0 %v1998
    %2017 = vmatprep.subr.bf16.mxu0 0
    %2018 = vmatpush1.bf16.msra.mxu0 %v1999
    %2019 = vmatprep.subr.bf16.mxu0 0
    %2020 = vmatpush1.bf16.msra.mxu0 %v2000
    %2021 = vmatprep.subr.bf16.mxu0 0
    %2022 = vmatpush1.bf16.msra.mxu0 %v2001
    %2023 = vmatprep.subr.bf16.mxu0 0
    %2024 = vmatpush1.bf16.msra.mxu0 %v2002
    %2025 = vmatprep.subr.bf16.mxu0 0
    %2026 = vmatpush1.bf16.msra.mxu0 %v2003
    %2027 = vmatprep.subr.bf16.mxu0 0
    %2028 = vmatpush1.bf16.msra.mxu0 %v2004
    %2029 = vmatprep.subr.bf16.mxu0 0
    %2030 = vmatpush1.bf16.msra.mxu0 0
    %2031 = vmatprep.subr.bf16.mxu0 0
    %2032 = vmatpush1.bf16.msra.mxu0 0
    %2033 = vmatprep.subr.bf16.mxu0 0
    %2034 = vmatpush1.bf16.msra.mxu0 0
    %2035 = vmatprep.subr.bf16.mxu0 0
    %2036 = vmatpush1.bf16.msra.mxu0 0
    %2037 = vmatprep.subr.bf16.mxu0 0
    %2038 = vmatpush1.bf16.msra.mxu0 0
    %2039 = vmatprep.subr.bf16.mxu0 0
    %2040 = vmatpush1.bf16.msra.mxu0 0
    %2041 = vmatprep.subr.bf16.mxu0 0
    %2042 = vmatpush1.bf16.msra.mxu0 0
    %2043 = vmatprep.subr.bf16.mxu0 0
    %2044 = vmatpush1.bf16.msra.mxu0 0
    %2045 = vmatprep.mubr.bf16.mxu0 0
    %2046 = vmatmul.mubr.bf16.gmra.mrb[0].mxu0 %v1913
    %v2047 = vpop.f32.mrb[0].mxu0
    %v2048 = vadd.f32 0.0, %v2047
    %v2049 = vpop.f32.mrb[0].mxu0
    %v2050 = vpop.f32.mrb[0].mxu0
    %v2051 = vadd.f32 0.0, %v2050
    %v2052 = vpop.f32.mrb[0].mxu0
    %2053 = vmatprep.mubr.bf16.mxu0 0
    %2054 = vmatmul.mubr.bf16.gmra.mrb[0].mxu0 %v1922
    %v2055 = vpop.f32.mrb[0].mxu0
    %v2056 = vadd.f32 0.0, %v2055
    %v2057 = vpop.f32.mrb[0].mxu0
    %v2058 = vpop.f32.mrb[0].mxu0
    %v2059 = vadd.f32 0.0, %v2058
    %v2060 = vpop.f32.mrb[0].mxu0
    %2061 = vmatprep.mubr.bf16.mxu0 0
    %2062 = vmatmul.mubr.bf16.gmra.mrb[0].mxu0 %v1931
    %v2063 = vpop.f32.mrb[0].mxu0
    %v2064 = vadd.f32 0.0, %v2063
    %v2065 = vpop.f32.mrb[0].mxu0
    %v2066 = vpop.f32.mrb[0].mxu0
    %v2067 = vadd.f32 0.0, %v2066
    %v2068 = vpop.f32.mrb[0].mxu0
    %2069 = vmatprep.mubr.bf16.mxu0 0
    %2070 = vmatmul.mubr.bf16.gmra.mrb[0].mxu0 %v1940
    %v2071 = vpop.f32.mrb[0].mxu0
    %v2072 = vadd.f32 0.0, %v2071
    %v2073 = vpop.f32.mrb[0].mxu0
    %v2074 = vpop.f32.mrb[0].mxu0
    %v2075 = vadd.f32 0.0, %v2074
    %v2076 = vpop.f32.mrb[0].mxu0
    %2077 = vmatprep.mubr.bf16.mxu0 0
    %2078 = vmatmul.mubr.bf16.gmra.mrb[0].mxu0 %v1949
    %v2079 = vpop.f32.mrb[0].mxu0
    %v2080 = vadd.f32 0.0, %v2079
    %v2081 = vpop.f32.mrb[0].mxu0
    %v2082 = vpop.f32.mrb[0].mxu0
    %v2083 = vadd.f32 0.0, %v2082
    %v2084 = vpop.f32.mrb[0].mxu0
    %2085 = vmatprep.mubr.bf16.mxu0 0
    %2086 = vmatmul.mubr.bf16.gmra.mrb[0].mxu0 %v1958
    %v2087 = vpop.f32.mrb[0].mxu0
    %v2088 = vadd.f32 0.0, %v2087
    %v2089 = vpop.f32.mrb[0].mxu0
    %v2090 = vpop.f32.mrb[0].mxu0
    %v2091 = vadd.f32 0.0, %v2090
    %v2092 = vpop.f32.mrb[0].mxu0
    %2093 = vdwg.mxu0
    %vm2101 = vcmask 1043456
    %v2102 = vrot.slane %v1854, 4
    %v2103 = vrot.slane %v1855, 4
    %v2104 = vsel %vm2101, %v2102, %v2103
    %v2105 = vrot.slane %v1856, 4
    %v2106 = vsel %vm2101, %v2103, %v2105
    %v2107 = vrot.slane %v1857, 4
    %v2108 = vsel %vm2101, %v2105, %v2107
    %v2109 = vrot.slane %v1858, 4
    %v2110 = vsel %vm2101, %v2107, %v2109
    %v2111 = vrot.slane %v1859, 4
    %v2112 = vsel %vm2101, %v2109, %v2111
    %v2113 = vrot.slane %v1860, 4
    %v2114 = vsel %vm2101, %v2111, %v2113
    %v2137 = vunpack.c.l.b16 %v1862
    %v2138 = vunpack.c.l.b16 %v1863
    %v2139 = vunpack.c.l.b16 %v1864
    %v2140 = vunpack.c.l.b16 %v1865
    %v2141 = vunpack.c.l.b16 %v1866
    %v2142 = vunpack.c.l.b16 %v1867
    %v2143 = vunpack.c.l.b16 %v1868
    %v2144 = vunpack.c.l.b16 %v1869
    %v2145 = vunpack.c.l.b16 %v1870
    %v2146 = vunpack.c.l.b16 %v1871
    %v2147 = vunpack.c.l.b16 %v1872
    %v2148 = vunpack.c.l.b16 %v1873
    %v2149 = vunpack.c.l.b16 %v1874
    %v2150 = vunpack.c.l.b16 %v1875
    %v2151 = vunpack.c.l.b16 %v1876
    %v2152 = vunpack.c.l.b16 %v1877
    %v2153 = vpack.c.b16 %v2138, %v2137
    %v2154 = vpack.c.b16 %v2140, %v2139
    %v2155 = vpack.c.b16 %v2142, %v2141
    %v2156 = vpack.c.b16 %v2144, %v2143
    %v2157 = vpack.c.b16 %v2146, %v2145
    %v2158 = vpack.c.b16 %v2148, %v2147
    %v2159 = vpack.c.b16 %v2150, %v2149
    %v2160 = vpack.c.b16 %v2152, %v2151
    %2169 = vmatprep.subr.bf16.mxu0 0
    %2170 = vmatpush1.bf16.msra.mxu0 %v2153
    %2171 = vmatprep.subr.bf16.mxu0 0
    %2172 = vmatpush1.bf16.msra.mxu0 %v2154
    %2173 = vmatprep.subr.bf16.mxu0 0
    %2174 = vmatpush1.bf16.msra.mxu0 %v2155
    %2175 = vmatprep.subr.bf16.mxu0 0
    %2176 = vmatpush1.bf16.msra.mxu0 %v2156
    %2177 = vmatprep.subr.bf16.mxu0 0
    %2178 = vmatpush1.bf16.msra.mxu0 %v2157
    %2179 = vmatprep.subr.bf16.mxu0 0
    %2180 = vmatpush1.bf16.msra.mxu0 %v2158
    %2181 = vmatprep.subr.bf16.mxu0 0
    %2182 = vmatpush1.bf16.msra.mxu0 %v2159
    %2183 = vmatprep.subr.bf16.mxu0 0
    %2184 = vmatpush1.bf16.msra.mxu0 %v2160
    %2185 = vmatprep.subr.bf16.mxu0 0
    %2186 = vmatpush1.bf16.msra.mxu0 0
    %2187 = vmatprep.subr.bf16.mxu0 0
    %2188 = vmatpush1.bf16.msra.mxu0 0
    %2189 = vmatprep.subr.bf16.mxu0 0
    %2190 = vmatpush1.bf16.msra.mxu0 0
    %2191 = vmatprep.subr.bf16.mxu0 0
    %2192 = vmatpush1.bf16.msra.mxu0 0
    %2193 = vmatprep.subr.bf16.mxu0 0
    %2194 = vmatpush1.bf16.msra.mxu0 0
    %2195 = vmatprep.subr.bf16.mxu0 0
    %2196 = vmatpush1.bf16.msra.mxu0 0
    %2197 = vmatprep.subr.bf16.mxu0 0
    %2198 = vmatpush1.bf16.msra.mxu0 0
    %2199 = vmatprep.subr.bf16.mxu0 0
    %2200 = vmatpush1.bf16.msra.mxu0 0
    %2201 = vmatprep.mubr.bf16.mxu0 0
    %2202 = vmatmul.mubr.bf16.gmra.mrb[0].mxu0 %v2104
    %v2203 = vpop.f32.mrb[0].mxu0
    %v2204 = vadd.f32 %v2048, %v2203
    %v2205 = vpop.f32.mrb[0].mxu0
    %v2206 = vpop.f32.mrb[0].mxu0
    %v2207 = vadd.f32 %v2051, %v2206
    %v2208 = vpop.f32.mrb[0].mxu0
    %2209 = vmatprep.mubr.bf16.mxu0 0
    %2210 = vmatmul.mubr.bf16.gmra.mrb[0].mxu0 %v2106
    %v2211 = vpop.f32.mrb[0].mxu0
    %v2212 = vadd.f32 %v2056, %v2211
    %v2213 = vpop.f32.mrb[0].mxu0
    %v2214 = vpop.f32.mrb[0].mxu0
    %v2215 = vadd.f32 %v2059, %v2214
    %v2216 = vpop.f32.mrb[0].mxu0
    %2217 = vmatprep.mubr.bf16.mxu0 0
    %2218 = vmatmul.mubr.bf16.gmra.mrb[0].mxu0 %v2108
    %v2219 = vpop.f32.mrb[0].mxu0
    %v2220 = vadd.f32 %v2064, %v2219
    %v2221 = vpop.f32.mrb[0].mxu0
    %v2222 = vpop.f32.mrb[0].mxu0
    %v2223 = vadd.f32 %v2067, %v2222
    %v2224 = vpop.f32.mrb[0].mxu0
    %2225 = vmatprep.mubr.bf16.mxu0 0
    %2226 = vmatmul.mubr.bf16.gmra.mrb[0].mxu0 %v2110
    %v2227 = vpop.f32.mrb[0].mxu0
    %v2228 = vadd.f32 %v2072, %v2227
    %v2229 = vpop.f32.mrb[0].mxu0
    %v2230 = vpop.f32.mrb[0].mxu0
    %v2231 = vadd.f32 %v2075, %v2230
    %v2232 = vpop.f32.mrb[0].mxu0
    %2233 = vmatprep.mubr.bf16.mxu0 0
    %2234 = vmatmul.mubr.bf16.gmra.mrb[0].mxu0 %v2112
    %v2235 = vpop.f32.mrb[0].mxu0
    %v2236 = vadd.f32 %v2080, %v2235
    %v2237 = vpop.f32.mrb[0].mxu0
    %v2238 = vpop.f32.mrb[0].mxu0
    %v2239 = vadd.f32 %v2083, %v2238
    %v2240 = vpop.f32.mrb[0].mxu0
    %2241 = vmatprep.mubr.bf16.mxu0 0
    %2242 = vmatmul.mubr.bf16.gmra.mrb[0].mxu0 %v2114
    %v2243 = vpop.f32.mrb[0].mxu0
    %v2244 = vadd.f32 %v2088, %v2243
    %v2245 = vpop.f32.mrb[0].mxu0
    %v2246 = vpop.f32.mrb[0].mxu0
    %v2247 = vadd.f32 %v2091, %v2246
    %v2248 = vpop.f32.mrb[0].mxu0
    %2249 = vdwg.mxu0
    %v2250 = vadd.f32 %v1842, %v2204
    %v2251 = vadd.f32 %v1843, %v2207
    %v2252 = vadd.f32 %v1844, %v2212
    %v2253 = vadd.f32 %v1845, %v2215
    %v2254 = vadd.f32 %v1846, %v2220
    %v2255 = vadd.f32 %v1847, %v2223
    %v2256 = vadd.f32 %v1848, %v2228
    %v2257 = vadd.f32 %v1849, %v2231
    %v2258 = vadd.f32 %v1850, %v2236
    %v2259 = vadd.f32 %v1851, %v2239
    %v2260 = vadd.f32 %v1852, %v2244
    %v2261 = vadd.f32 %v1853, %v2247
    %2262 = vst [vmem:[#allocation2] sm:$0xff] %v2250
    %2263 = vst [vmem:[#allocation2 + $0x8] sm:$0xff] %v2251
    %2264 = vst [vmem:[#allocation2 + $0x10] sm:$0xff] %v2252
    %2265 = vst [vmem:[#allocation2 + $0x18] sm:$0xff] %v2253
    %2266 = vst [vmem:[#allocation2 + $0x20] sm:$0xff] %v2254
    %2267 = vst [vmem:[#allocation2 + $0x28] sm:$0xff] %v2255
    %2268 = vst [vmem:[#allocation2 + $0x30] sm:$0xff] %v2256
    %2269 = vst [vmem:[#allocation2 + $0x38] sm:$0xff] %v2257
    %2270 = vst [vmem:[#allocation2 + $0x40] sm:$0xff] %v2258
    %2271 = vst [vmem:[#allocation2 + $0x48] sm:$0xff] %v2259
    %2272 = vst [vmem:[#allocation2 + $0x50] sm:$0xff] %v2260
    %2273 = vst [vmem:[#allocation2 + $0x58] sm:$0xff] %v2261
    %v2274 = vld [vmem:[#allocation2] sm:$0xff]
    %v2275 = vld [vmem:[#allocation2 + $0x8] sm:$0xff]
    %v2276 = vld [vmem:[#allocation2 + $0x10] sm:$0xff]
    %v2277 = vld [vmem:[#allocation2 + $0x18] sm:$0xff]
    %v2278 = vld [vmem:[#allocation2 + $0x20] sm:$0xff]
    %v2279 = vld [vmem:[#allocation2 + $0x28] sm:$0xff]
    %v2280 = vld [vmem:[#allocation2 + $0x30] sm:$0xff]
    %v2281 = vld [vmem:[#allocation2 + $0x38] sm:$0xff]
    %v2282 = vld [vmem:[#allocation2 + $0x40] sm:$0xff]
    %v2283 = vld [vmem:[#allocation2 + $0x48] sm:$0xff]
    %v2284 = vld [vmem:[#allocation2 + $0x50] sm:$0xff]
    %v2285 = vld [vmem:[#allocation2 + $0x58] sm:$0xff]
    %v2286 = vld [vmem:[#allocation3] sm:$0xe0]
    %v2287 = vld [vmem:[#allocation3 + $0x8] sm:$0xff]
    %v2288 = vld [vmem:[#allocation3 + $0x10] sm:$0xff]
    %v2289 = vld [vmem:[#allocation3 + $0x18] sm:$0xff]
    %v2290 = vld [vmem:[#allocation3 + $0x20] sm:$0xff]
    %v2291 = vld [vmem:[#allocation3 + $0x28] sm:$0xff]
    %v2292 = vld [vmem:[#allocation3 + $0x30] sm:$0x1f]
    %s2293 = scalar_lea.vmem [#allocation9], 640
    %v2294 = vld [vmem:[%s2293] sm:$0xf]
    %v2295 = vld [vmem:[%s2293 + $0x4] sm:$0xf]
    %v2296 = vld [vmem:[%s2293 + $0x8] sm:$0xf]
    %v2297 = vld [vmem:[%s2293 + $0xc] sm:$0xf]
    %v2298 = vld [vmem:[%s2293 + $0x10] sm:$0xf]
    %v2299 = vld [vmem:[%s2293 + $0x14] sm:$0xf]
    %v2300 = vld [vmem:[%s2293 + $0x18] sm:$0xf]
    %v2301 = vld [vmem:[%s2293 + $0x1c] sm:$0xf]
    %v2302 = vld [vmem:[%s2293 + $0x20] sm:$0xf]
    %v2303 = vld [vmem:[%s2293 + $0x24] sm:$0xf]
    %v2304 = vld [vmem:[%s2293 + $0x28] sm:$0xf]
    %v2305 = vld [vmem:[%s2293 + $0x2c] sm:$0xf]
    %v2306 = vld [vmem:[%s2293 + $0x30] sm:$0xf]
    %v2307 = vld [vmem:[%s2293 + $0x34] sm:$0xf]
    %v2308 = vld [vmem:[%s2293 + $0x38] sm:$0xf]
    %v2309 = vld [vmem:[%s2293 + $0x3c] sm:$0xf]
    %v2310 = vld [vmem:[#allocation3 + $0x30] sm:$0x3f]
    %s2311 = scalar_lea.vmem [#allocation9], 704
    %v2312 = vld [vmem:[%s2311] sm:$0xf]
    %v2313 = vld [vmem:[%s2311 + $0x4] sm:$0xf]
    %v2314 = vld [vmem:[%s2311 + $0x8] sm:$0xf]
    %v2315 = vld [vmem:[%s2311 + $0xc] sm:$0xf]
    %v2316 = vld [vmem:[%s2311 + $0x10] sm:$0xf]
    %v2317 = vld [vmem:[%s2311 + $0x14] sm:$0xf]
    %v2318 = vld [vmem:[%s2311 + $0x18] sm:$0xf]
    %v2319 = vld [vmem:[%s2311 + $0x1c] sm:$0xf]
    %v2320 = vld [vmem:[%s2311 + $0x20] sm:$0xf]
    %v2321 = vld [vmem:[%s2311 + $0x24] sm:$0xf]
    %v2322 = vld [vmem:[%s2311 + $0x28] sm:$0xf]
    %v2323 = vld [vmem:[%s2311 + $0x2c] sm:$0xf]
    %v2324 = vld [vmem:[%s2311 + $0x30] sm:$0xf]
    %v2325 = vld [vmem:[%s2311 + $0x34] sm:$0xf]
    %v2326 = vld [vmem:[%s2311 + $0x38] sm:$0xf]
    %v2327 = vld [vmem:[%s2311 + $0x3c] sm:$0xf]
    %vm2328 = vsmask.f32 2304
    %v2330 = vshrl.u32 %v2286, 16
    %v2332 = vrot.slane %v2330, 5
    %v2333 = vshll.u32 %v2286, 16
    %v2335 = vrot.slane %v2333, 6
    %v2336 = vor.u32 %v2332, %v2335
    %v2338 = vshrl.u32 %v2287, 16
    %v2340 = vrot.slane %v2338, 5
    %v2341 = vshll.u32 %v2287, 16
    %v2343 = vrot.slane %v2341, 6
    %v2344 = vor.u32 %v2340, %v2343
    %v2345 = vsel %vm2328, %v2336, %v2344
    %v2347 = vshrl.u32 %v2288, 16
    %v2349 = vrot.slane %v2347, 5
    %v2350 = vshll.u32 %v2288, 16
    %v2352 = vrot.slane %v2350, 6
    %v2353 = vor.u32 %v2349, %v2352
    %v2354 = vsel %vm2328, %v2344, %v2353
    %v2356 = vshrl.u32 %v2289, 16
    %v2358 = vrot.slane %v2356, 5
    %v2359 = vshll.u32 %v2289, 16
    %v2361 = vrot.slane %v2359, 6
    %v2362 = vor.u32 %v2358, %v2361
    %v2363 = vsel %vm2328, %v2353, %v2362
    %v2365 = vshrl.u32 %v2290, 16
    %v2367 = vrot.slane %v2365, 5
    %v2368 = vshll.u32 %v2290, 16
    %v2370 = vrot.slane %v2368, 6
    %v2371 = vor.u32 %v2367, %v2370
    %v2372 = vsel %vm2328, %v2362, %v2371
    %v2374 = vshrl.u32 %v2291, 16
    %v2376 = vrot.slane %v2374, 5
    %v2377 = vshll.u32 %v2291, 16
    %v2379 = vrot.slane %v2377, 6
    %v2380 = vor.u32 %v2376, %v2379
    %v2381 = vsel %vm2328, %v2371, %v2380
    %v2383 = vshrl.u32 %v2310, 16
    %v2385 = vrot.slane %v2383, 5
    %v2386 = vshll.u32 %v2310, 16
    %v2388 = vrot.slane %v2386, 6
    %v2389 = vor.u32 %v2385, %v2388
    %v2390 = vsel %vm2328, %v2380, %v2389
    %v2413 = vunpack.c.l.b16 %v2312
    %v2414 = vunpack.c.l.b16 %v2313
    %v2415 = vunpack.c.l.b16 %v2314
    %v2416 = vunpack.c.l.b16 %v2315
    %v2417 = vunpack.c.l.b16 %v2316
    %v2418 = vunpack.c.l.b16 %v2317
    %v2419 = vunpack.c.l.b16 %v2318
    %v2420 = vunpack.c.l.b16 %v2319
    %v2421 = vunpack.c.l.b16 %v2320
    %v2422 = vunpack.c.l.b16 %v2321
    %v2423 = vunpack.c.l.b16 %v2322
    %v2424 = vunpack.c.l.b16 %v2323
    %v2425 = vunpack.c.l.b16 %v2324
    %v2426 = vunpack.c.l.b16 %v2325
    %v2427 = vunpack.c.l.b16 %v2326
    %v2428 = vunpack.c.l.b16 %v2327
    %v2429 = vpack.c.b16 %v2414, %v2413
    %v2430 = vpack.c.b16 %v2416, %v2415
    %v2431 = vpack.c.b16 %v2418, %v2417
    %v2432 = vpack.c.b16 %v2420, %v2419
    %v2433 = vpack.c.b16 %v2422, %v2421
    %v2434 = vpack.c.b16 %v2424, %v2423
    %v2435 = vpack.c.b16 %v2426, %v2425
    %v2436 = vpack.c.b16 %v2428, %v2427
    %2445 = vmatprep.subr.bf16.mxu0 0
    %2446 = vmatpush1.bf16.msra.mxu0 %v2429
    %2447 = vmatprep.subr.bf16.mxu0 0
    %2448 = vmatpush1.bf16.msra.mxu0 %v2430
    %2449 = vmatprep.subr.bf16.mxu0 0
    %2450 = vmatpush1.bf16.msra.mxu0 %v2431
    %2451 = vmatprep.subr.bf16.mxu0 0
    %2452 = vmatpush1.bf16.msra.mxu0 %v2432
    %2453 = vmatprep.subr.bf16.mxu0 0
    %2454 = vmatpush1.bf16.msra.mxu0 %v2433
    %2455 = vmatprep.subr.bf16.mxu0 0
    %2456 = vmatpush1.bf16.msra.mxu0 %v2434
    %2457 = vmatprep.subr.bf16.mxu0 0
    %2458 = vmatpush1.bf16.msra.mxu0 %v2435
    %2459 = vmatprep.subr.bf16.mxu0 0
    %2460 = vmatpush1.bf16.msra.mxu0 %v2436
    %2461 = vmatprep.subr.bf16.mxu0 0
    %2462 = vmatpush1.bf16.msra.mxu0 0
    %2463 = vmatprep.subr.bf16.mxu0 0
    %2464 = vmatpush1.bf16.msra.mxu0 0
    %2465 = vmatprep.subr.bf16.mxu0 0
    %2466 = vmatpush1.bf16.msra.mxu0 0
    %2467 = vmatprep.subr.bf16.mxu0 0
    %2468 = vmatpush1.bf16.msra.mxu0 0
    %2469 = vmatprep.subr.bf16.mxu0 0
    %2470 = vmatpush1.bf16.msra.mxu0 0
    %2471 = vmatprep.subr.bf16.mxu0 0
    %2472 = vmatpush1.bf16.msra.mxu0 0
    %2473 = vmatprep.subr.bf16.mxu0 0
    %2474 = vmatpush1.bf16.msra.mxu0 0
    %2475 = vmatprep.subr.bf16.mxu0 0
    %2476 = vmatpush1.bf16.msra.mxu0 0
    %2477 = vmatprep.mubr.bf16.mxu0 0
    %2478 = vmatmul.mubr.bf16.gmra.mrb[0].mxu0 %v2345
    %v2479 = vpop.f32.mrb[0].mxu0
    %v2480 = vadd.f32 0.0, %v2479
    %v2481 = vpop.f32.mrb[0].mxu0
    %v2482 = vpop.f32.mrb[0].mxu0
    %v2483 = vadd.f32 0.0, %v2482
    %v2484 = vpop.f32.mrb[0].mxu0
    %2485 = vmatprep.mubr.bf16.mxu0 0
    %2486 = vmatmul.mubr.bf16.gmra.mrb[0].mxu0 %v2354
    %v2487 = vpop.f32.mrb[0].mxu0
    %v2488 = vadd.f32 0.0, %v2487
    %v2489 = vpop.f32.mrb[0].mxu0
    %v2490 = vpop.f32.mrb[0].mxu0
    %v2491 = vadd.f32 0.0, %v2490
    %v2492 = vpop.f32.mrb[0].mxu0
    %2493 = vmatprep.mubr.bf16.mxu0 0
    %2494 = vmatmul.mubr.bf16.gmra.mrb[0].mxu0 %v2363
    %v2495 = vpop.f32.mrb[0].mxu0
    %v2496 = vadd.f32 0.0, %v2495
    %v2497 = vpop.f32.mrb[0].mxu0
    %v2498 = vpop.f32.mrb[0].mxu0
    %v2499 = vadd.f32 0.0, %v2498
    %v2500 = vpop.f32.mrb[0].mxu0
    %2501 = vmatprep.mubr.bf16.mxu0 0
    %2502 = vmatmul.mubr.bf16.gmra.mrb[0].mxu0 %v2372
    %v2503 = vpop.f32.mrb[0].mxu0
    %v2504 = vadd.f32 0.0, %v2503
    %v2505 = vpop.f32.mrb[0].mxu0
    %v2506 = vpop.f32.mrb[0].mxu0
    %v2507 = vadd.f32 0.0, %v2506
    %v2508 = vpop.f32.mrb[0].mxu0
    %2509 = vmatprep.mubr.bf16.mxu0 0
    %2510 = vmatmul.mubr.bf16.gmra.mrb[0].mxu0 %v2381
    %v2511 = vpop.f32.mrb[0].mxu0
    %v2512 = vadd.f32 0.0, %v2511
    %v2513 = vpop.f32.mrb[0].mxu0
    %v2514 = vpop.f32.mrb[0].mxu0
    %v2515 = vadd.f32 0.0, %v2514
    %v2516 = vpop.f32.mrb[0].mxu0
    %2517 = vmatprep.mubr.bf16.mxu0 0
    %2518 = vmatmul.mubr.bf16.gmra.mrb[0].mxu0 %v2390
    %v2519 = vpop.f32.mrb[0].mxu0
    %v2520 = vadd.f32 0.0, %v2519
    %v2521 = vpop.f32.mrb[0].mxu0
    %v2522 = vpop.f32.mrb[0].mxu0
    %v2523 = vadd.f32 0.0, %v2522
    %v2524 = vpop.f32.mrb[0].mxu0
    %2525 = vdwg.mxu0
    %vm2533 = vcmask 1042432
    %v2534 = vrot.slane %v2286, 5
    %v2535 = vrot.slane %v2287, 5
    %v2536 = vsel %vm2533, %v2534, %v2535
    %v2537 = vrot.slane %v2288, 5
    %v2538 = vsel %vm2533, %v2535, %v2537
    %v2539 = vrot.slane %v2289, 5
    %v2540 = vsel %vm2533, %v2537, %v2539
    %v2541 = vrot.slane %v2290, 5
    %v2542 = vsel %vm2533, %v2539, %v2541
    %v2543 = vrot.slane %v2291, 5
    %v2544 = vsel %vm2533, %v2541, %v2543
    %v2545 = vrot.slane %v2292, 5
    %v2546 = vsel %vm2533, %v2543, %v2545
    %v2569 = vunpack.c.l.b16 %v2294
    %v2570 = vunpack.c.l.b16 %v2295
    %v2571 = vunpack.c.l.b16 %v2296
    %v2572 = vunpack.c.l.b16 %v2297
    %v2573 = vunpack.c.l.b16 %v2298
    %v2574 = vunpack.c.l.b16 %v2299
    %v2575 = vunpack.c.l.b16 %v2300
    %v2576 = vunpack.c.l.b16 %v2301
    %v2577 = vunpack.c.l.b16 %v2302
    %v2578 = vunpack.c.l.b16 %v2303
    %v2579 = vunpack.c.l.b16 %v2304
    %v2580 = vunpack.c.l.b16 %v2305
    %v2581 = vunpack.c.l.b16 %v2306
    %v2582 = vunpack.c.l.b16 %v2307
    %v2583 = vunpack.c.l.b16 %v2308
    %v2584 = vunpack.c.l.b16 %v2309
    %v2585 = vpack.c.b16 %v2570, %v2569
    %v2586 = vpack.c.b16 %v2572, %v2571
    %v2587 = vpack.c.b16 %v2574, %v2573
    %v2588 = vpack.c.b16 %v2576, %v2575
    %v2589 = vpack.c.b16 %v2578, %v2577
    %v2590 = vpack.c.b16 %v2580, %v2579
    %v2591 = vpack.c.b16 %v2582, %v2581
    %v2592 = vpack.c.b16 %v2584, %v2583
    %2601 = vmatprep.subr.bf16.mxu0 0
    %2602 = vmatpush1.bf16.msra.mxu0 %v2585
    %2603 = vmatprep.subr.bf16.mxu0 0
    %2604 = vmatpush1.bf16.msra.mxu0 %v2586
    %2605 = vmatprep.subr.bf16.mxu0 0
    %2606 = vmatpush1.bf16.msra.mxu0 %v2587
    %2607 = vmatprep.subr.bf16.mxu0 0
    %2608 = vmatpush1.bf16.msra.mxu0 %v2588
    %2609 = vmatprep.subr.bf16.mxu0 0
    %2610 = vmatpush1.bf16.msra.mxu0 %v2589
    %2611 = vmatprep.subr.bf16.mxu0 0
    %2612 = vmatpush1.bf16.msra.mxu0 %v2590
    %2613 = vmatprep.subr.bf16.mxu0 0
    %2614 = vmatpush1.bf16.msra.mxu0 %v2591
    %2615 = vmatprep.subr.bf16.mxu0 0
    %2616 = vmatpush1.bf16.msra.mxu0 %v2592
    %2617 = vmatprep.subr.bf16.mxu0 0
    %2618 = vmatpush1.bf16.msra.mxu0 0
    %2619 = vmatprep.subr.bf16.mxu0 0
    %2620 = vmatpush1.bf16.msra.mxu0 0
    %2621 = vmatprep.subr.bf16.mxu0 0
    %2622 = vmatpush1.bf16.msra.mxu0 0
    %2623 = vmatprep.subr.bf16.mxu0 0
    %2624 = vmatpush1.bf16.msra.mxu0 0
    %2625 = vmatprep.subr.bf16.mxu0 0
    %2626 = vmatpush1.bf16.msra.mxu0 0
    %2627 = vmatprep.subr.bf16.mxu0 0
    %2628 = vmatpush1.bf16.msra.mxu0 0
    %2629 = vmatprep.subr.bf16.mxu0 0
    %2630 = vmatpush1.bf16.msra.mxu0 0
    %2631 = vmatprep.subr.bf16.mxu0 0
    %2632 = vmatpush1.bf16.msra.mxu0 0
    %2633 = vmatprep.mubr.bf16.mxu0 0
    %2634 = vmatmul.mubr.bf16.gmra.mrb[0].mxu0 %v2536
    %v2635 = vpop.f32.mrb[0].mxu0
    %v2636 = vadd.f32 %v2480, %v2635
    %v2637 = vpop.f32.mrb[0].mxu0
    %v2638 = vpop.f32.mrb[0].mxu0
    %v2639 = vadd.f32 %v2483, %v2638
    %v2640 = vpop.f32.mrb[0].mxu0
    %2641 = vmatprep.mubr.bf16.mxu0 0
    %2642 = vmatmul.mubr.bf16.gmra.mrb[0].mxu0 %v2538
    %v2643 = vpop.f32.mrb[0].mxu0
    %v2644 = vadd.f32 %v2488, %v2643
    %v2645 = vpop.f32.mrb[0].mxu0
    %v2646 = vpop.f32.mrb[0].mxu0
    %v2647 = vadd.f32 %v2491, %v2646
    %v2648 = vpop.f32.mrb[0].mxu0
    %2649 = vmatprep.mubr.bf16.mxu0 0
    %2650 = vmatmul.mubr.bf16.gmra.mrb[0].mxu0 %v2540
    %v2651 = vpop.f32.mrb[0].mxu0
    %v2652 = vadd.f32 %v2496, %v2651
    %v2653 = vpop.f32.mrb[0].mxu0
    %v2654 = vpop.f32.mrb[0].mxu0
    %v2655 = vadd.f32 %v2499, %v2654
    %v2656 = vpop.f32.mrb[0].mxu0
    %2657 = vmatprep.mubr.bf16.mxu0 0
    %2658 = vmatmul.mubr.bf16.gmra.mrb[0].mxu0 %v2542
    %v2659 = vpop.f32.mrb[0].mxu0
    %v2660 = vadd.f32 %v2504, %v2659
    %v2661 = vpop.f32.mrb[0].mxu0
    %v2662 = vpop.f32.mrb[0].mxu0
    %v2663 = vadd.f32 %v2507, %v2662
    %v2664 = vpop.f32.mrb[0].mxu0
    %2665 = vmatprep.mubr.bf16.mxu0 0
    %2666 = vmatmul.mubr.bf16.gmra.mrb[0].mxu0 %v2544
    %v2667 = vpop.f32.mrb[0].mxu0
    %v2668 = vadd.f32 %v2512, %v2667
    %v2669 = vpop.f32.mrb[0].mxu0
    %v2670 = vpop.f32.mrb[0].mxu0
    %v2671 = vadd.f32 %v2515, %v2670
    %v2672 = vpop.f32.mrb[0].mxu0
    %2673 = vmatprep.mubr.bf16.mxu0 0
    %2674 = vmatmul.mubr.bf16.gmra.mrb[0].mxu0 %v2546
    %v2675 = vpop.f32.mrb[0].mxu0
    %v2676 = vadd.f32 %v2520, %v2675
    %v2677 = vpop.f32.mrb[0].mxu0
    %v2678 = vpop.f32.mrb[0].mxu0
    %v2679 = vadd.f32 %v2523, %v2678
    %v2680 = vpop.f32.mrb[0].mxu0
    %2681 = vdwg.mxu0
    %v2682 = vadd.f32 %v2274, %v2636
    %v2683 = vadd.f32 %v2275, %v2639
    %v2684 = vadd.f32 %v2276, %v2644
    %v2685 = vadd.f32 %v2277, %v2647
    %v2686 = vadd.f32 %v2278, %v2652
    %v2687 = vadd.f32 %v2279, %v2655
    %v2688 = vadd.f32 %v2280, %v2660
    %v2689 = vadd.f32 %v2281, %v2663
    %v2690 = vadd.f32 %v2282, %v2668
    %v2691 = vadd.f32 %v2283, %v2671
    %v2692 = vadd.f32 %v2284, %v2676
    %v2693 = vadd.f32 %v2285, %v2679
    %2694 = vst [vmem:[#allocation2] sm:$0xff] %v2682
    %2695 = vst [vmem:[#allocation2 + $0x8] sm:$0xff] %v2683
    %2696 = vst [vmem:[#allocation2 + $0x10] sm:$0xff] %v2684
    %2697 = vst [vmem:[#allocation2 + $0x18] sm:$0xff] %v2685
    %2698 = vst [vmem:[#allocation2 + $0x20] sm:$0xff] %v2686
    %2699 = vst [vmem:[#allocation2 + $0x28] sm:$0xff] %v2687
    %2700 = vst [vmem:[#allocation2 + $0x30] sm:$0xff] %v2688
    %2701 = vst [vmem:[#allocation2 + $0x38] sm:$0xff] %v2689
    %2702 = vst [vmem:[#allocation2 + $0x40] sm:$0xff] %v2690
    %2703 = vst [vmem:[#allocation2 + $0x48] sm:$0xff] %v2691
    %2704 = vst [vmem:[#allocation2 + $0x50] sm:$0xff] %v2692
    %2705 = vst [vmem:[#allocation2 + $0x58] sm:$0xff] %v2693
    %v2706 = vld [vmem:[#allocation2] sm:$0xff]
    %v2707 = vld [vmem:[#allocation2 + $0x8] sm:$0xff]
    %v2708 = vld [vmem:[#allocation2 + $0x10] sm:$0xff]
    %v2709 = vld [vmem:[#allocation2 + $0x18] sm:$0xff]
    %v2710 = vld [vmem:[#allocation2 + $0x20] sm:$0xff]
    %v2711 = vld [vmem:[#allocation2 + $0x28] sm:$0xff]
    %v2712 = vld [vmem:[#allocation2 + $0x30] sm:$0xff]
    %v2713 = vld [vmem:[#allocation2 + $0x38] sm:$0xff]
    %v2714 = vld [vmem:[#allocation2 + $0x40] sm:$0xff]
    %v2715 = vld [vmem:[#allocation2 + $0x48] sm:$0xff]
    %v2716 = vld [vmem:[#allocation2 + $0x50] sm:$0xff]
    %v2717 = vld [vmem:[#allocation2 + $0x58] sm:$0xff]
    %v2718 = vld [vmem:[#allocation3] sm:$0xc0]
    %v2719 = vld [vmem:[#allocation3 + $0x8] sm:$0xff]
    %v2720 = vld [vmem:[#allocation3 + $0x10] sm:$0xff]
    %v2721 = vld [vmem:[#allocation3 + $0x18] sm:$0xff]
    %v2722 = vld [vmem:[#allocation3 + $0x20] sm:$0xff]
    %v2723 = vld [vmem:[#allocation3 + $0x28] sm:$0xff]
    %v2724 = vld [vmem:[#allocation3 + $0x30] sm:$0x3f]
    %s2725 = scalar_lea.vmem [#allocation9], 768
    %v2726 = vld [vmem:[%s2725] sm:$0xf]
    %v2727 = vld [vmem:[%s2725 + $0x4] sm:$0xf]
    %v2728 = vld [vmem:[%s2725 + $0x8] sm:$0xf]
    %v2729 = vld [vmem:[%s2725 + $0xc] sm:$0xf]
    %v2730 = vld [vmem:[%s2725 + $0x10] sm:$0xf]
    %v2731 = vld [vmem:[%s2725 + $0x14] sm:$0xf]
    %v2732 = vld [vmem:[%s2725 + $0x18] sm:$0xf]
    %v2733 = vld [vmem:[%s2725 + $0x1c] sm:$0xf]
    %v2734 = vld [vmem:[%s2725 + $0x20] sm:$0xf]
    %v2735 = vld [vmem:[%s2725 + $0x24] sm:$0xf]
    %v2736 = vld [vmem:[%s2725 + $0x28] sm:$0xf]
    %v2737 = vld [vmem:[%s2725 + $0x2c] sm:$0xf]
    %v2738 = vld [vmem:[%s2725 + $0x30] sm:$0xf]
    %v2739 = vld [vmem:[%s2725 + $0x34] sm:$0xf]
    %v2740 = vld [vmem:[%s2725 + $0x38] sm:$0xf]
    %v2741 = vld [vmem:[%s2725 + $0x3c] sm:$0xf]
    %v2742 = vld [vmem:[#allocation3 + $0x30] sm:$0x7f]
    %s2743 = scalar_lea.vmem [#allocation9], 832
    %v2744 = vld [vmem:[%s2743] sm:$0xf]
    %v2745 = vld [vmem:[%s2743 + $0x4] sm:$0xf]
    %v2746 = vld [vmem:[%s2743 + $0x8] sm:$0xf]
    %v2747 = vld [vmem:[%s2743 + $0xc] sm:$0xf]
    %v2748 = vld [vmem:[%s2743 + $0x10] sm:$0xf]
    %v2749 = vld [vmem:[%s2743 + $0x14] sm:$0xf]
    %v2750 = vld [vmem:[%s2743 + $0x18] sm:$0xf]
    %v2751 = vld [vmem:[%s2743 + $0x1c] sm:$0xf]
    %v2752 = vld [vmem:[%s2743 + $0x20] sm:$0xf]
    %v2753 = vld [vmem:[%s2743 + $0x24] sm:$0xf]
    %v2754 = vld [vmem:[%s2743 + $0x28] sm:$0xf]
    %v2755 = vld [vmem:[%s2743 + $0x2c] sm:$0xf]
    %v2756 = vld [vmem:[%s2743 + $0x30] sm:$0xf]
    %v2757 = vld [vmem:[%s2743 + $0x34] sm:$0xf]
    %v2758 = vld [vmem:[%s2743 + $0x38] sm:$0xf]
    %v2759 = vld [vmem:[%s2743 + $0x3c] sm:$0xf]
    %vm2760 = vsmask.f32 1280
    %v2762 = vshrl.u32 %v2718, 16
    %v2764 = vrot.slane %v2762, 6
    %v2765 = vshll.u32 %v2718, 16
    %v2767 = vrot.slane %v2765, 7
    %v2768 = vor.u32 %v2764, %v2767
    %v2770 = vshrl.u32 %v2719, 16
    %v2772 = vrot.slane %v2770, 6
    %v2773 = vshll.u32 %v2719, 16
    %v2775 = vrot.slane %v2773, 7
    %v2776 = vor.u32 %v2772, %v2775
    %v2777 = vsel %vm2760, %v2768, %v2776
    %v2779 = vshrl.u32 %v2720, 16
    %v2781 = vrot.slane %v2779, 6
    %v2782 = vshll.u32 %v2720, 16
    %v2784 = vrot.slane %v2782, 7
    %v2785 = vor.u32 %v2781, %v2784
    %v2786 = vsel %vm2760, %v2776, %v2785
    %v2788 = vshrl.u32 %v2721, 16
    %v2790 = vrot.slane %v2788, 6
    %v2791 = vshll.u32 %v2721, 16
    %v2793 = vrot.slane %v2791, 7
    %v2794 = vor.u32 %v2790, %v2793
    %v2795 = vsel %vm2760, %v2785, %v2794
    %v2797 = vshrl.u32 %v2722, 16
    %v2799 = vrot.slane %v2797, 6
    %v2800 = vshll.u32 %v2722, 16
    %v2802 = vrot.slane %v2800, 7
    %v2803 = vor.u32 %v2799, %v2802
    %v2804 = vsel %vm2760, %v2794, %v2803
    %v2806 = vshrl.u32 %v2723, 16
    %v2808 = vrot.slane %v2806, 6
    %v2809 = vshll.u32 %v2723, 16
    %v2811 = vrot.slane %v2809, 7
    %v2812 = vor.u32 %v2808, %v2811
    %v2813 = vsel %vm2760, %v2803, %v2812
    %v2815 = vshrl.u32 %v2742, 16
    %v2817 = vrot.slane %v2815, 6
    %v2818 = vshll.u32 %v2742, 16
    %v2820 = vrot.slane %v2818, 7
    %v2821 = vor.u32 %v2817, %v2820
    %v2822 = vsel %vm2760, %v2812, %v2821
    %v2845 = vunpack.c.l.b16 %v2744
    %v2846 = vunpack.c.l.b16 %v2745
    %v2847 = vunpack.c.l.b16 %v2746
    %v2848 = vunpack.c.l.b16 %v2747
    %v2849 = vunpack.c.l.b16 %v2748
    %v2850 = vunpack.c.l.b16 %v2749
    %v2851 = vunpack.c.l.b16 %v2750
    %v2852 = vunpack.c.l.b16 %v2751
    %v2853 = vunpack.c.l.b16 %v2752
    %v2854 = vunpack.c.l.b16 %v2753
    %v2855 = vunpack.c.l.b16 %v2754
    %v2856 = vunpack.c.l.b16 %v2755
    %v2857 = vunpack.c.l.b16 %v2756
    %v2858 = vunpack.c.l.b16 %v2757
    %v2859 = vunpack.c.l.b16 %v2758
    %v2860 = vunpack.c.l.b16 %v2759
    %v2861 = vpack.c.b16 %v2846, %v2845
    %v2862 = vpack.c.b16 %v2848, %v2847
    %v2863 = vpack.c.b16 %v2850, %v2849
    %v2864 = vpack.c.b16 %v2852, %v2851
    %v2865 = vpack.c.b16 %v2854, %v2853
    %v2866 = vpack.c.b16 %v2856, %v2855
    %v2867 = vpack.c.b16 %v2858, %v2857
    %v2868 = vpack.c.b16 %v2860, %v2859
    %2877 = vmatprep.subr.bf16.mxu0 0
    %2878 = vmatpush1.bf16.msra.mxu0 %v2861
    %2879 = vmatprep.subr.bf16.mxu0 0
    %2880 = vmatpush1.bf16.msra.mxu0 %v2862
    %2881 = vmatprep.subr.bf16.mxu0 0
    %2882 = vmatpush1.bf16.msra.mxu0 %v2863
    %2883 = vmatprep.subr.bf16.mxu0 0
    %2884 = vmatpush1.bf16.msra.mxu0 %v2864
    %2885 = vmatprep.subr.bf16.mxu0 0
    %2886 = vmatpush1.bf16.msra.mxu0 %v2865
    %2887 = vmatprep.subr.bf16.mxu0 0
    %2888 = vmatpush1.bf16.msra.mxu0 %v2866
    %2889 = vmatprep.subr.bf16.mxu0 0
    %2890 = vmatpush1.bf16.msra.mxu0 %v2867
    %2891 = vmatprep.subr.bf16.mxu0 0
    %2892 = vmatpush1.bf16.msra.mxu0 %v2868
    %2893 = vmatprep.subr.bf16.mxu0 0
    %2894 = vmatpush1.bf16.msra.mxu0 0
    %2895 = vmatprep.subr.bf16.mxu0 0
    %2896 = vmatpush1.bf16.msra.mxu0 0
    %2897 = vmatprep.subr.bf16.mxu0 0
    %2898 = vmatpush1.bf16.msra.mxu0 0
    %2899 = vmatprep.subr.bf16.mxu0 0
    %2900 = vmatpush1.bf16.msra.mxu0 0
    %2901 = vmatprep.subr.bf16.mxu0 0
    %2902 = vmatpush1.bf16.msra.mxu0 0
    %2903 = vmatprep.subr.bf16.mxu0 0
    %2904 = vmatpush1.bf16.msra.mxu0 0
    %2905 = vmatprep.subr.bf16.mxu0 0
    %2906 = vmatpush1.bf16.msra.mxu0 0
    %2907 = vmatprep.subr.bf16.mxu0 0
    %2908 = vmatpush1.bf16.msra.mxu0 0
    %2909 = vmatprep.mubr.bf16.mxu0 0
    %2910 = vmatmul.mubr.bf16.gmra.mrb[0].mxu0 %v2777
    %v2911 = vpop.f32.mrb[0].mxu0
    %v2912 = vadd.f32 0.0, %v2911
    %v2913 = vpop.f32.mrb[0].mxu0
    %v2914 = vpop.f32.mrb[0].mxu0
    %v2915 = vadd.f32 0.0, %v2914
    %v2916 = vpop.f32.mrb[0].mxu0
    %2917 = vmatprep.mubr.bf16.mxu0 0
    %2918 = vmatmul.mubr.bf16.gmra.mrb[0].mxu0 %v2786
    %v2919 = vpop.f32.mrb[0].mxu0
    %v2920 = vadd.f32 0.0, %v2919
    %v2921 = vpop.f32.mrb[0].mxu0
    %v2922 = vpop.f32.mrb[0].mxu0
    %v2923 = vadd.f32 0.0, %v2922
    %v2924 = vpop.f32.mrb[0].mxu0
    %2925 = vmatprep.mubr.bf16.mxu0 0
    %2926 = vmatmul.mubr.bf16.gmra.mrb[0].mxu0 %v2795
    %v2927 = vpop.f32.mrb[0].mxu0
    %v2928 = vadd.f32 0.0, %v2927
    %v2929 = vpop.f32.mrb[0].mxu0
    %v2930 = vpop.f32.mrb[0].mxu0
    %v2931 = vadd.f32 0.0, %v2930
    %v2932 = vpop.f32.mrb[0].mxu0
    %2933 = vmatprep.mubr.bf16.mxu0 0
    %2934 = vmatmul.mubr.bf16.gmra.mrb[0].mxu0 %v2804
    %v2935 = vpop.f32.mrb[0].mxu0
    %v2936 = vadd.f32 0.0, %v2935
    %v2937 = vpop.f32.mrb[0].mxu0
    %v2938 = vpop.f32.mrb[0].mxu0
    %v2939 = vadd.f32 0.0, %v2938
    %v2940 = vpop.f32.mrb[0].mxu0
    %2941 = vmatprep.mubr.bf16.mxu0 0
    %2942 = vmatmul.mubr.bf16.gmra.mrb[0].mxu0 %v2813
    %v2943 = vpop.f32.mrb[0].mxu0
    %v2944 = vadd.f32 0.0, %v2943
    %v2945 = vpop.f32.mrb[0].mxu0
    %v2946 = vpop.f32.mrb[0].mxu0
    %v2947 = vadd.f32 0.0, %v2946
    %v2948 = vpop.f32.mrb[0].mxu0
    %2949 = vmatprep.mubr.bf16.mxu0 0
    %2950 = vmatmul.mubr.bf16.gmra.mrb[0].mxu0 %v2822
    %v2951 = vpop.f32.mrb[0].mxu0
    %v2952 = vadd.f32 0.0, %v2951
    %v2953 = vpop.f32.mrb[0].mxu0
    %v2954 = vpop.f32.mrb[0].mxu0
    %v2955 = vadd.f32 0.0, %v2954
    %v2956 = vpop.f32.mrb[0].mxu0
    %2957 = vdwg.mxu0
    %vm2965 = vcmask 1041408
    %v2966 = vrot.slane %v2718, 6
    %v2967 = vrot.slane %v2719, 6
    %v2968 = vsel %vm2965, %v2966, %v2967
    %v2969 = vrot.slane %v2720, 6
    %v2970 = vsel %vm2965, %v2967, %v2969
    %v2971 = vrot.slane %v2721, 6
    %v2972 = vsel %vm2965, %v2969, %v2971
    %v2973 = vrot.slane %v2722, 6
    %v2974 = vsel %vm2965, %v2971, %v2973
    %v2975 = vrot.slane %v2723, 6
    %v2976 = vsel %vm2965, %v2973, %v2975
    %v2977 = vrot.slane %v2724, 6
    %v2978 = vsel %vm2965, %v2975, %v2977
    %v3001 = vunpack.c.l.b16 %v2726
    %v3002 = vunpack.c.l.b16 %v2727
    %v3003 = vunpack.c.l.b16 %v2728
    %v3004 = vunpack.c.l.b16 %v2729
    %v3005 = vunpack.c.l.b16 %v2730
    %v3006 = vunpack.c.l.b16 %v2731
    %v3007 = vunpack.c.l.b16 %v2732
    %v3008 = vunpack.c.l.b16 %v2733
    %v3009 = vunpack.c.l.b16 %v2734
    %v3010 = vunpack.c.l.b16 %v2735
    %v3011 = vunpack.c.l.b16 %v2736
    %v3012 = vunpack.c.l.b16 %v2737
    %v3013 = vunpack.c.l.b16 %v2738
    %v3014 = vunpack.c.l.b16 %v2739
    %v3015 = vunpack.c.l.b16 %v2740
    %v3016 = vunpack.c.l.b16 %v2741
    %v3017 = vpack.c.b16 %v3002, %v3001
    %v3018 = vpack.c.b16 %v3004, %v3003
    %v3019 = vpack.c.b16 %v3006, %v3005
    %v3020 = vpack.c.b16 %v3008, %v3007
    %v3021 = vpack.c.b16 %v3010, %v3009
    %v3022 = vpack.c.b16 %v3012, %v3011
    %v3023 = vpack.c.b16 %v3014, %v3013
    %v3024 = vpack.c.b16 %v3016, %v3015
    %3033 = vmatprep.subr.bf16.mxu0 0
    %3034 = vmatpush1.bf16.msra.mxu0 %v3017
    %3035 = vmatprep.subr.bf16.mxu0 0
    %3036 = vmatpush1.bf16.msra.mxu0 %v3018
    %3037 = vmatprep.subr.bf16.mxu0 0
    %3038 = vmatpush1.bf16.msra.mxu0 %v3019
    %3039 = vmatprep.subr.bf16.mxu0 0
    %3040 = vmatpush1.bf16.msra.mxu0 %v3020
    %3041 = vmatprep.subr.bf16.mxu0 0
    %3042 = vmatpush1.bf16.msra.mxu0 %v3021
    %3043 = vmatprep.subr.bf16.mxu0 0
    %3044 = vmatpush1.bf16.msra.mxu0 %v3022
    %3045 = vmatprep.subr.bf16.mxu0 0
    %3046 = vmatpush1.bf16.msra.mxu0 %v3023
    %3047 = vmatprep.subr.bf16.mxu0 0
    %3048 = vmatpush1.bf16.msra.mxu0 %v3024
    %3049 = vmatprep.subr.bf16.mxu0 0
    %3050 = vmatpush1.bf16.msra.mxu0 0
    %3051 = vmatprep.subr.bf16.mxu0 0
    %3052 = vmatpush1.bf16.msra.mxu0 0
    %3053 = vmatprep.subr.bf16.mxu0 0
    %3054 = vmatpush1.bf16.msra.mxu0 0
    %3055 = vmatprep.subr.bf16.mxu0 0
    %3056 = vmatpush1.bf16.msra.mxu0 0
    %3057 = vmatprep.subr.bf16.mxu0 0
    %3058 = vmatpush1.bf16.msra.mxu0 0
    %3059 = vmatprep.subr.bf16.mxu0 0
    %3060 = vmatpush1.bf16.msra.mxu0 0
    %3061 = vmatprep.subr.bf16.mxu0 0
    %3062 = vmatpush1.bf16.msra.mxu0 0
    %3063 = vmatprep.subr.bf16.mxu0 0
    %3064 = vmatpush1.bf16.msra.mxu0 0
    %3065 = vmatprep.mubr.bf16.mxu0 0
    %3066 = vmatmul.mubr.bf16.gmra.mrb[0].mxu0 %v2968
    %v3067 = vpop.f32.mrb[0].mxu0
    %v3068 = vadd.f32 %v2912, %v3067
    %v3069 = vpop.f32.mrb[0].mxu0
    %v3070 = vpop.f32.mrb[0].mxu0
    %v3071 = vadd.f32 %v2915, %v3070
    %v3072 = vpop.f32.mrb[0].mxu0
    %3073 = vmatprep.mubr.bf16.mxu0 0
    %3074 = vmatmul.mubr.bf16.gmra.mrb[0].mxu0 %v2970
    %v3075 = vpop.f32.mrb[0].mxu0
    %v3076 = vadd.f32 %v2920, %v3075
    %v3077 = vpop.f32.mrb[0].mxu0
    %v3078 = vpop.f32.mrb[0].mxu0
    %v3079 = vadd.f32 %v2923, %v3078
    %v3080 = vpop.f32.mrb[0].mxu0
    %3081 = vmatprep.mubr.bf16.mxu0 0
    %3082 = vmatmul.mubr.bf16.gmra.mrb[0].mxu0 %v2972
    %v3083 = vpop.f32.mrb[0].mxu0
    %v3084 = vadd.f32 %v2928, %v3083
    %v3085 = vpop.f32.mrb[0].mxu0
    %v3086 = vpop.f32.mrb[0].mxu0
    %v3087 = vadd.f32 %v2931, %v3086
    %v3088 = vpop.f32.mrb[0].mxu0
    %3089 = vmatprep.mubr.bf16.mxu0 0
    %3090 = vmatmul.mubr.bf16.gmra.mrb[0].mxu0 %v2974
    %v3091 = vpop.f32.mrb[0].mxu0
    %v3092 = vadd.f32 %v2936, %v3091
    %v3093 = vpop.f32.mrb[0].mxu0
    %v3094 = vpop.f32.mrb[0].mxu0
    %v3095 = vadd.f32 %v2939, %v3094
    %v3096 = vpop.f32.mrb[0].mxu0
    %3097 = vmatprep.mubr.bf16.mxu0 0
    %3098 = vmatmul.mubr.bf16.gmra.mrb[0].mxu0 %v2976
    %v3099 = vpop.f32.mrb[0].mxu0
    %v3100 = vadd.f32 %v2944, %v3099
    %v3101 = vpop.f32.mrb[0].mxu0
    %v3102 = vpop.f32.mrb[0].mxu0
    %v3103 = vadd.f32 %v2947, %v3102
    %v3104 = vpop.f32.mrb[0].mxu0
    %3105 = vmatprep.mubr.bf16.mxu0 0
    %3106 = vmatmul.mubr.bf16.gmra.mrb[0].mxu0 %v2978
    %v3107 = vpop.f32.mrb[0].mxu0
    %v3108 = vadd.f32 %v2952, %v3107
    %v3109 = vpop.f32.mrb[0].mxu0
    %v3110 = vpop.f32.mrb[0].mxu0
    %v3111 = vadd.f32 %v2955, %v3110
    %v3112 = vpop.f32.mrb[0].mxu0
    %3113 = vdwg.mxu0
    %v3114 = vadd.f32 %v2706, %v3068
    %v3115 = vadd.f32 %v2707, %v3071
    %v3116 = vadd.f32 %v2708, %v3076
    %v3117 = vadd.f32 %v2709, %v3079
    %v3118 = vadd.f32 %v2710, %v3084
    %v3119 = vadd.f32 %v2711, %v3087
    %v3120 = vadd.f32 %v2712, %v3092
    %v3121 = vadd.f32 %v2713, %v3095
    %v3122 = vadd.f32 %v2714, %v3100
    %v3123 = vadd.f32 %v2715, %v3103
    %v3124 = vadd.f32 %v2716, %v3108
    %v3125 = vadd.f32 %v2717, %v3111
    %3126 = vst [vmem:[#allocation2] sm:$0xff] %v3114
    %3127 = vst [vmem:[#allocation2 + $0x8] sm:$0xff] %v3115
    %3128 = vst [vmem:[#allocation2 + $0x10] sm:$0xff] %v3116
    %3129 = vst [vmem:[#allocation2 + $0x18] sm:$0xff] %v3117
    %3130 = vst [vmem:[#allocation2 + $0x20] sm:$0xff] %v3118
    %3131 = vst [vmem:[#allocation2 + $0x28] sm:$0xff] %v3119
    %3132 = vst [vmem:[#allocation2 + $0x30] sm:$0xff] %v3120
    %3133 = vst [vmem:[#allocation2 + $0x38] sm:$0xff] %v3121
    %3134 = vst [vmem:[#allocation2 + $0x40] sm:$0xff] %v3122
    %3135 = vst [vmem:[#allocation2 + $0x48] sm:$0xff] %v3123
    %3136 = vst [vmem:[#allocation2 + $0x50] sm:$0xff] %v3124
    %3137 = vst [vmem:[#allocation2 + $0x58] sm:$0xff] %v3125
    %v3138 = vld [vmem:[#allocation2] sm:$0xff]
    %v3139 = vld [vmem:[#allocation2 + $0x8] sm:$0xff]
    %v3140 = vld [vmem:[#allocation2 + $0x10] sm:$0xff]
    %v3141 = vld [vmem:[#allocation2 + $0x18] sm:$0xff]
    %v3142 = vld [vmem:[#allocation2 + $0x20] sm:$0xff]
    %v3143 = vld [vmem:[#allocation2 + $0x28] sm:$0xff]
    %v3144 = vld [vmem:[#allocation2 + $0x30] sm:$0xff]
    %v3145 = vld [vmem:[#allocation2 + $0x38] sm:$0xff]
    %v3146 = vld [vmem:[#allocation2 + $0x40] sm:$0xff]
    %v3147 = vld [vmem:[#allocation2 + $0x48] sm:$0xff]
    %v3148 = vld [vmem:[#allocation2 + $0x50] sm:$0xff]
    %v3149 = vld [vmem:[#allocation2 + $0x58] sm:$0xff]
    %v3150 = vld [vmem:[#allocation3] sm:$0x80]
    %v3151 = vld [vmem:[#allocation3 + $0x8] sm:$0xff]
    %v3152 = vld [vmem:[#allocation3 + $0x10] sm:$0xff]
    %v3153 = vld [vmem:[#allocation3 + $0x18] sm:$0xff]
    %v3154 = vld [vmem:[#allocation3 + $0x20] sm:$0xff]
    %v3155 = vld [vmem:[#allocation3 + $0x28] sm:$0xff]
    %v3156 = vld [vmem:[#allocation3 + $0x30] sm:$0x7f]
    %s3157 = scalar_lea.vmem [#allocation9], 896
    %v3158 = vld [vmem:[%s3157] sm:$0xf]
    %v3159 = vld [vmem:[%s3157 + $0x4] sm:$0xf]
    %v3160 = vld [vmem:[%s3157 + $0x8] sm:$0xf]
    %v3161 = vld [vmem:[%s3157 + $0xc] sm:$0xf]
    %v3162 = vld [vmem:[%s3157 + $0x10] sm:$0xf]
    %v3163 = vld [vmem:[%s3157 + $0x14] sm:$0xf]
    %v3164 = vld [vmem:[%s3157 + $0x18] sm:$0xf]
    %v3165 = vld [vmem:[%s3157 + $0x1c] sm:$0xf]
    %v3166 = vld [vmem:[%s3157 + $0x20] sm:$0xf]
    %v3167 = vld [vmem:[%s3157 + $0x24] sm:$0xf]
    %v3168 = vld [vmem:[%s3157 + $0x28] sm:$0xf]
    %v3169 = vld [vmem:[%s3157 + $0x2c] sm:$0xf]
    %v3170 = vld [vmem:[%s3157 + $0x30] sm:$0xf]
    %v3171 = vld [vmem:[%s3157 + $0x34] sm:$0xf]
    %v3172 = vld [vmem:[%s3157 + $0x38] sm:$0xf]
    %v3173 = vld [vmem:[%s3157 + $0x3c] sm:$0xf]
    %v3174 = vld [vmem:[#allocation3 + $0x30] sm:$0xff]
    %s3175 = scalar_lea.vmem [#allocation9], 960
    %v3176 = vld [vmem:[%s3175] sm:$0xf]
    %v3177 = vld [vmem:[%s3175 + $0x4] sm:$0xf]
    %v3178 = vld [vmem:[%s3175 + $0x8] sm:$0xf]
    %v3179 = vld [vmem:[%s3175 + $0xc] sm:$0xf]
    %v3180 = vld [vmem:[%s3175 + $0x10] sm:$0xf]
    %v3181 = vld [vmem:[%s3175 + $0x14] sm:$0xf]
    %v3182 = vld [vmem:[%s3175 + $0x18] sm:$0xf]
    %v3183 = vld [vmem:[%s3175 + $0x1c] sm:$0xf]
    %v3184 = vld [vmem:[%s3175 + $0x20] sm:$0xf]
    %v3185 = vld [vmem:[%s3175 + $0x24] sm:$0xf]
    %v3186 = vld [vmem:[%s3175 + $0x28] sm:$0xf]
    %v3187 = vld [vmem:[%s3175 + $0x2c] sm:$0xf]
    %v3188 = vld [vmem:[%s3175 + $0x30] sm:$0xf]
    %v3189 = vld [vmem:[%s3175 + $0x34] sm:$0xf]
    %v3190 = vld [vmem:[%s3175 + $0x38] sm:$0xf]
    %v3191 = vld [vmem:[%s3175 + $0x3c] sm:$0xf]
    %vm3192 = vsmask.f32 256
    %v3194 = vshrl.u32 %v3150, 16
    %v3196 = vrot.slane %v3194, 7
    %v3198 = vshrl.u32 %v3151, 16
    %v3200 = vrot.slane %v3198, 7
    %v3201 = vshll.u32 %v3151, 16
    %v3203 = vor.u32 %v3200, %v3201
    %v3204 = vsel %vm3192, %v3196, %v3203
    %v3206 = vshrl.u32 %v3152, 16
    %v3208 = vrot.slane %v3206, 7
    %v3209 = vshll.u32 %v3152, 16
    %v3211 = vor.u32 %v3208, %v3209
    %v3212 = vsel %vm3192, %v3200, %v3211
    %v3214 = vshrl.u32 %v3153, 16
    %v3216 = vrot.slane %v3214, 7
    %v3217 = vshll.u32 %v3153, 16
    %v3219 = vor.u32 %v3216, %v3217
    %v3220 = vsel %vm3192, %v3208, %v3219
    %v3222 = vshrl.u32 %v3154, 16
    %v3224 = vrot.slane %v3222, 7
    %v3225 = vshll.u32 %v3154, 16
    %v3227 = vor.u32 %v3224, %v3225
    %v3228 = vsel %vm3192, %v3216, %v3227
    %v3230 = vshrl.u32 %v3155, 16
    %v3232 = vrot.slane %v3230, 7
    %v3233 = vshll.u32 %v3155, 16
    %v3235 = vor.u32 %v3232, %v3233
    %v3236 = vsel %vm3192, %v3224, %v3235
    %v3238 = vshrl.u32 %v3174, 16
    %v3240 = vrot.slane %v3238, 7
    %v3241 = vshll.u32 %v3174, 16
    %v3243 = vor.u32 %v3240, %v3241
    %v3244 = vsel %vm3192, %v3232, %v3243
    %v3267 = vunpack.c.l.b16 %v3176
    %v3268 = vunpack.c.l.b16 %v3177
    %v3269 = vunpack.c.l.b16 %v3178
    %v3270 = vunpack.c.l.b16 %v3179
    %v3271 = vunpack.c.l.b16 %v3180
    %v3272 = vunpack.c.l.b16 %v3181
    %v3273 = vunpack.c.l.b16 %v3182
    %v3274 = vunpack.c.l.b16 %v3183
    %v3275 = vunpack.c.l.b16 %v3184
    %v3276 = vunpack.c.l.b16 %v3185
    %v3277 = vunpack.c.l.b16 %v3186
    %v3278 = vunpack.c.l.b16 %v3187
    %v3279 = vunpack.c.l.b16 %v3188
    %v3280 = vunpack.c.l.b16 %v3189
    %v3281 = vunpack.c.l.b16 %v3190
    %v3282 = vunpack.c.l.b16 %v3191
    %v3283 = vpack.c.b16 %v3268, %v3267
    %v3284 = vpack.c.b16 %v3270, %v3269
    %v3285 = vpack.c.b16 %v3272, %v3271
    %v3286 = vpack.c.b16 %v3274, %v3273
    %v3287 = vpack.c.b16 %v3276, %v3275
    %v3288 = vpack.c.b16 %v3278, %v3277
    %v3289 = vpack.c.b16 %v3280, %v3279
    %v3290 = vpack.c.b16 %v3282, %v3281
    %3299 = vmatprep.subr.bf16.mxu0 0
    %3300 = vmatpush1.bf16.msra.mxu0 %v3283
    %3301 = vmatprep.subr.bf16.mxu0 0
    %3302 = vmatpush1.bf16.msra.mxu0 %v3284
    %3303 = vmatprep.subr.bf16.mxu0 0
    %3304 = vmatpush1.bf16.msra.mxu0 %v3285
    %3305 = vmatprep.subr.bf16.mxu0 0
    %3306 = vmatpush1.bf16.msra.mxu0 %v3286
    %3307 = vmatprep.subr.bf16.mxu0 0
    %3308 = vmatpush1.bf16.msra.mxu0 %v3287
    %3309 = vmatprep.subr.bf16.mxu0 0
    %3310 = vmatpush1.bf16.msra.mxu0 %v3288
    %3311 = vmatprep.subr.bf16.mxu0 0
    %3312 = vmatpush1.bf16.msra.mxu0 %v3289
    %3313 = vmatprep.subr.bf16.mxu0 0
    %3314 = vmatpush1.bf16.msra.mxu0 %v3290
    %3315 = vmatprep.subr.bf16.mxu0 0
    %3316 = vmatpush1.bf16.msra.mxu0 0
    %3317 = vmatprep.subr.bf16.mxu0 0
    %3318 = vmatpush1.bf16.msra.mxu0 0
    %3319 = vmatprep.subr.bf16.mxu0 0
    %3320 = vmatpush1.bf16.msra.mxu0 0
    %3321 = vmatprep.subr.bf16.mxu0 0
    %3322 = vmatpush1.bf16.msra.mxu0 0
    %3323 = vmatprep.subr.bf16.mxu0 0
    %3324 = vmatpush1.bf16.msra.mxu0 0
    %3325 = vmatprep.subr.bf16.mxu0 0
    %3326 = vmatpush1.bf16.msra.mxu0 0
    %3327 = vmatprep.subr.bf16.mxu0 0
    %3328 = vmatpush1.bf16.msra.mxu0 0
    %3329 = vmatprep.subr.bf16.mxu0 0
    %3330 = vmatpush1.bf16.msra.mxu0 0
    %3331 = vmatprep.mubr.bf16.mxu0 0
    %3332 = vmatmul.mubr.bf16.gmra.mrb[0].mxu0 %v3204
    %v3333 = vpop.f32.mrb[0].mxu0
    %v3334 = vadd.f32 0.0, %v3333
    %v3335 = vpop.f32.mrb[0].mxu0
    %v3336 = vpop.f32.mrb[0].mxu0
    %v3337 = vadd.f32 0.0, %v3336
    %v3338 = vpop.f32.mrb[0].mxu0
    %3339 = vmatprep.mubr.bf16.mxu0 0
    %3340 = vmatmul.mubr.bf16.gmra.mrb[0].mxu0 %v3212
    %v3341 = vpop.f32.mrb[0].mxu0
    %v3342 = vadd.f32 0.0, %v3341
    %v3343 = vpop.f32.mrb[0].mxu0
    %v3344 = vpop.f32.mrb[0].mxu0
    %v3345 = vadd.f32 0.0, %v3344
    %v3346 = vpop.f32.mrb[0].mxu0
    %3347 = vmatprep.mubr.bf16.mxu0 0
    %3348 = vmatmul.mubr.bf16.gmra.mrb[0].mxu0 %v3220
    %v3349 = vpop.f32.mrb[0].mxu0
    %v3350 = vadd.f32 0.0, %v3349
    %v3351 = vpop.f32.mrb[0].mxu0
    %v3352 = vpop.f32.mrb[0].mxu0
    %v3353 = vadd.f32 0.0, %v3352
    %v3354 = vpop.f32.mrb[0].mxu0
    %3355 = vmatprep.mubr.bf16.mxu0 0
    %3356 = vmatmul.mubr.bf16.gmra.mrb[0].mxu0 %v3228
    %v3357 = vpop.f32.mrb[0].mxu0
    %v3358 = vadd.f32 0.0, %v3357
    %v3359 = vpop.f32.mrb[0].mxu0
    %v3360 = vpop.f32.mrb[0].mxu0
    %v3361 = vadd.f32 0.0, %v3360
    %v3362 = vpop.f32.mrb[0].mxu0
    %3363 = vmatprep.mubr.bf16.mxu0 0
    %3364 = vmatmul.mubr.bf16.gmra.mrb[0].mxu0 %v3236
    %v3365 = vpop.f32.mrb[0].mxu0
    %v3366 = vadd.f32 0.0, %v3365
    %v3367 = vpop.f32.mrb[0].mxu0
    %v3368 = vpop.f32.mrb[0].mxu0
    %v3369 = vadd.f32 0.0, %v3368
    %v3370 = vpop.f32.mrb[0].mxu0
    %3371 = vmatprep.mubr.bf16.mxu0 0
    %3372 = vmatmul.mubr.bf16.gmra.mrb[0].mxu0 %v3244
    %v3373 = vpop.f32.mrb[0].mxu0
    %v3374 = vadd.f32 0.0, %v3373
    %v3375 = vpop.f32.mrb[0].mxu0
    %v3376 = vpop.f32.mrb[0].mxu0
    %v3377 = vadd.f32 0.0, %v3376
    %v3378 = vpop.f32.mrb[0].mxu0
    %3379 = vdwg.mxu0
    %vm3387 = vcmask 1040384
    %v3388 = vrot.slane %v3150, 7
    %v3389 = vrot.slane %v3151, 7
    %v3390 = vsel %vm3387, %v3388, %v3389
    %v3391 = vrot.slane %v3152, 7
    %v3392 = vsel %vm3387, %v3389, %v3391
    %v3393 = vrot.slane %v3153, 7
    %v3394 = vsel %vm3387, %v3391, %v3393
    %v3395 = vrot.slane %v3154, 7
    %v3396 = vsel %vm3387, %v3393, %v3395
    %v3397 = vrot.slane %v3155, 7
    %v3398 = vsel %vm3387, %v3395, %v3397
    %v3399 = vrot.slane %v3156, 7
    %v3400 = vsel %vm3387, %v3397, %v3399
    %v3423 = vunpack.c.l.b16 %v3158
    %v3424 = vunpack.c.l.b16 %v3159
    %v3425 = vunpack.c.l.b16 %v3160
    %v3426 = vunpack.c.l.b16 %v3161
    %v3427 = vunpack.c.l.b16 %v3162
    %v3428 = vunpack.c.l.b16 %v3163
    %v3429 = vunpack.c.l.b16 %v3164
    %v3430 = vunpack.c.l.b16 %v3165
    %v3431 = vunpack.c.l.b16 %v3166
    %v3432 = vunpack.c.l.b16 %v3167
    %v3433 = vunpack.c.l.b16 %v3168
    %v3434 = vunpack.c.l.b16 %v3169
    %v3435 = vunpack.c.l.b16 %v3170
    %v3436 = vunpack.c.l.b16 %v3171
    %v3437 = vunpack.c.l.b16 %v3172
    %v3438 = vunpack.c.l.b16 %v3173
    %v3439 = vpack.c.b16 %v3424, %v3423
    %v3440 = vpack.c.b16 %v3426, %v3425
    %v3441 = vpack.c.b16 %v3428, %v3427
    %v3442 = vpack.c.b16 %v3430, %v3429
    %v3443 = vpack.c.b16 %v3432, %v3431
    %v3444 = vpack.c.b16 %v3434, %v3433
    %v3445 = vpack.c.b16 %v3436, %v3435
    %v3446 = vpack.c.b16 %v3438, %v3437
    %3455 = vmatprep.subr.bf16.mxu0 0
    %3456 = vmatpush1.bf16.msra.mxu0 %v3439
    %3457 = vmatprep.subr.bf16.mxu0 0
    %3458 = vmatpush1.bf16.msra.mxu0 %v3440
    %3459 = vmatprep.subr.bf16.mxu0 0
    %3460 = vmatpush1.bf16.msra.mxu0 %v3441
    %3461 = vmatprep.subr.bf16.mxu0 0
    %3462 = vmatpush1.bf16.msra.mxu0 %v3442
    %3463 = vmatprep.subr.bf16.mxu0 0
    %3464 = vmatpush1.bf16.msra.mxu0 %v3443
    %3465 = vmatprep.subr.bf16.mxu0 0
    %3466 = vmatpush1.bf16.msra.mxu0 %v3444
    %3467 = vmatprep.subr.bf16.mxu0 0
    %3468 = vmatpush1.bf16.msra.mxu0 %v3445
    %3469 = vmatprep.subr.bf16.mxu0 0
    %3470 = vmatpush1.bf16.msra.mxu0 %v3446
    %3471 = vmatprep.subr.bf16.mxu0 0
    %3472 = vmatpush1.bf16.msra.mxu0 0
    %3473 = vmatprep.subr.bf16.mxu0 0
    %3474 = vmatpush1.bf16.msra.mxu0 0
    %3475 = vmatprep.subr.bf16.mxu0 0
    %3476 = vmatpush1.bf16.msra.mxu0 0
    %3477 = vmatprep.subr.bf16.mxu0 0
    %3478 = vmatpush1.bf16.msra.mxu0 0
    %3479 = vmatprep.subr.bf16.mxu0 0
    %3480 = vmatpush1.bf16.msra.mxu0 0
    %3481 = vmatprep.subr.bf16.mxu0 0
    %3482 = vmatpush1.bf16.msra.mxu0 0
    %3483 = vmatprep.subr.bf16.mxu0 0
    %3484 = vmatpush1.bf16.msra.mxu0 0
    %3485 = vmatprep.subr.bf16.mxu0 0
    %3486 = vmatpush1.bf16.msra.mxu0 0
    %3487 = vmatprep.mubr.bf16.mxu0 0
    %3488 = vmatmul.mubr.bf16.gmra.mrb[0].mxu0 %v3390
    %v3489 = vpop.f32.mrb[0].mxu0
    %v3490 = vadd.f32 %v3334, %v3489
    %v3491 = vpop.f32.mrb[0].mxu0
    %v3492 = vpop.f32.mrb[0].mxu0
    %v3493 = vadd.f32 %v3337, %v3492
    %v3494 = vpop.f32.mrb[0].mxu0
    %3495 = vmatprep.mubr.bf16.mxu0 0
    %3496 = vmatmul.mubr.bf16.gmra.mrb[0].mxu0 %v3392
    %v3497 = vpop.f32.mrb[0].mxu0
    %v3498 = vadd.f32 %v3342, %v3497
    %v3499 = vpop.f32.mrb[0].mxu0
    %v3500 = vpop.f32.mrb[0].mxu0
    %v3501 = vadd.f32 %v3345, %v3500
    %v3502 = vpop.f32.mrb[0].mxu0
    %3503 = vmatprep.mubr.bf16.mxu0 0
    %3504 = vmatmul.mubr.bf16.gmra.mrb[0].mxu0 %v3394
    %v3505 = vpop.f32.mrb[0].mxu0
    %v3506 = vadd.f32 %v3350, %v3505
    %v3507 = vpop.f32.mrb[0].mxu0
    %v3508 = vpop.f32.mrb[0].mxu0
    %v3509 = vadd.f32 %v3353, %v3508
    %v3510 = vpop.f32.mrb[0].mxu0
    %3511 = vmatprep.mubr.bf16.mxu0 0
    %3512 = vmatmul.mubr.bf16.gmra.mrb[0].mxu0 %v3396
    %v3513 = vpop.f32.mrb[0].mxu0
    %v3514 = vadd.f32 %v3358, %v3513
    %v3515 = vpop.f32.mrb[0].mxu0
    %v3516 = vpop.f32.mrb[0].mxu0
    %v3517 = vadd.f32 %v3361, %v3516
    %v3518 = vpop.f32.mrb[0].mxu0
    %3519 = vmatprep.mubr.bf16.mxu0 0
    %3520 = vmatmul.mubr.bf16.gmra.mrb[0].mxu0 %v3398
    %v3521 = vpop.f32.mrb[0].mxu0
    %v3522 = vadd.f32 %v3366, %v3521
    %v3523 = vpop.f32.mrb[0].mxu0
    %v3524 = vpop.f32.mrb[0].mxu0
    %v3525 = vadd.f32 %v3369, %v3524
    %v3526 = vpop.f32.mrb[0].mxu0
    %3527 = vmatprep.mubr.bf16.mxu0 0
    %3528 = vmatmul.mubr.bf16.gmra.mrb[0].mxu0 %v3400
    %v3529 = vpop.f32.mrb[0].mxu0
    %v3530 = vadd.f32 %v3374, %v3529
    %v3531 = vpop.f32.mrb[0].mxu0
    %v3532 = vpop.f32.mrb[0].mxu0
    %v3533 = vadd.f32 %v3377, %v3532
    %v3534 = vpop.f32.mrb[0].mxu0
    %3535 = vdwg.mxu0
    %v3536 = vadd.f32 %v3138, %v3490
    %v3537 = vadd.f32 %v3139, %v3493
    %v3538 = vadd.f32 %v3140, %v3498
    %v3539 = vadd.f32 %v3141, %v3501
    %v3540 = vadd.f32 %v3142, %v3506
    %v3541 = vadd.f32 %v3143, %v3509
    %v3542 = vadd.f32 %v3144, %v3514
    %v3543 = vadd.f32 %v3145, %v3517
    %v3544 = vadd.f32 %v3146, %v3522
    %v3545 = vadd.f32 %v3147, %v3525
    %v3546 = vadd.f32 %v3148, %v3530
    %v3547 = vadd.f32 %v3149, %v3533
    %3548 = vst [vmem:[#allocation2] sm:$0xff] %v3536
    %3549 = vst [vmem:[#allocation2 + $0x8] sm:$0xff] %v3537
    %3550 = vst [vmem:[#allocation2 + $0x10] sm:$0xff] %v3538
    %3551 = vst [vmem:[#allocation2 + $0x18] sm:$0xff] %v3539
    %3552 = vst [vmem:[#allocation2 + $0x20] sm:$0xff] %v3540
    %3553 = vst [vmem:[#allocation2 + $0x28] sm:$0xff] %v3541
    %3554 = vst [vmem:[#allocation2 + $0x30] sm:$0xff] %v3542
    %3555 = vst [vmem:[#allocation2 + $0x38] sm:$0xff] %v3543
    %3556 = vst [vmem:[#allocation2 + $0x40] sm:$0xff] %v3544
    %3557 = vst [vmem:[#allocation2 + $0x48] sm:$0xff] %v3545
    %3558 = vst [vmem:[#allocation2 + $0x50] sm:$0xff] %v3546
    %3559 = vst [vmem:[#allocation2 + $0x58] sm:$0xff] %v3547
    // Predicated region
    $region34: #{tpu_custom_call.1} parent=1 // pred_check
      %p3560 = pneg %p68
    $region35: #{tpu_custom_call.1} parent=1 // pred_check_branch
      %3562 = sbr.rel (%p3560) target = $region37
    $region36: #{tpu_custom_call.1} parent=1 // pred_region
      %v3563 = vld [vmem:[#allocation2] sm:$0xff]
      %v3564 = vld [vmem:[#allocation2 + $0x8] sm:$0xff]
      %v3565 = vld [vmem:[#allocation2 + $0x10] sm:$0xff]
      %v3566 = vld [vmem:[#allocation2 + $0x18] sm:$0xff]
      %v3567 = vld [vmem:[#allocation2 + $0x20] sm:$0xff]
      %v3568 = vld [vmem:[#allocation2 + $0x28] sm:$0xff]
      %v3569 = vld [vmem:[#allocation2 + $0x30] sm:$0xff]
      %v3570 = vld [vmem:[#allocation2 + $0x38] sm:$0xff]
      %v3571 = vld [vmem:[#allocation2 + $0x40] sm:$0xff]
      %v3572 = vld [vmem:[#allocation2 + $0x48] sm:$0xff]
      %v3573 = vld [vmem:[#allocation2 + $0x50] sm:$0xff]
      %v3574 = vld [vmem:[#allocation2 + $0x58] sm:$0xff]
      %v3575 = vld [vmem:[%s3] sm:$0x1]
      %v3577 = vlaneseq
      %v3578 = vshrl.u32 %v3577, 7
      %v3579 = vsub.s32 0, %v3578
      %v3580 = vrot.slane %v3575, %v3579
      %v3582 = vadd.f32 %v3563, %v3580
      %v3583 = vadd.f32 %v3564, %v3580
      %v3584 = vadd.f32 %v3565, %v3580
      %v3585 = vadd.f32 %v3566, %v3580
      %v3586 = vadd.f32 %v3567, %v3580
      %v3587 = vadd.f32 %v3568, %v3580
      %v3588 = vadd.f32 %v3569, %v3580
      %v3589 = vadd.f32 %v3570, %v3580
      %v3590 = vadd.f32 %v3571, %v3580
      %v3591 = vadd.f32 %v3572, %v3580
      %v3592 = vadd.f32 %v3573, %v3580
      %v3593 = vadd.f32 %v3574, %v3580
      %vm3594 = vcmp.gt.f32.partialorder %v3582, 0.0
      %vm3595 = vcmp.gt.f32.partialorder %v3583, 0.0
      %vm3596 = vcmp.gt.f32.partialorder %v3584, 0.0
      %vm3597 = vcmp.gt.f32.partialorder %v3585, 0.0
      %vm3598 = vcmp.gt.f32.partialorder %v3586, 0.0
      %vm3599 = vcmp.gt.f32.partialorder %v3587, 0.0
      %vm3600 = vcmp.gt.f32.partialorder %v3588, 0.0
      %vm3601 = vcmp.gt.f32.partialorder %v3589, 0.0
      %vm3602 = vcmp.gt.f32.partialorder %v3590, 0.0
      %vm3603 = vcmp.gt.f32.partialorder %v3591, 0.0
      %vm3604 = vcmp.gt.f32.partialorder %v3592, 0.0
      %vm3605 = vcmp.gt.f32.partialorder %v3593, 0.0
      %v3606 = vmul.f32 %v3582, 0.25
      %v3607 = vmul.f32 %v3583, 0.25
      %v3608 = vmul.f32 %v3584, 0.25
      %v3609 = vmul.f32 %v3585, 0.25
      %v3610 = vmul.f32 %v3586, 0.25
      %v3611 = vmul.f32 %v3587, 0.25
      %v3612 = vmul.f32 %v3588, 0.25
      %v3613 = vmul.f32 %v3589, 0.25
      %v3614 = vmul.f32 %v3590, 0.25
      %v3615 = vmul.f32 %v3591, 0.25
      %v3616 = vmul.f32 %v3592, 0.25
      %v3617 = vmul.f32 %v3593, 0.25
      %v3618 = vsel %vm3594, %v3582, %v3606
      %v3619 = vsel %vm3595, %v3583, %v3607
      %v3620 = vsel %vm3596, %v3584, %v3608
      %v3621 = vsel %vm3597, %v3585, %v3609
      %v3622 = vsel %vm3598, %v3586, %v3610
      %v3623 = vsel %vm3599, %v3587, %v3611
      %v3624 = vsel %vm3600, %v3588, %v3612
      %v3625 = vsel %vm3601, %v3589, %v3613
      %v3626 = vsel %vm3602, %v3590, %v3614
      %v3627 = vsel %vm3603, %v3591, %v3615
      %v3628 = vsel %vm3604, %v3592, %v3616
      %v3629 = vsel %vm3605, %v3593, %v3617
      %3630 = vst [vmem:[#allocation10] sm:$0xff] %v3618
      %3631 = vst [vmem:[#allocation10 + $0x8] sm:$0xff] %v3619
      %3632 = vst [vmem:[#allocation10 + $0x10] sm:$0xff] %v3620
      %3633 = vst [vmem:[#allocation10 + $0x18] sm:$0xff] %v3621
      %3634 = vst [vmem:[#allocation10 + $0x20] sm:$0xff] %v3622
      %3635 = vst [vmem:[#allocation10 + $0x28] sm:$0xff] %v3623
      %3636 = vst [vmem:[#allocation10 + $0x30] sm:$0xff] %v3624
      %3637 = vst [vmem:[#allocation10 + $0x38] sm:$0xff] %v3625
      %3638 = vst [vmem:[#allocation10 + $0x40] sm:$0xff] %v3626
      %3639 = vst [vmem:[#allocation10 + $0x48] sm:$0xff] %v3627
      %3640 = vst [vmem:[#allocation10 + $0x50] sm:$0xff] %v3628
      %3641 = vst [vmem:[#allocation10 + $0x58] sm:$0xff] %v3629
    $region37: #{tpu_custom_call.1} parent=1 // pred_fallthru
      _
    // Predicated region
    $region38: #{tpu_custom_call.1} parent=1 // pred_check
      _
    $region39: #{tpu_custom_call.1} parent=1 // pred_check_branch
      %3643 = sbr.rel (0) target = $region41
    $region40: #{tpu_custom_call.1} parent=1 // pred_region
      %s3645 = ssub.s32 1536, 1536
      %3646 = vsyncadd [#allocation6], %s3645
      %s3647 = sshll.u32 [#allocation10], 4
      %s3648 = int_to_ptr.vmem [resolvable:$true] %s3647
      %3653 = dma.vmem_to_hbm [thread:$0]  %s3648, 1536, %s4, [#allocation6], 128, 128, 8
    $region41: #{tpu_custom_call.1} parent=1 // pred_fallthru
      _
    // Predicated region
    $region42: #{tpu_custom_call.1} parent=1 // pred_check
      _
    $region43: #{tpu_custom_call.1} parent=1 // pred_check_branch
      %3655 = sbr.rel (0) target = $region45
    $region44: #{tpu_custom_call.1} parent=1 // pred_region
      %3656 = dma.done [#allocation6], 1536
    $region45: #{tpu_custom_call.1} parent=1 // pred_fallthru
      _
    %3657 = vsyncpa [#allocation5], 1
    %3658 = vsyncpa [#allocation8], 1
    %3659 = vsyncpa [#allocation6], 1

</llo_original>
